<compile_context>
chip_gen: v7x
topology: tpu7x:2x2x1
jax: 0.10.0
libtpu: 0.0.40
codegen_flags: <defaults>
</compile_context>

<pallas_src>
import numpy as np
import jax
import jax.numpy as jnp
from jax import lax
from jax.experimental import pallas as pl
from jax.experimental.pallas import tpu as pltpu


def _haar_unpool_kernel(ll_ref, lh_ref, hl_ref, hh_ref, dmat_ref, smat_ref,
                        out_ref):
    """One row tile: four (TM, SW) subband tiles -> one (TM, 4*SW) output tile.

    Output lane layout (exact NCHW order for the (M, 4*SW) view):
      out[t, p*2*SW + 2*j + q] == output pixel (2*i + p, 2*j + q) for input row
      t == (n*C + c)*SH + i.
    """
    f32 = jnp.float32
    a = ll_ref[...].astype(f32)   # LL
    b = lh_ref[...].astype(f32)   # LH
    c = hl_ref[...].astype(f32)   # HL
    d = hh_ref[...].astype(f32)   # HH

    # Butterfly (VPU, 4 ops).  The four output phases are
    #   x00=.5(u+w)  x01=.5(u-w)  x10=.5(v-z)  x11=.5(v+z)
    # the 0.5 and the +/- per lane parity are folded into dmat/smat below.
    u = a - c
    v = a + c
    w = d - b
    z = d + b

    dmat = dmat_ref[...]          # (wc, 2wc): 0.5 at lanes 2j and 2j+1
    smat = smat_ref[...]          # (wc, 2wc): +0.5 at lane 2j, -0.5 at 2j+1
    wc = dmat.shape[0]
    sw = a.shape[-1]
    prec = lax.Precision.HIGHEST  # exact: one 0/+-0.5 product per output lane

    # Lane interleave on the otherwise-idle MXU, chunked so flops stay
    # O(SW * wc) per row.  Static Python loop -> fully unrolled.
    for ci in range(sw // wc):
        isl = slice(ci * wc, (ci + 1) * wc)
        lo = 2 * wc * ci
        hi = lo + 2 * wc
        ud = jnp.dot(u[:, isl], dmat, preferred_element_type=f32, precision=prec)
        ws = jnp.dot(w[:, isl], smat, preferred_element_type=f32, precision=prec)
        vd = jnp.dot(v[:, isl], dmat, preferred_element_type=f32, precision=prec)
        zs = jnp.dot(z[:, isl], smat, preferred_element_type=f32, precision=prec)
        out_ref[:, lo:hi] = ud + ws                            # row 2i
        out_ref[:, 2 * sw + lo:2 * sw + hi] = vd - zs          # row 2i+1


def _pick_chunk_width(sw):
    """Largest divisor of sw that is <= 160 (keeps the MXU scatter's arithmetic
    intensity ~wc/2 flop/byte, well under the HBM roofline on all generations,
    while still filling most of the MXU contraction).  Falls back to a single
    exact chunk for awkward factorizations."""
    best = 1
    for cand in range(min(sw, 160), 0, -1):
        if sw % cand == 0:
            best = cand
            break
    return best if (best >= 32 or best == sw) else sw


def _pick_row_tile(m, sw, in_itemsize):
    """Rows per grid step: ~4 MiB of HBM traffic per step (amortizes the
    ~0.35 us fixed per-step overhead), multiple of 8, capped by the array."""
    bytes_per_row = 4 * sw * in_itemsize + 4 * sw * 4
    tm = (4 << 20) // max(bytes_per_row, 1)
    tm = max(8, min(tm, 8192))
    m8 = ((m + 7) // 8) * 8
    tm = min(tm, m8)
    return max(8, (tm // 8) * 8)


def _interleave_mats(wc):
    """0/+-0.5 lane-scatter matrices, built once on the host."""
    j = np.arange(wc)
    dmat = np.zeros((wc, 2 * wc), np.float32)
    smat = np.zeros((wc, 2 * wc), np.float32)
    dmat[j, 2 * j] = 0.5
    dmat[j, 2 * j + 1] = 0.5
    smat[j, 2 * j] = 0.5
    smat[j, 2 * j + 1] = -0.5
    return jnp.asarray(dmat), jnp.asarray(smat)


def haar_unpool2d(ll, lh, hl, hh, original=None):
    """Pallas TPU implementation of HaarUnpool2D.forward.

    ll, lh, hl, hh: (N, C, H/2, W/2) arrays.  `original` is accepted for
    signature parity with the PyTorch module but (as in the reference) unused.
    Returns float32 of shape (N, C, H, W).
    """
    del original  # the PyTorch forward ignores it
    assert ll.shape == lh.shape == hl.shape == hh.shape, "subband shapes differ"
    n, c, sh, sw = ll.shape
    m = n * c * sh

    # Row-flattened views; inputs stay in their native dtype (cast in-kernel).
    ll2 = ll.reshape(m, sw)
    lh2 = lh.reshape(m, sw)
    hl2 = hl.reshape(m, sw)
    hh2 = hh.reshape(m, sw)

    wc = _pick_chunk_width(sw)
    dmat, smat = _interleave_mats(wc)

    in_itemsize = jnp.dtype(ll.dtype).itemsize
    tm = _pick_row_tile(m, sw, in_itemsize)
    grid = (pl.cdiv(m, tm),)

    sub_spec = pl.BlockSpec((tm, sw), lambda i: (i, 0))
    mat_spec = pl.BlockSpec((wc, 2 * wc), lambda i: (0, 0))  # fetched once
    out_spec = pl.BlockSpec((tm, 4 * sw), lambda i: (i, 0))

    # Explicit VMEM budget: double-buffered blocks + resident matrices + temps.
    block_bytes = 4 * tm * sw * in_itemsize + tm * 4 * sw * 4
    tmp_bytes = 8 * tm * sw * 4                    # u,v,w,z + matmul results
    mat_bytes = 2 * (wc * 2 * wc * 4)
    vmem_need = 2 * block_bytes + tmp_bytes + 2 * mat_bytes + (2 << 20)
    vmem_limit = int(min(max(vmem_need, 16 << 20), 64 << 20))

    out2 = pl.pallas_call(
        _haar_unpool_kernel,
        grid=grid,
        in_specs=[sub_spec, sub_spec, sub_spec, sub_spec, mat_spec, mat_spec],
        out_specs=out_spec,
        out_shape=jax.ShapeDtypeStruct((m, 4 * sw), jnp.float32),
        compiler_params=pltpu.CompilerParams(
            dimension_semantics=("parallel",),
            vmem_limit_bytes=vmem_limit),
    )(ll2, lh2, hl2, hh2, dmat, smat)

    # Layout-only reshape: (M, 4*SW) rows are exact NCHW memory order.
    return out2.reshape(n, c, 2 * sh, 2 * sw)


def _reference(ll, lh, hl, hh):
    """Pure-JAX reference of the summed depthwise 2x2/stride-2 transposed convs."""
    ll = ll.astype(jnp.float32)
    lh = lh.astype(jnp.float32)
    hl = hl.astype(jnp.float32)
    hh = hh.astype(jnp.float32)
    x00 = 0.5 * (ll - lh - hl + hh)
    x01 = 0.5 * (ll + lh - hl - hh)
    x10 = 0.5 * (ll - lh + hl - hh)
    x11 = 0.5 * (ll + lh + hl + hh)
    top = jnp.stack([x00, x01], axis=-1)          # (N,C,sh,sw,2)  q phase
    bot = jnp.stack([x10, x11], axis=-1)
    out6 = jnp.stack([top, bot], axis=3)          # (N,C,sh,2,sw,2)  p phase
    n, c, sh, _, sw, _ = out6.shape
    return out6.reshape(n, c, 2 * sh, 2 * sw)


if __name__ == "__main__":
    key = jax.random.PRNGKey(0)
    k1, k2, k3, k4, k5 = jax.random.split(key, 5)
    n, c, sh, sw = 2, 4, 8, 8                     # subbands -> 16x16 output
    ll = jax.random.normal(k1, (n, c, sh, sw), dtype=jnp.float32)
    lh = jax.random.normal(k2, (n, c, sh, sw), dtype=jnp.float32)
    hl = jax.random.normal(k3, (n, c, sh, sw), dtype=jnp.float32)
    hh = jax.random.normal(k4, (n, c, sh, sw), dtype=jnp.float32)
    original = jax.random.normal(k5, (n, c, 2 * sh, 2 * sw), dtype=jnp.float32)

    out = haar_unpool2d(ll, lh, hl, hh, original)
    out = jax.block_until_ready(out)

    ref = _reference(ll, lh, hl, hh)
    assert out.shape == (n, c, 2 * sh, 2 * sw)
    assert out.dtype == jnp.float32
    assert jnp.allclose(out, ref, atol=1e-5, rtol=1e-5), float(
        jnp.max(jnp.abs(out - ref)))

    print("KERNEL_OK")
</pallas_src>

<mosaic_0001>
module attributes {stable_mosaic.version = 11 : i64} {
  func.func @_haar_unpool_kernel(%arg0: i32, %arg1: memref<64x8xf32, #tpu.memory_space<vmem>>, %arg2: memref<64x8xf32, #tpu.memory_space<vmem>>, %arg3: memref<64x8xf32, #tpu.memory_space<vmem>>, %arg4: memref<64x8xf32, #tpu.memory_space<vmem>>, %arg5: memref<8x16xf32, #tpu.memory_space<vmem>>, %arg6: memref<8x16xf32, #tpu.memory_space<vmem>>, %arg7: memref<64x32xf32, #tpu.memory_space<vmem>>) attributes {dimension_semantics = [#tpu.dimension_semantics<parallel>], iteration_bounds = array<i64: 1>, scalar_prefetch = 0 : i64, scratch_operands = 0 : i64, tpu.core_type = #tpu.core_type<tc>, window_params = [{transform_indices = @transform_0, window_bounds = array<i64: 64, 8>}, {transform_indices = @transform_1, window_bounds = array<i64: 64, 8>}, {transform_indices = @transform_2, window_bounds = array<i64: 64, 8>}, {transform_indices = @transform_3, window_bounds = array<i64: 64, 8>}, {pipeline_mode = #tpu.pipeline_mode<synchronous>, transform_indices = @transform_4, window_bounds = array<i64: 8, 16>}, {pipeline_mode = #tpu.pipeline_mode<synchronous>, transform_indices = @transform_5, window_bounds = array<i64: 8, 16>}, {transform_indices = @transform_6, window_bounds = array<i64: 64, 32>}]} {
    %c0 = arith.constant 0 : index
    %c0_0 = arith.constant 0 : index
    %0 = vector.load %arg1[%c0, %c0_0] : memref<64x8xf32, #tpu.memory_space<vmem>>, vector<64x8xf32>
    %c0_1 = arith.constant 0 : index
    %c0_2 = arith.constant 0 : index
    %1 = vector.load %arg2[%c0_1, %c0_2] : memref<64x8xf32, #tpu.memory_space<vmem>>, vector<64x8xf32>
    %c0_3 = arith.constant 0 : index
    %c0_4 = arith.constant 0 : index
    %2 = vector.load %arg3[%c0_3, %c0_4] : memref<64x8xf32, #tpu.memory_space<vmem>>, vector<64x8xf32>
    %c0_5 = arith.constant 0 : index
    %c0_6 = arith.constant 0 : index
    %3 = vector.load %arg4[%c0_5, %c0_6] : memref<64x8xf32, #tpu.memory_space<vmem>>, vector<64x8xf32>
    %4 = arith.subf %0, %2 : vector<64x8xf32>
    %5 = arith.addf %0, %2 : vector<64x8xf32>
    %6 = arith.subf %3, %1 : vector<64x8xf32>
    %7 = arith.addf %3, %1 : vector<64x8xf32>
    %c0_7 = arith.constant 0 : index
    %c0_8 = arith.constant 0 : index
    %8 = vector.load %arg5[%c0_7, %c0_8] : memref<8x16xf32, #tpu.memory_space<vmem>>, vector<8x16xf32>
    %c0_9 = arith.constant 0 : index
    %c0_10 = arith.constant 0 : index
    %9 = vector.load %arg6[%c0_9, %c0_10] : memref<8x16xf32, #tpu.memory_space<vmem>>, vector<8x16xf32>
    %cst = arith.constant dense<0.000000e+00> : vector<64x16xf32>
    %10 = tpu.matmul %4, %8, %cst {dimension_numbers = #tpu.dot_dimension_numbers<[1], [0], [0], [1], [0, 0, 1, 1], [], []>, precision = #tpu.contract_precision<fp32>} : vector<64x8xf32>, vector<8x16xf32>, vector<64x16xf32> -> vector<64x16xf32>
    %cst_11 = arith.constant dense<0.000000e+00> : vector<64x16xf32>
    %11 = tpu.matmul %6, %9, %cst_11 {dimension_numbers = #tpu.dot_dimension_numbers<[1], [0], [0], [1], [0, 0, 1, 1], [], []>, precision = #tpu.contract_precision<fp32>} : vector<64x8xf32>, vector<8x16xf32>, vector<64x16xf32> -> vector<64x16xf32>
    %cst_12 = arith.constant dense<0.000000e+00> : vector<64x16xf32>
    %12 = tpu.matmul %5, %8, %cst_12 {dimension_numbers = #tpu.dot_dimension_numbers<[1], [0], [0], [1], [0, 0, 1, 1], [], []>, precision = #tpu.contract_precision<fp32>} : vector<64x8xf32>, vector<8x16xf32>, vector<64x16xf32> -> vector<64x16xf32>
    %cst_13 = arith.constant dense<0.000000e+00> : vector<64x16xf32>
    %13 = tpu.matmul %7, %9, %cst_13 {dimension_numbers = #tpu.dot_dimension_numbers<[1], [0], [0], [1], [0, 0, 1, 1], [], []>, precision = #tpu.contract_precision<fp32>} : vector<64x8xf32>, vector<8x16xf32>, vector<64x16xf32> -> vector<64x16xf32>
    %14 = arith.addf %10, %11 : vector<64x16xf32>
    %c0_14 = arith.constant 0 : index
    %c0_15 = arith.constant 0 : index
    %15 = vector.load %arg7[%c0_14, %c0_15] : memref<64x32xf32, #tpu.memory_space<vmem>>, vector<64x16xf32>
    tpu.vector_store %arg7[%c0_14, %c0_15], %14 {strides = array<i32>} : memref<64x32xf32, #tpu.memory_space<vmem>>, vector<64x16xf32>,
    %16 = arith.subf %12, %13 : vector<64x16xf32>
    %c0_16 = arith.constant 0 : index
    %c16 = arith.constant 16 : index
    %17 = vector.load %arg7[%c0_16, %c16] : memref<64x32xf32, #tpu.memory_space<vmem>>, vector<64x16xf32>
    tpu.vector_store %arg7[%c0_16, %c16], %16 {strides = array<i32>} : memref<64x32xf32, #tpu.memory_space<vmem>>, vector<64x16xf32>,
    return
  }
  func.func @transform_0(%arg0: i32) -> (i32, i32) {
    %c0_i32 = arith.constant 0 : i32
    %c0_i32_0 = arith.constant 0 : i32
    return %arg0, %c0_i32 : i32, i32
  }
  func.func @transform_1(%arg0: i32) -> (i32, i32) {
    %c0_i32 = arith.constant 0 : i32
    %c0_i32_0 = arith.constant 0 : i32
    return %arg0, %c0_i32 : i32, i32
  }
  func.func @transform_2(%arg0: i32) -> (i32, i32) {
    %c0_i32 = arith.constant 0 : i32
    %c0_i32_0 = arith.constant 0 : i32
    return %arg0, %c0_i32 : i32, i32
  }
  func.func @transform_3(%arg0: i32) -> (i32, i32) {
    %c0_i32 = arith.constant 0 : i32
    %c0_i32_0 = arith.constant 0 : i32
    return %arg0, %c0_i32 : i32, i32
  }
  func.func @transform_4(%arg0: i32) -> (i32, i32) {
    %c0_i32 = arith.constant 0 : i32
    %c0_i32_0 = arith.constant 0 : i32
    %c0_i32_1 = arith.constant 0 : i32
    return %c0_i32, %c0_i32_0 : i32, i32
  }
  func.func @transform_5(%arg0: i32) -> (i32, i32) {
    %c0_i32 = arith.constant 0 : i32
    %c0_i32_0 = arith.constant 0 : i32
    %c0_i32_1 = arith.constant 0 : i32
    return %c0_i32, %c0_i32_0 : i32, i32
  }
  func.func @transform_6(%arg0: i32) -> (i32, i32) {
    %c0_i32 = arith.constant 0 : i32
    %c0_i32_0 = arith.constant 0 : i32
    return %arg0, %c0_i32 : i32, i32
  }
}

</mosaic_0001>

<llo_original>
// kernel: tpu_custom_call.1
$region0: #{tpu_custom_call.1}
  #allocation0 [shape = 'u32[]', space=smem, size = 0x4, offset = 0x4, fixed_abs, tag = 'smem constant byte address 0x4 - core index']
  #allocation1 [shape = 'u32[144,128]{1,0:T(1,128)}', space=vmem, size = 0x12000, scoped, tag = 'internal scratch']
  %s0 = inlined_call_operand.vmem [shape: f32[64,8], index: 0, kind: input, shape index: {}]
  %s1 = inlined_call_operand.vmem [shape: f32[64,8], index: 1, kind: input, shape index: {}]
  %s2 = inlined_call_operand.vmem [shape: f32[64,8], index: 2, kind: input, shape index: {}]
  %s3 = inlined_call_operand.vmem [shape: f32[64,8], index: 3, kind: input, shape index: {}]
  %s4 = inlined_call_operand.vmem [shape: f32[8,16], index: 4, kind: input, shape index: {}]
  %s5 = inlined_call_operand.vmem [shape: f32[8,16], index: 5, kind: input, shape index: {}]
  %s6 = inlined_call_operand.vmem [shape: f32[64,32], index: 6, kind: output, shape index: {}]
  %s7 = sld [smem:[#allocation0]]
  $region34: #{tpu_custom_call.1} parent=0
    _
  %s9 = ssub.s32 1, %s7
  %s10 = scalar_select 0, %s9, %s7
  // Predicated region
  $region2: #{tpu_custom_call.1} parent=0 // pred_check
    _
  $region3: #{tpu_custom_call.1} parent=0 // pred_check_branch
    %12 = sbr.rel (0) target = $region5
  $region4: #{tpu_custom_call.1} parent=0 // pred_region
    _
  $region5: #{tpu_custom_call.1} parent=0 // pred_fallthru
    _
  // Predicated region
  $region6: #{tpu_custom_call.1} parent=0 // pred_check
    _
  $region7: #{tpu_custom_call.1} parent=0 // pred_check_branch
    %14 = sbr.rel (0) target = $region9
  $region8: #{tpu_custom_call.1} parent=0 // pred_region
    _
  $region9: #{tpu_custom_call.1} parent=0 // pred_fallthru
    _
  // Predicated region
  $region10: #{tpu_custom_call.1} parent=0 // pred_check
    _
  $region11: #{tpu_custom_call.1} parent=0 // pred_check_branch
    %16 = sbr.rel (0) target = $region13
  $region12: #{tpu_custom_call.1} parent=0 // pred_region
    _
  $region13: #{tpu_custom_call.1} parent=0 // pred_fallthru
    _
  // Predicated region
  $region14: #{tpu_custom_call.1} parent=0 // pred_check
    _
  $region15: #{tpu_custom_call.1} parent=0 // pred_check_branch
    %18 = sbr.rel (0) target = $region17
  $region16: #{tpu_custom_call.1} parent=0 // pred_region
    _
  $region17: #{tpu_custom_call.1} parent=0 // pred_fallthru
    _
  // Predicated region
  $region18: #{tpu_custom_call.1} parent=0 // pred_check
    _
  $region19: #{tpu_custom_call.1} parent=0 // pred_check_branch
    %20 = sbr.rel (0) target = $region21
  $region20: #{tpu_custom_call.1} parent=0 // pred_region
    _
  $region21: #{tpu_custom_call.1} parent=0 // pred_fallthru
    _
  // Predicated region
  $region22: #{tpu_custom_call.1} parent=0 // pred_check
    _
  $region23: #{tpu_custom_call.1} parent=0 // pred_check_branch
    %22 = sbr.rel (0) target = $region25
  $region24: #{tpu_custom_call.1} parent=0 // pred_region
    _
  $region25: #{tpu_custom_call.1} parent=0 // pred_fallthru
    _
  %v23 = vld [vmem:[%s0] sm:$0xff]
  %v24 = vld [vmem:[%s0 + $0x8] sm:$0xff]
  %v25 = vld [vmem:[%s0 + $0x10] sm:$0xff]
  %v26 = vld [vmem:[%s0 + $0x18] sm:$0xff]
  %v27 = vld [vmem:[%s0 + $0x20] sm:$0xff]
  %v28 = vld [vmem:[%s0 + $0x28] sm:$0xff]
  %v29 = vld [vmem:[%s0 + $0x30] sm:$0xff]
  %v30 = vld [vmem:[%s0 + $0x38] sm:$0xff]
  %v31 = vld [vmem:[%s1] sm:$0xff]
  %v32 = vld [vmem:[%s1 + $0x8] sm:$0xff]
  %v33 = vld [vmem:[%s1 + $0x10] sm:$0xff]
  %v34 = vld [vmem:[%s1 + $0x18] sm:$0xff]
  %v35 = vld [vmem:[%s1 + $0x20] sm:$0xff]
  %v36 = vld [vmem:[%s1 + $0x28] sm:$0xff]
  %v37 = vld [vmem:[%s1 + $0x30] sm:$0xff]
  %v38 = vld [vmem:[%s1 + $0x38] sm:$0xff]
  %v39 = vld [vmem:[%s2] sm:$0xff]
  %v40 = vld [vmem:[%s2 + $0x8] sm:$0xff]
  %v41 = vld [vmem:[%s2 + $0x10] sm:$0xff]
  %v42 = vld [vmem:[%s2 + $0x18] sm:$0xff]
  %v43 = vld [vmem:[%s2 + $0x20] sm:$0xff]
  %v44 = vld [vmem:[%s2 + $0x28] sm:$0xff]
  %v45 = vld [vmem:[%s2 + $0x30] sm:$0xff]
  %v46 = vld [vmem:[%s2 + $0x38] sm:$0xff]
  %v47 = vld [vmem:[%s3] sm:$0xff]
  %v48 = vld [vmem:[%s3 + $0x8] sm:$0xff]
  %v49 = vld [vmem:[%s3 + $0x10] sm:$0xff]
  %v50 = vld [vmem:[%s3 + $0x18] sm:$0xff]
  %v51 = vld [vmem:[%s3 + $0x20] sm:$0xff]
  %v52 = vld [vmem:[%s3 + $0x28] sm:$0xff]
  %v53 = vld [vmem:[%s3 + $0x30] sm:$0xff]
  %v54 = vld [vmem:[%s3 + $0x38] sm:$0xff]
  %v55 = vsub.f32 %v23, %v39
  %v56 = vsub.f32 %v24, %v40
  %v57 = vsub.f32 %v25, %v41
  %v58 = vsub.f32 %v26, %v42
  %v59 = vsub.f32 %v27, %v43
  %v60 = vsub.f32 %v28, %v44
  %v61 = vsub.f32 %v29, %v45
  %v62 = vsub.f32 %v30, %v46
  %v63 = vadd.f32 %v23, %v39
  %v64 = vadd.f32 %v24, %v40
  %v65 = vadd.f32 %v25, %v41
  %v66 = vadd.f32 %v26, %v42
  %v67 = vadd.f32 %v27, %v43
  %v68 = vadd.f32 %v28, %v44
  %v69 = vadd.f32 %v29, %v45
  %v70 = vadd.f32 %v30, %v46
  %v71 = vsub.f32 %v47, %v31
  %v72 = vsub.f32 %v48, %v32
  %v73 = vsub.f32 %v49, %v33
  %v74 = vsub.f32 %v50, %v34
  %v75 = vsub.f32 %v51, %v35
  %v76 = vsub.f32 %v52, %v36
  %v77 = vsub.f32 %v53, %v37
  %v78 = vsub.f32 %v54, %v38
  %v79 = vadd.f32 %v47, %v31
  %v80 = vadd.f32 %v48, %v32
  %v81 = vadd.f32 %v49, %v33
  %v82 = vadd.f32 %v50, %v34
  %v83 = vadd.f32 %v51, %v35
  %v84 = vadd.f32 %v52, %v36
  %v85 = vadd.f32 %v53, %v37
  %v86 = vadd.f32 %v54, %v38
  %v87 = vld [vmem:[%s4] sm:$0xff]
  %v88 = vld [vmem:[%s5] sm:$0xff]
  %vm89 = vcmask 64512
  %v91 = vsel %vm89, %v71, 0
  %v94 = vsel %vm89, %v72, 0
  %v97 = vsel %vm89, %v73, 0
  %v100 = vsel %vm89, %v74, 0
  %v103 = vsel %vm89, %v75, 0
  %v106 = vsel %vm89, %v76, 0
  %v109 = vsel %vm89, %v77, 0
  %v112 = vsel %vm89, %v78, 0
  %114 = vmatprep.subr.mxu0 0.0
  %v115 = vand.u32 %v88, 4294901760
  %116 = vmatpush1.msra.mxu0 %v115
  %117 = vmatprep.subr.mxu0 0.0
  %118 = vmatpush1.msra.mxu0 0.0
  %119 = vmatprep.subr.mxu0 0.0
  %120 = vmatpush1.msra.mxu0 0.0
  %121 = vmatprep.subr.mxu0 0.0
  %122 = vmatpush1.msra.mxu0 0.0
  %123 = vmatprep.subr.mxu0 0.0
  %124 = vmatpush1.msra.mxu0 0.0
  %125 = vmatprep.subr.mxu0 0.0
  %126 = vmatpush1.msra.mxu0 0.0
  %127 = vmatprep.subr.mxu0 0.0
  %128 = vmatpush1.msra.mxu0 0.0
  %129 = vmatprep.subr.mxu0 0.0
  %130 = vmatpush1.msra.mxu0 0.0
  %131 = vmatprep.subr.mxu0 0.0
  %132 = vmatpush1.msra.mxu0 0.0
  %133 = vmatprep.subr.mxu0 0.0
  %134 = vmatpush1.msra.mxu0 0.0
  %135 = vmatprep.subr.mxu0 0.0
  %136 = vmatpush1.msra.mxu0 0.0
  %137 = vmatprep.subr.mxu0 0.0
  %138 = vmatpush1.msra.mxu0 0.0
  %139 = vmatprep.subr.mxu0 0.0
  %140 = vmatpush1.msra.mxu0 0.0
  %141 = vmatprep.subr.mxu0 0.0
  %142 = vmatpush1.msra.mxu0 0.0
  %143 = vmatprep.subr.mxu0 0.0
  %144 = vmatpush1.msra.mxu0 0.0
  %145 = vmatprep.subr.mxu0 0.0
  %146 = vmatpush1.msra.mxu0 0.0
  %147 = vmatprep.subr.mxu0 0.0
  %148 = vmatpush1.msra.mxu0 0.0
  %149 = vmatprep.subr.mxu0 0.0
  %150 = vmatpush1.msra.mxu0 0.0
  %151 = vmatprep.subr.mxu0 0.0
  %152 = vmatpush1.msra.mxu0 0.0
  %153 = vmatprep.subr.mxu0 0.0
  %154 = vmatpush1.msra.mxu0 0.0
  %155 = vmatprep.subr.mxu0 0.0
  %156 = vmatpush1.msra.mxu0 0.0
  %157 = vmatprep.subr.mxu0 0.0
  %158 = vmatpush1.msra.mxu0 0.0
  %159 = vmatprep.subr.mxu0 0.0
  %160 = vmatpush1.msra.mxu0 0.0
  %161 = vmatprep.subr.mxu0 0.0
  %162 = vmatpush1.msra.mxu0 0.0
  %163 = vmatprep.subr.mxu0 0.0
  %164 = vmatpush1.msra.mxu0 0.0
  %165 = vmatprep.subr.mxu0 0.0
  %166 = vmatpush1.msra.mxu0 0.0
  %167 = vmatprep.subr.mxu0 0.0
  %168 = vmatpush1.msra.mxu0 0.0
  %169 = vmatprep.subr.mxu0 0.0
  %170 = vmatpush1.msra.mxu0 0.0
  %171 = vmatprep.subr.mxu0 0.0
  %172 = vmatpush1.msra.mxu0 0.0
  %173 = vmatprep.subr.mxu0 0.0
  %174 = vmatpush1.msra.mxu0 0.0
  %175 = vmatprep.subr.mxu0 0.0
  %176 = vmatpush1.msra.mxu0 0.0
  %177 = vmatprep.subr.mxu0 0.0
  %178 = vmatpush1.msra.mxu0 0.0
  %179 = vmatprep.mubr.f32.mxu0 0.0
  %v180 = vand.u32 %v91, 4294901760
  %v181 = vsub.f32 %v91, %v180
  %v182 = vand.u32 %v181, 4294901760
  %v183 = vsub.f32 %v181, %v182
  %v184 = vand.u32 %v183, 4294901760
  %185 = vmatmul.mubr.f32.gmra.mrb[0].mxu0 %v184
  %v186 = vpop.f32.mrb[0].mxu0
  %v187 = vadd.f32 0.0, %v186
  %v188 = vpop.f32.mrb[0].mxu0
  %189 = vmatprep.mubr.f32.mxu0 0.0
  %v190 = vand.u32 %v94, 4294901760
  %v191 = vsub.f32 %v94, %v190
  %v192 = vand.u32 %v191, 4294901760
  %v193 = vsub.f32 %v191, %v192
  %v194 = vand.u32 %v193, 4294901760
  %195 = vmatmul.mubr.f32.gmra.mrb[0].mxu0 %v194
  %v196 = vpop.f32.mrb[0].mxu0
  %v197 = vadd.f32 0.0, %v196
  %v198 = vpop.f32.mrb[0].mxu0
  %199 = vmatprep.mubr.f32.mxu0 0.0
  %v200 = vand.u32 %v97, 4294901760
  %v201 = vsub.f32 %v97, %v200
  %v202 = vand.u32 %v201, 4294901760
  %v203 = vsub.f32 %v201, %v202
  %v204 = vand.u32 %v203, 4294901760
  %205 = vmatmul.mubr.f32.gmra.mrb[0].mxu0 %v204
  %v206 = vpop.f32.mrb[0].mxu0
  %v207 = vadd.f32 0.0, %v206
  %v208 = vpop.f32.mrb[0].mxu0
  %209 = vmatprep.mubr.f32.mxu0 0.0
  %v210 = vand.u32 %v100, 4294901760
  %v211 = vsub.f32 %v100, %v210
  %v212 = vand.u32 %v211, 4294901760
  %v213 = vsub.f32 %v211, %v212
  %v214 = vand.u32 %v213, 4294901760
  %215 = vmatmul.mubr.f32.gmra.mrb[0].mxu0 %v214
  %v216 = vpop.f32.mrb[0].mxu0
  %v217 = vadd.f32 0.0, %v216
  %v218 = vpop.f32.mrb[0].mxu0
  %219 = vmatprep.mubr.f32.mxu0 0.0
  %v220 = vand.u32 %v103, 4294901760
  %v221 = vsub.f32 %v103, %v220
  %v222 = vand.u32 %v221, 4294901760
  %v223 = vsub.f32 %v221, %v222
  %v224 = vand.u32 %v223, 4294901760
  %225 = vmatmul.mubr.f32.gmra.mrb[0].mxu0 %v224
  %v226 = vpop.f32.mrb[0].mxu0
  %v227 = vadd.f32 0.0, %v226
  %v228 = vpop.f32.mrb[0].mxu0
  %229 = vmatprep.mubr.f32.mxu0 0.0
  %v230 = vand.u32 %v106, 4294901760
  %v231 = vsub.f32 %v106, %v230
  %v232 = vand.u32 %v231, 4294901760
  %v233 = vsub.f32 %v231, %v232
  %v234 = vand.u32 %v233, 4294901760
  %235 = vmatmul.mubr.f32.gmra.mrb[0].mxu0 %v234
  %v236 = vpop.f32.mrb[0].mxu0
  %v237 = vadd.f32 0.0, %v236
  %v238 = vpop.f32.mrb[0].mxu0
  %239 = vmatprep.mubr.f32.mxu0 0.0
  %v240 = vand.u32 %v109, 4294901760
  %v241 = vsub.f32 %v109, %v240
  %v242 = vand.u32 %v241, 4294901760
  %v243 = vsub.f32 %v241, %v242
  %v244 = vand.u32 %v243, 4294901760
  %245 = vmatmul.mubr.f32.gmra.mrb[0].mxu0 %v244
  %v246 = vpop.f32.mrb[0].mxu0
  %v247 = vadd.f32 0.0, %v246
  %v248 = vpop.f32.mrb[0].mxu0
  %249 = vmatprep.mubr.f32.mxu0 0.0
  %v250 = vand.u32 %v112, 4294901760
  %v251 = vsub.f32 %v112, %v250
  %v252 = vand.u32 %v251, 4294901760
  %v253 = vsub.f32 %v251, %v252
  %v254 = vand.u32 %v253, 4294901760
  %255 = vmatmul.mubr.f32.gmra.mrb[0].mxu0 %v254
  %v256 = vpop.f32.mrb[0].mxu0
  %v257 = vadd.f32 0.0, %v256
  %v258 = vpop.f32.mrb[0].mxu0
  %259 = vdwg.mxu0
  %260 = vmatprep.subr.mxu0 0.0
  %v261 = vand.u32 %v88, 4294901760
  %v262 = vsub.f32 %v88, %v261
  %v263 = vand.u32 %v262, 4294901760
  %v264 = vsub.f32 %v262, %v263
  %v265 = vand.u32 %v264, 4294901760
  %266 = vmatpush1.msra.mxu0 %v265
  %267 = vmatprep.subr.mxu0 0.0
  %268 = vmatpush1.msra.mxu0 0.0
  %269 = vmatprep.subr.mxu0 0.0
  %270 = vmatpush1.msra.mxu0 0.0
  %271 = vmatprep.subr.mxu0 0.0
  %272 = vmatpush1.msra.mxu0 0.0
  %273 = vmatprep.subr.mxu0 0.0
  %274 = vmatpush1.msra.mxu0 0.0
  %275 = vmatprep.subr.mxu0 0.0
  %276 = vmatpush1.msra.mxu0 0.0
  %277 = vmatprep.subr.mxu0 0.0
  %278 = vmatpush1.msra.mxu0 0.0
  %279 = vmatprep.subr.mxu0 0.0
  %280 = vmatpush1.msra.mxu0 0.0
  %281 = vmatprep.subr.mxu0 0.0
  %282 = vmatpush1.msra.mxu0 0.0
  %283 = vmatprep.subr.mxu0 0.0
  %284 = vmatpush1.msra.mxu0 0.0
  %285 = vmatprep.subr.mxu0 0.0
  %286 = vmatpush1.msra.mxu0 0.0
  %287 = vmatprep.subr.mxu0 0.0
  %288 = vmatpush1.msra.mxu0 0.0
  %289 = vmatprep.subr.mxu0 0.0
  %290 = vmatpush1.msra.mxu0 0.0
  %291 = vmatprep.subr.mxu0 0.0
  %292 = vmatpush1.msra.mxu0 0.0
  %293 = vmatprep.subr.mxu0 0.0
  %294 = vmatpush1.msra.mxu0 0.0
  %295 = vmatprep.subr.mxu0 0.0
  %296 = vmatpush1.msra.mxu0 0.0
  %297 = vmatprep.subr.mxu0 0.0
  %298 = vmatpush1.msra.mxu0 0.0
  %299 = vmatprep.subr.mxu0 0.0
  %300 = vmatpush1.msra.mxu0 0.0
  %301 = vmatprep.subr.mxu0 0.0
  %302 = vmatpush1.msra.mxu0 0.0
  %303 = vmatprep.subr.mxu0 0.0
  %304 = vmatpush1.msra.mxu0 0.0
  %305 = vmatprep.subr.mxu0 0.0
  %306 = vmatpush1.msra.mxu0 0.0
  %307 = vmatprep.subr.mxu0 0.0
  %308 = vmatpush1.msra.mxu0 0.0
  %309 = vmatprep.subr.mxu0 0.0
  %310 = vmatpush1.msra.mxu0 0.0
  %311 = vmatprep.subr.mxu0 0.0
  %312 = vmatpush1.msra.mxu0 0.0
  %313 = vmatprep.subr.mxu0 0.0
  %314 = vmatpush1.msra.mxu0 0.0
  %315 = vmatprep.subr.mxu0 0.0
  %316 = vmatpush1.msra.mxu0 0.0
  %317 = vmatprep.subr.mxu0 0.0
  %318 = vmatpush1.msra.mxu0 0.0
  %319 = vmatprep.subr.mxu0 0.0
  %320 = vmatpush1.msra.mxu0 0.0
  %321 = vmatprep.subr.mxu0 0.0
  %322 = vmatpush1.msra.mxu0 0.0
  %323 = vmatprep.subr.mxu0 0.0
  %324 = vmatpush1.msra.mxu0 0.0
  %325 = vmatprep.subr.mxu0 0.0
  %326 = vmatpush1.msra.mxu0 0.0
  %327 = vmatprep.subr.mxu0 0.0
  %328 = vmatpush1.msra.mxu0 0.0
  %329 = vmatprep.mubr.f32.mxu0 0.0
  %v330 = vand.u32 %v91, 4294901760
  %331 = vmatmul.mubr.f32.gmra.mrb[0].mxu0 %v330
  %v332 = vpop.f32.mrb[0].mxu0
  %v333 = vadd.f32 %v187, %v332
  %v334 = vpop.f32.mrb[0].mxu0
  %335 = vmatprep.mubr.f32.mxu0 0.0
  %v336 = vand.u32 %v94, 4294901760
  %337 = vmatmul.mubr.f32.gmra.mrb[0].mxu0 %v336
  %v338 = vpop.f32.mrb[0].mxu0
  %v339 = vadd.f32 %v197, %v338
  %v340 = vpop.f32.mrb[0].mxu0
  %341 = vmatprep.mubr.f32.mxu0 0.0
  %v342 = vand.u32 %v97, 4294901760
  %343 = vmatmul.mubr.f32.gmra.mrb[0].mxu0 %v342
  %v344 = vpop.f32.mrb[0].mxu0
  %v345 = vadd.f32 %v207, %v344
  %v346 = vpop.f32.mrb[0].mxu0
  %347 = vmatprep.mubr.f32.mxu0 0.0
  %v348 = vand.u32 %v100, 4294901760
  %349 = vmatmul.mubr.f32.gmra.mrb[0].mxu0 %v348
  %v350 = vpop.f32.mrb[0].mxu0
  %v351 = vadd.f32 %v217, %v350
  %v352 = vpop.f32.mrb[0].mxu0
  %353 = vmatprep.mubr.f32.mxu0 0.0
  %v354 = vand.u32 %v103, 4294901760
  %355 = vmatmul.mubr.f32.gmra.mrb[0].mxu0 %v354
  %v356 = vpop.f32.mrb[0].mxu0
  %v357 = vadd.f32 %v227, %v356
  %v358 = vpop.f32.mrb[0].mxu0
  %359 = vmatprep.mubr.f32.mxu0 0.0
  %v360 = vand.u32 %v106, 4294901760
  %361 = vmatmul.mubr.f32.gmra.mrb[0].mxu0 %v360
  %v362 = vpop.f32.mrb[0].mxu0
  %v363 = vadd.f32 %v237, %v362
  %v364 = vpop.f32.mrb[0].mxu0
  %365 = vmatprep.mubr.f32.mxu0 0.0
  %v366 = vand.u32 %v109, 4294901760
  %367 = vmatmul.mubr.f32.gmra.mrb[0].mxu0 %v366
  %v368 = vpop.f32.mrb[0].mxu0
  %v369 = vadd.f32 %v247, %v368
  %v370 = vpop.f32.mrb[0].mxu0
  %371 = vmatprep.mubr.f32.mxu0 0.0
  %v372 = vand.u32 %v112, 4294901760
  %373 = vmatmul.mubr.f32.gmra.mrb[0].mxu0 %v372
  %v374 = vpop.f32.mrb[0].mxu0
  %v375 = vadd.f32 %v257, %v374
  %v376 = vpop.f32.mrb[0].mxu0
  %377 = vdwg.mxu0
  %378 = vmatprep.subr.mxu0 0.0
  %v379 = vand.u32 %v88, 4294901760
  %v380 = vsub.f32 %v88, %v379
  %381 = vmatpush1.msra.mxu0 %v380
  %382 = vmatprep.subr.mxu0 0.0
  %383 = vmatpush1.msra.mxu0 0.0
  %384 = vmatprep.subr.mxu0 0.0
  %385 = vmatpush1.msra.mxu0 0.0
  %386 = vmatprep.subr.mxu0 0.0
  %387 = vmatpush1.msra.mxu0 0.0
  %388 = vmatprep.subr.mxu0 0.0
  %389 = vmatpush1.msra.mxu0 0.0
  %390 = vmatprep.subr.mxu0 0.0
  %391 = vmatpush1.msra.mxu0 0.0
  %392 = vmatprep.subr.mxu0 0.0
  %393 = vmatpush1.msra.mxu0 0.0
  %394 = vmatprep.subr.mxu0 0.0
  %395 = vmatpush1.msra.mxu0 0.0
  %396 = vmatprep.subr.mxu0 0.0
  %397 = vmatpush1.msra.mxu0 0.0
  %398 = vmatprep.subr.mxu0 0.0
  %399 = vmatpush1.msra.mxu0 0.0
  %400 = vmatprep.subr.mxu0 0.0
  %401 = vmatpush1.msra.mxu0 0.0
  %402 = vmatprep.subr.mxu0 0.0
  %403 = vmatpush1.msra.mxu0 0.0
  %404 = vmatprep.subr.mxu0 0.0
  %405 = vmatpush1.msra.mxu0 0.0
  %406 = vmatprep.subr.mxu0 0.0
  %407 = vmatpush1.msra.mxu0 0.0
  %408 = vmatprep.subr.mxu0 0.0
  %409 = vmatpush1.msra.mxu0 0.0
  %410 = vmatprep.subr.mxu0 0.0
  %411 = vmatpush1.msra.mxu0 0.0
  %412 = vmatprep.subr.mxu0 0.0
  %413 = vmatpush1.msra.mxu0 0.0
  %414 = vmatprep.subr.mxu0 0.0
  %415 = vmatpush1.msra.mxu0 0.0
  %416 = vmatprep.subr.mxu0 0.0
  %417 = vmatpush1.msra.mxu0 0.0
  %418 = vmatprep.subr.mxu0 0.0
  %419 = vmatpush1.msra.mxu0 0.0
  %420 = vmatprep.subr.mxu0 0.0
  %421 = vmatpush1.msra.mxu0 0.0
  %422 = vmatprep.subr.mxu0 0.0
  %423 = vmatpush1.msra.mxu0 0.0
  %424 = vmatprep.subr.mxu0 0.0
  %425 = vmatpush1.msra.mxu0 0.0
  %426 = vmatprep.subr.mxu0 0.0
  %427 = vmatpush1.msra.mxu0 0.0
  %428 = vmatprep.subr.mxu0 0.0
  %429 = vmatpush1.msra.mxu0 0.0
  %430 = vmatprep.subr.mxu0 0.0
  %431 = vmatpush1.msra.mxu0 0.0
  %432 = vmatprep.subr.mxu0 0.0
  %433 = vmatpush1.msra.mxu0 0.0
  %434 = vmatprep.subr.mxu0 0.0
  %435 = vmatpush1.msra.mxu0 0.0
  %436 = vmatprep.subr.mxu0 0.0
  %437 = vmatpush1.msra.mxu0 0.0
  %438 = vmatprep.subr.mxu0 0.0
  %439 = vmatpush1.msra.mxu0 0.0
  %440 = vmatprep.subr.mxu0 0.0
  %441 = vmatpush1.msra.mxu0 0.0
  %442 = vmatprep.subr.mxu0 0.0
  %443 = vmatpush1.msra.mxu0 0.0
  %444 = vmatprep.mubr.f32.mxu0 0.0
  %v445 = vand.u32 %v91, 4294901760
  %v446 = vsub.f32 %v91, %v445
  %447 = vmatmul.mubr.f32.gmra.mrb[0].mxu0 %v446
  %v448 = vpop.f32.mrb[0].mxu0
  %v449 = vadd.f32 %v333, %v448
  %v450 = vpop.f32.mrb[0].mxu0
  %451 = vmatprep.mubr.f32.mxu0 0.0
  %v452 = vand.u32 %v94, 4294901760
  %v453 = vsub.f32 %v94, %v452
  %454 = vmatmul.mubr.f32.gmra.mrb[0].mxu0 %v453
  %v455 = vpop.f32.mrb[0].mxu0
  %v456 = vadd.f32 %v339, %v455
  %v457 = vpop.f32.mrb[0].mxu0
  %458 = vmatprep.mubr.f32.mxu0 0.0
  %v459 = vand.u32 %v97, 4294901760
  %v460 = vsub.f32 %v97, %v459
  %461 = vmatmul.mubr.f32.gmra.mrb[0].mxu0 %v460
  %v462 = vpop.f32.mrb[0].mxu0
  %v463 = vadd.f32 %v345, %v462
  %v464 = vpop.f32.mrb[0].mxu0
  %465 = vmatprep.mubr.f32.mxu0 0.0
  %v466 = vand.u32 %v100, 4294901760
  %v467 = vsub.f32 %v100, %v466
  %468 = vmatmul.mubr.f32.gmra.mrb[0].mxu0 %v467
  %v469 = vpop.f32.mrb[0].mxu0
  %v470 = vadd.f32 %v351, %v469
  %v471 = vpop.f32.mrb[0].mxu0
  %472 = vmatprep.mubr.f32.mxu0 0.0
  %v473 = vand.u32 %v103, 4294901760
  %v474 = vsub.f32 %v103, %v473
  %475 = vmatmul.mubr.f32.gmra.mrb[0].mxu0 %v474
  %v476 = vpop.f32.mrb[0].mxu0
  %v477 = vadd.f32 %v357, %v476
  %v478 = vpop.f32.mrb[0].mxu0
  %479 = vmatprep.mubr.f32.mxu0 0.0
  %v480 = vand.u32 %v106, 4294901760
  %v481 = vsub.f32 %v106, %v480
  %482 = vmatmul.mubr.f32.gmra.mrb[0].mxu0 %v481
  %v483 = vpop.f32.mrb[0].mxu0
  %v484 = vadd.f32 %v363, %v483
  %v485 = vpop.f32.mrb[0].mxu0
  %486 = vmatprep.mubr.f32.mxu0 0.0
  %v487 = vand.u32 %v109, 4294901760
  %v488 = vsub.f32 %v109, %v487
  %489 = vmatmul.mubr.f32.gmra.mrb[0].mxu0 %v488
  %v490 = vpop.f32.mrb[0].mxu0
  %v491 = vadd.f32 %v369, %v490
  %v492 = vpop.f32.mrb[0].mxu0
  %493 = vmatprep.mubr.f32.mxu0 0.0
  %v494 = vand.u32 %v112, 4294901760
  %v495 = vsub.f32 %v112, %v494
  %496 = vmatmul.mubr.f32.gmra.mrb[0].mxu0 %v495
  %v497 = vpop.f32.mrb[0].mxu0
  %v498 = vadd.f32 %v375, %v497
  %v499 = vpop.f32.mrb[0].mxu0
  %500 = vdwg.mxu0
  %501 = vmatprep.subr.mxu0 0.0
  %v502 = vand.u32 %v88, 4294901760
  %503 = vmatpush1.msra.mxu0 %v502
  %504 = vmatprep.subr.mxu0 0.0
  %505 = vmatpush1.msra.mxu0 0.0
  %506 = vmatprep.subr.mxu0 0.0
  %507 = vmatpush1.msra.mxu0 0.0
  %508 = vmatprep.subr.mxu0 0.0
  %509 = vmatpush1.msra.mxu0 0.0
  %510 = vmatprep.subr.mxu0 0.0
  %511 = vmatpush1.msra.mxu0 0.0
  %512 = vmatprep.subr.mxu0 0.0
  %513 = vmatpush1.msra.mxu0 0.0
  %514 = vmatprep.subr.mxu0 0.0
  %515 = vmatpush1.msra.mxu0 0.0
  %516 = vmatprep.subr.mxu0 0.0
  %517 = vmatpush1.msra.mxu0 0.0
  %518 = vmatprep.subr.mxu0 0.0
  %519 = vmatpush1.msra.mxu0 0.0
  %520 = vmatprep.subr.mxu0 0.0
  %521 = vmatpush1.msra.mxu0 0.0
  %522 = vmatprep.subr.mxu0 0.0
  %523 = vmatpush1.msra.mxu0 0.0
  %524 = vmatprep.subr.mxu0 0.0
  %525 = vmatpush1.msra.mxu0 0.0
  %526 = vmatprep.subr.mxu0 0.0
  %527 = vmatpush1.msra.mxu0 0.0
  %528 = vmatprep.subr.mxu0 0.0
  %529 = vmatpush1.msra.mxu0 0.0
  %530 = vmatprep.subr.mxu0 0.0
  %531 = vmatpush1.msra.mxu0 0.0
  %532 = vmatprep.subr.mxu0 0.0
  %533 = vmatpush1.msra.mxu0 0.0
  %534 = vmatprep.subr.mxu0 0.0
  %535 = vmatpush1.msra.mxu0 0.0
  %536 = vmatprep.subr.mxu0 0.0
  %537 = vmatpush1.msra.mxu0 0.0
  %538 = vmatprep.subr.mxu0 0.0
  %539 = vmatpush1.msra.mxu0 0.0
  %540 = vmatprep.subr.mxu0 0.0
  %541 = vmatpush1.msra.mxu0 0.0
  %542 = vmatprep.subr.mxu0 0.0
  %543 = vmatpush1.msra.mxu0 0.0
  %544 = vmatprep.subr.mxu0 0.0
  %545 = vmatpush1.msra.mxu0 0.0
  %546 = vmatprep.subr.mxu0 0.0
  %547 = vmatpush1.msra.mxu0 0.0
  %548 = vmatprep.subr.mxu0 0.0
  %549 = vmatpush1.msra.mxu0 0.0
  %550 = vmatprep.subr.mxu0 0.0
  %551 = vmatpush1.msra.mxu0 0.0
  %552 = vmatprep.subr.mxu0 0.0
  %553 = vmatpush1.msra.mxu0 0.0
  %554 = vmatprep.subr.mxu0 0.0
  %555 = vmatpush1.msra.mxu0 0.0
  %556 = vmatprep.subr.mxu0 0.0
  %557 = vmatpush1.msra.mxu0 0.0
  %558 = vmatprep.subr.mxu0 0.0
  %559 = vmatpush1.msra.mxu0 0.0
  %560 = vmatprep.subr.mxu0 0.0
  %561 = vmatpush1.msra.mxu0 0.0
  %562 = vmatprep.subr.mxu0 0.0
  %563 = vmatpush1.msra.mxu0 0.0
  %564 = vmatprep.subr.mxu0 0.0
  %565 = vmatpush1.msra.mxu0 0.0
  %566 = vmatprep.mubr.f32.mxu0 0.0
  %v567 = vand.u32 %v91, 4294901760
  %v568 = vsub.f32 %v91, %v567
  %v569 = vand.u32 %v568, 4294901760
  %570 = vmatmul.mubr.f32.gmra.mrb[0].mxu0 %v569
  %v571 = vpop.f32.mrb[0].mxu0
  %v572 = vadd.f32 %v449, %v571
  %v573 = vpop.f32.mrb[0].mxu0
  %574 = vmatprep.mubr.f32.mxu0 0.0
  %v575 = vand.u32 %v94, 4294901760
  %v576 = vsub.f32 %v94, %v575
  %v577 = vand.u32 %v576, 4294901760
  %578 = vmatmul.mubr.f32.gmra.mrb[0].mxu0 %v577
  %v579 = vpop.f32.mrb[0].mxu0
  %v580 = vadd.f32 %v456, %v579
  %v581 = vpop.f32.mrb[0].mxu0
  %582 = vmatprep.mubr.f32.mxu0 0.0
  %v583 = vand.u32 %v97, 4294901760
  %v584 = vsub.f32 %v97, %v583
  %v585 = vand.u32 %v584, 4294901760
  %586 = vmatmul.mubr.f32.gmra.mrb[0].mxu0 %v585
  %v587 = vpop.f32.mrb[0].mxu0
  %v588 = vadd.f32 %v463, %v587
  %v589 = vpop.f32.mrb[0].mxu0
  %590 = vmatprep.mubr.f32.mxu0 0.0
  %v591 = vand.u32 %v100, 4294901760
  %v592 = vsub.f32 %v100, %v591
  %v593 = vand.u32 %v592, 4294901760
  %594 = vmatmul.mubr.f32.gmra.mrb[0].mxu0 %v593
  %v595 = vpop.f32.mrb[0].mxu0
  %v596 = vadd.f32 %v470, %v595
  %v597 = vpop.f32.mrb[0].mxu0
  %598 = vmatprep.mubr.f32.mxu0 0.0
  %v599 = vand.u32 %v103, 4294901760
  %v600 = vsub.f32 %v103, %v599
  %v601 = vand.u32 %v600, 4294901760
  %602 = vmatmul.mubr.f32.gmra.mrb[0].mxu0 %v601
  %v603 = vpop.f32.mrb[0].mxu0
  %v604 = vadd.f32 %v477, %v603
  %v605 = vpop.f32.mrb[0].mxu0
  %606 = vmatprep.mubr.f32.mxu0 0.0
  %v607 = vand.u32 %v106, 4294901760
  %v608 = vsub.f32 %v106, %v607
  %v609 = vand.u32 %v608, 4294901760
  %610 = vmatmul.mubr.f32.gmra.mrb[0].mxu0 %v609
  %v611 = vpop.f32.mrb[0].mxu0
  %v612 = vadd.f32 %v484, %v611
  %v613 = vpop.f32.mrb[0].mxu0
  %614 = vmatprep.mubr.f32.mxu0 0.0
  %v615 = vand.u32 %v109, 4294901760
  %v616 = vsub.f32 %v109, %v615
  %v617 = vand.u32 %v616, 4294901760
  %618 = vmatmul.mubr.f32.gmra.mrb[0].mxu0 %v617
  %v619 = vpop.f32.mrb[0].mxu0
  %v620 = vadd.f32 %v491, %v619
  %v621 = vpop.f32.mrb[0].mxu0
  %622 = vmatprep.mubr.f32.mxu0 0.0
  %v623 = vand.u32 %v112, 4294901760
  %v624 = vsub.f32 %v112, %v623
  %v625 = vand.u32 %v624, 4294901760
  %626 = vmatmul.mubr.f32.gmra.mrb[0].mxu0 %v625
  %v627 = vpop.f32.mrb[0].mxu0
  %v628 = vadd.f32 %v498, %v627
  %v629 = vpop.f32.mrb[0].mxu0
  %630 = vdwg.mxu0
  %631 = vmatprep.subr.mxu0 0.0
  %v632 = vand.u32 %v88, 4294901760
  %v633 = vsub.f32 %v88, %v632
  %v634 = vand.u32 %v633, 4294901760
  %635 = vmatpush1.msra.mxu0 %v634
  %636 = vmatprep.subr.mxu0 0.0
  %637 = vmatpush1.msra.mxu0 0.0
  %638 = vmatprep.subr.mxu0 0.0
  %639 = vmatpush1.msra.mxu0 0.0
  %640 = vmatprep.subr.mxu0 0.0
  %641 = vmatpush1.msra.mxu0 0.0
  %642 = vmatprep.subr.mxu0 0.0
  %643 = vmatpush1.msra.mxu0 0.0
  %644 = vmatprep.subr.mxu0 0.0
  %645 = vmatpush1.msra.mxu0 0.0
  %646 = vmatprep.subr.mxu0 0.0
  %647 = vmatpush1.msra.mxu0 0.0
  %648 = vmatprep.subr.mxu0 0.0
  %649 = vmatpush1.msra.mxu0 0.0
  %650 = vmatprep.subr.mxu0 0.0
  %651 = vmatpush1.msra.mxu0 0.0
  %652 = vmatprep.subr.mxu0 0.0
  %653 = vmatpush1.msra.mxu0 0.0
  %654 = vmatprep.subr.mxu0 0.0
  %655 = vmatpush1.msra.mxu0 0.0
  %656 = vmatprep.subr.mxu0 0.0
  %657 = vmatpush1.msra.mxu0 0.0
  %658 = vmatprep.subr.mxu0 0.0
  %659 = vmatpush1.msra.mxu0 0.0
  %660 = vmatprep.subr.mxu0 0.0
  %661 = vmatpush1.msra.mxu0 0.0
  %662 = vmatprep.subr.mxu0 0.0
  %663 = vmatpush1.msra.mxu0 0.0
  %664 = vmatprep.subr.mxu0 0.0
  %665 = vmatpush1.msra.mxu0 0.0
  %666 = vmatprep.subr.mxu0 0.0
  %667 = vmatpush1.msra.mxu0 0.0
  %668 = vmatprep.subr.mxu0 0.0
  %669 = vmatpush1.msra.mxu0 0.0
  %670 = vmatprep.subr.mxu0 0.0
  %671 = vmatpush1.msra.mxu0 0.0
  %672 = vmatprep.subr.mxu0 0.0
  %673 = vmatpush1.msra.mxu0 0.0
  %674 = vmatprep.subr.mxu0 0.0
  %675 = vmatpush1.msra.mxu0 0.0
  %676 = vmatprep.subr.mxu0 0.0
  %677 = vmatpush1.msra.mxu0 0.0
  %678 = vmatprep.subr.mxu0 0.0
  %679 = vmatpush1.msra.mxu0 0.0
  %680 = vmatprep.subr.mxu0 0.0
  %681 = vmatpush1.msra.mxu0 0.0
  %682 = vmatprep.subr.mxu0 0.0
  %683 = vmatpush1.msra.mxu0 0.0
  %684 = vmatprep.subr.mxu0 0.0
  %685 = vmatpush1.msra.mxu0 0.0
  %686 = vmatprep.subr.mxu0 0.0
  %687 = vmatpush1.msra.mxu0 0.0
  %688 = vmatprep.subr.mxu0 0.0
  %689 = vmatpush1.msra.mxu0 0.0
  %690 = vmatprep.subr.mxu0 0.0
  %691 = vmatpush1.msra.mxu0 0.0
  %692 = vmatprep.subr.mxu0 0.0
  %693 = vmatpush1.msra.mxu0 0.0
  %694 = vmatprep.subr.mxu0 0.0
  %695 = vmatpush1.msra.mxu0 0.0
  %696 = vmatprep.subr.mxu0 0.0
  %697 = vmatpush1.msra.mxu0 0.0
  %698 = vmatprep.mubr.f32.mxu0 0.0
  %v699 = vand.u32 %v91, 4294901760
  %700 = vmatmul.mubr.f32.gmra.mrb[0].mxu0 %v699
  %v701 = vpop.f32.mrb[0].mxu0
  %v702 = vadd.f32 %v572, %v701
  %v703 = vpop.f32.mrb[0].mxu0
  %704 = vmatprep.mubr.f32.mxu0 0.0
  %v705 = vand.u32 %v94, 4294901760
  %706 = vmatmul.mubr.f32.gmra.mrb[0].mxu0 %v705
  %v707 = vpop.f32.mrb[0].mxu0
  %v708 = vadd.f32 %v580, %v707
  %v709 = vpop.f32.mrb[0].mxu0
  %710 = vmatprep.mubr.f32.mxu0 0.0
  %v711 = vand.u32 %v97, 4294901760
  %712 = vmatmul.mubr.f32.gmra.mrb[0].mxu0 %v711
  %v713 = vpop.f32.mrb[0].mxu0
  %v714 = vadd.f32 %v588, %v713
  %v715 = vpop.f32.mrb[0].mxu0
  %716 = vmatprep.mubr.f32.mxu0 0.0
  %v717 = vand.u32 %v100, 4294901760
  %718 = vmatmul.mubr.f32.gmra.mrb[0].mxu0 %v717
  %v719 = vpop.f32.mrb[0].mxu0
  %v720 = vadd.f32 %v596, %v719
  %v721 = vpop.f32.mrb[0].mxu0
  %722 = vmatprep.mubr.f32.mxu0 0.0
  %v723 = vand.u32 %v103, 4294901760
  %724 = vmatmul.mubr.f32.gmra.mrb[0].mxu0 %v723
  %v725 = vpop.f32.mrb[0].mxu0
  %v726 = vadd.f32 %v604, %v725
  %v727 = vpop.f32.mrb[0].mxu0
  %728 = vmatprep.mubr.f32.mxu0 0.0
  %v729 = vand.u32 %v106, 4294901760
  %730 = vmatmul.mubr.f32.gmra.mrb[0].mxu0 %v729
  %v731 = vpop.f32.mrb[0].mxu0
  %v732 = vadd.f32 %v612, %v731
  %v733 = vpop.f32.mrb[0].mxu0
  %734 = vmatprep.mubr.f32.mxu0 0.0
  %v735 = vand.u32 %v109, 4294901760
  %736 = vmatmul.mubr.f32.gmra.mrb[0].mxu0 %v735
  %v737 = vpop.f32.mrb[0].mxu0
  %v738 = vadd.f32 %v620, %v737
  %v739 = vpop.f32.mrb[0].mxu0
  %740 = vmatprep.mubr.f32.mxu0 0.0
  %v741 = vand.u32 %v112, 4294901760
  %742 = vmatmul.mubr.f32.gmra.mrb[0].mxu0 %v741
  %v743 = vpop.f32.mrb[0].mxu0
  %v744 = vadd.f32 %v628, %v743
  %v745 = vpop.f32.mrb[0].mxu0
  %746 = vdwg.mxu0
  %747 = vmatprep.subr.mxu0 0.0
  %v748 = vand.u32 %v88, 4294901760
  %749 = vmatpush1.msra.mxu0 %v748
  %750 = vmatprep.subr.mxu0 0.0
  %751 = vmatpush1.msra.mxu0 0.0
  %752 = vmatprep.subr.mxu0 0.0
  %753 = vmatpush1.msra.mxu0 0.0
  %754 = vmatprep.subr.mxu0 0.0
  %755 = vmatpush1.msra.mxu0 0.0
  %756 = vmatprep.subr.mxu0 0.0
  %757 = vmatpush1.msra.mxu0 0.0
  %758 = vmatprep.subr.mxu0 0.0
  %759 = vmatpush1.msra.mxu0 0.0
  %760 = vmatprep.subr.mxu0 0.0
  %761 = vmatpush1.msra.mxu0 0.0
  %762 = vmatprep.subr.mxu0 0.0
  %763 = vmatpush1.msra.mxu0 0.0
  %764 = vmatprep.subr.mxu0 0.0
  %765 = vmatpush1.msra.mxu0 0.0
  %766 = vmatprep.subr.mxu0 0.0
  %767 = vmatpush1.msra.mxu0 0.0
  %768 = vmatprep.subr.mxu0 0.0
  %769 = vmatpush1.msra.mxu0 0.0
  %770 = vmatprep.subr.mxu0 0.0
  %771 = vmatpush1.msra.mxu0 0.0
  %772 = vmatprep.subr.mxu0 0.0
  %773 = vmatpush1.msra.mxu0 0.0
  %774 = vmatprep.subr.mxu0 0.0
  %775 = vmatpush1.msra.mxu0 0.0
  %776 = vmatprep.subr.mxu0 0.0
  %777 = vmatpush1.msra.mxu0 0.0
  %778 = vmatprep.subr.mxu0 0.0
  %779 = vmatpush1.msra.mxu0 0.0
  %780 = vmatprep.subr.mxu0 0.0
  %781 = vmatpush1.msra.mxu0 0.0
  %782 = vmatprep.subr.mxu0 0.0
  %783 = vmatpush1.msra.mxu0 0.0
  %784 = vmatprep.subr.mxu0 0.0
  %785 = vmatpush1.msra.mxu0 0.0
  %786 = vmatprep.subr.mxu0 0.0
  %787 = vmatpush1.msra.mxu0 0.0
  %788 = vmatprep.subr.mxu0 0.0
  %789 = vmatpush1.msra.mxu0 0.0
  %790 = vmatprep.subr.mxu0 0.0
  %791 = vmatpush1.msra.mxu0 0.0
  %792 = vmatprep.subr.mxu0 0.0
  %793 = vmatpush1.msra.mxu0 0.0
  %794 = vmatprep.subr.mxu0 0.0
  %795 = vmatpush1.msra.mxu0 0.0
  %796 = vmatprep.subr.mxu0 0.0
  %797 = vmatpush1.msra.mxu0 0.0
  %798 = vmatprep.subr.mxu0 0.0
  %799 = vmatpush1.msra.mxu0 0.0
  %800 = vmatprep.subr.mxu0 0.0
  %801 = vmatpush1.msra.mxu0 0.0
  %802 = vmatprep.subr.mxu0 0.0
  %803 = vmatpush1.msra.mxu0 0.0
  %804 = vmatprep.subr.mxu0 0.0
  %805 = vmatpush1.msra.mxu0 0.0
  %806 = vmatprep.subr.mxu0 0.0
  %807 = vmatpush1.msra.mxu0 0.0
  %808 = vmatprep.subr.mxu0 0.0
  %809 = vmatpush1.msra.mxu0 0.0
  %810 = vmatprep.subr.mxu0 0.0
  %811 = vmatpush1.msra.mxu0 0.0
  %812 = vmatprep.mubr.f32.mxu0 0.0
  %v813 = vand.u32 %v91, 4294901760
  %814 = vmatmul.mubr.f32.gmra.mrb[0].mxu0 %v813
  %v815 = vpop.f32.mrb[0].mxu0
  %v816 = vadd.f32 %v702, %v815
  %v817 = vpop.f32.mrb[0].mxu0
  %818 = vmatprep.mubr.f32.mxu0 0.0
  %v819 = vand.u32 %v94, 4294901760
  %820 = vmatmul.mubr.f32.gmra.mrb[0].mxu0 %v819
  %v821 = vpop.f32.mrb[0].mxu0
  %v822 = vadd.f32 %v708, %v821
  %v823 = vpop.f32.mrb[0].mxu0
  %824 = vmatprep.mubr.f32.mxu0 0.0
  %v825 = vand.u32 %v97, 4294901760
  %826 = vmatmul.mubr.f32.gmra.mrb[0].mxu0 %v825
  %v827 = vpop.f32.mrb[0].mxu0
  %v828 = vadd.f32 %v714, %v827
  %v829 = vpop.f32.mrb[0].mxu0
  %830 = vmatprep.mubr.f32.mxu0 0.0
  %v831 = vand.u32 %v100, 4294901760
  %832 = vmatmul.mubr.f32.gmra.mrb[0].mxu0 %v831
  %v833 = vpop.f32.mrb[0].mxu0
  %v834 = vadd.f32 %v720, %v833
  %v835 = vpop.f32.mrb[0].mxu0
  %836 = vmatprep.mubr.f32.mxu0 0.0
  %v837 = vand.u32 %v103, 4294901760
  %838 = vmatmul.mubr.f32.gmra.mrb[0].mxu0 %v837
  %v839 = vpop.f32.mrb[0].mxu0
  %v840 = vadd.f32 %v726, %v839
  %v841 = vpop.f32.mrb[0].mxu0
  %842 = vmatprep.mubr.f32.mxu0 0.0
  %v843 = vand.u32 %v106, 4294901760
  %844 = vmatmul.mubr.f32.gmra.mrb[0].mxu0 %v843
  %v845 = vpop.f32.mrb[0].mxu0
  %v846 = vadd.f32 %v732, %v845
  %v847 = vpop.f32.mrb[0].mxu0
  %848 = vmatprep.mubr.f32.mxu0 0.0
  %v849 = vand.u32 %v109, 4294901760
  %850 = vmatmul.mubr.f32.gmra.mrb[0].mxu0 %v849
  %v851 = vpop.f32.mrb[0].mxu0
  %v852 = vadd.f32 %v738, %v851
  %v853 = vpop.f32.mrb[0].mxu0
  %854 = vmatprep.mubr.f32.mxu0 0.0
  %v855 = vand.u32 %v112, 4294901760
  %856 = vmatmul.mubr.f32.gmra.mrb[0].mxu0 %v855
  %v857 = vpop.f32.mrb[0].mxu0
  %v858 = vadd.f32 %v744, %v857
  %v859 = vpop.f32.mrb[0].mxu0
  %860 = vdwg.mxu0
  %v862 = vsel %vm89, %v63, 0
  %v865 = vsel %vm89, %v64, 0
  %v868 = vsel %vm89, %v65, 0
  %v871 = vsel %vm89, %v66, 0
  %v874 = vsel %vm89, %v67, 0
  %v877 = vsel %vm89, %v68, 0
  %v880 = vsel %vm89, %v69, 0
  %v883 = vsel %vm89, %v70, 0
  %885 = vmatprep.subr.mxu0 0.0
  %v886 = vand.u32 %v87, 4294901760
  %887 = vmatpush1.msra.mxu0 %v886
  %888 = vmatprep.subr.mxu0 0.0
  %889 = vmatpush1.msra.mxu0 0.0
  %890 = vmatprep.subr.mxu0 0.0
  %891 = vmatpush1.msra.mxu0 0.0
  %892 = vmatprep.subr.mxu0 0.0
  %893 = vmatpush1.msra.mxu0 0.0
  %894 = vmatprep.subr.mxu0 0.0
  %895 = vmatpush1.msra.mxu0 0.0
  %896 = vmatprep.subr.mxu0 0.0
  %897 = vmatpush1.msra.mxu0 0.0
  %898 = vmatprep.subr.mxu0 0.0
  %899 = vmatpush1.msra.mxu0 0.0
  %900 = vmatprep.subr.mxu0 0.0
  %901 = vmatpush1.msra.mxu0 0.0
  %902 = vmatprep.subr.mxu0 0.0
  %903 = vmatpush1.msra.mxu0 0.0
  %904 = vmatprep.subr.mxu0 0.0
  %905 = vmatpush1.msra.mxu0 0.0
  %906 = vmatprep.subr.mxu0 0.0
  %907 = vmatpush1.msra.mxu0 0.0
  %908 = vmatprep.subr.mxu0 0.0
  %909 = vmatpush1.msra.mxu0 0.0
  %910 = vmatprep.subr.mxu0 0.0
  %911 = vmatpush1.msra.mxu0 0.0
  %912 = vmatprep.subr.mxu0 0.0
  %913 = vmatpush1.msra.mxu0 0.0
  %914 = vmatprep.subr.mxu0 0.0
  %915 = vmatpush1.msra.mxu0 0.0
  %916 = vmatprep.subr.mxu0 0.0
  %917 = vmatpush1.msra.mxu0 0.0
  %918 = vmatprep.subr.mxu0 0.0
  %919 = vmatpush1.msra.mxu0 0.0
  %920 = vmatprep.subr.mxu0 0.0
  %921 = vmatpush1.msra.mxu0 0.0
  %922 = vmatprep.subr.mxu0 0.0
  %923 = vmatpush1.msra.mxu0 0.0
  %924 = vmatprep.subr.mxu0 0.0
  %925 = vmatpush1.msra.mxu0 0.0
  %926 = vmatprep.subr.mxu0 0.0
  %927 = vmatpush1.msra.mxu0 0.0
  %928 = vmatprep.subr.mxu0 0.0
  %929 = vmatpush1.msra.mxu0 0.0
  %930 = vmatprep.subr.mxu0 0.0
  %931 = vmatpush1.msra.mxu0 0.0
  %932 = vmatprep.subr.mxu0 0.0
  %933 = vmatpush1.msra.mxu0 0.0
  %934 = vmatprep.subr.mxu0 0.0
  %935 = vmatpush1.msra.mxu0 0.0
  %936 = vmatprep.subr.mxu0 0.0
  %937 = vmatpush1.msra.mxu0 0.0
  %938 = vmatprep.subr.mxu0 0.0
  %939 = vmatpush1.msra.mxu0 0.0
  %940 = vmatprep.subr.mxu0 0.0
  %941 = vmatpush1.msra.mxu0 0.0
  %942 = vmatprep.subr.mxu0 0.0
  %943 = vmatpush1.msra.mxu0 0.0
  %944 = vmatprep.subr.mxu0 0.0
  %945 = vmatpush1.msra.mxu0 0.0
  %946 = vmatprep.subr.mxu0 0.0
  %947 = vmatpush1.msra.mxu0 0.0
  %948 = vmatprep.subr.mxu0 0.0
  %949 = vmatpush1.msra.mxu0 0.0
  %950 = vmatprep.mubr.f32.mxu0 0.0
  %v951 = vand.u32 %v862, 4294901760
  %v952 = vsub.f32 %v862, %v951
  %v953 = vand.u32 %v952, 4294901760
  %v954 = vsub.f32 %v952, %v953
  %v955 = vand.u32 %v954, 4294901760
  %956 = vmatmul.mubr.f32.gmra.mrb[0].mxu0 %v955
  %v957 = vpop.f32.mrb[0].mxu0
  %v958 = vadd.f32 0.0, %v957
  %v959 = vpop.f32.mrb[0].mxu0
  %960 = vmatprep.mubr.f32.mxu0 0.0
  %v961 = vand.u32 %v865, 4294901760
  %v962 = vsub.f32 %v865, %v961
  %v963 = vand.u32 %v962, 4294901760
  %v964 = vsub.f32 %v962, %v963
  %v965 = vand.u32 %v964, 4294901760
  %966 = vmatmul.mubr.f32.gmra.mrb[0].mxu0 %v965
  %v967 = vpop.f32.mrb[0].mxu0
  %v968 = vadd.f32 0.0, %v967
  %v969 = vpop.f32.mrb[0].mxu0
  %970 = vmatprep.mubr.f32.mxu0 0.0
  %v971 = vand.u32 %v868, 4294901760
  %v972 = vsub.f32 %v868, %v971
  %v973 = vand.u32 %v972, 4294901760
  %v974 = vsub.f32 %v972, %v973
  %v975 = vand.u32 %v974, 4294901760
  %976 = vmatmul.mubr.f32.gmra.mrb[0].mxu0 %v975
  %v977 = vpop.f32.mrb[0].mxu0
  %v978 = vadd.f32 0.0, %v977
  %v979 = vpop.f32.mrb[0].mxu0
  %980 = vmatprep.mubr.f32.mxu0 0.0
  %v981 = vand.u32 %v871, 4294901760
  %v982 = vsub.f32 %v871, %v981
  %v983 = vand.u32 %v982, 4294901760
  %v984 = vsub.f32 %v982, %v983
  %v985 = vand.u32 %v984, 4294901760
  %986 = vmatmul.mubr.f32.gmra.mrb[0].mxu0 %v985
  %v987 = vpop.f32.mrb[0].mxu0
  %v988 = vadd.f32 0.0, %v987
  %v989 = vpop.f32.mrb[0].mxu0
  %990 = vmatprep.mubr.f32.mxu0 0.0
  %v991 = vand.u32 %v874, 4294901760
  %v992 = vsub.f32 %v874, %v991
  %v993 = vand.u32 %v992, 4294901760
  %v994 = vsub.f32 %v992, %v993
  %v995 = vand.u32 %v994, 4294901760
  %996 = vmatmul.mubr.f32.gmra.mrb[0].mxu0 %v995
  %v997 = vpop.f32.mrb[0].mxu0
  %v998 = vadd.f32 0.0, %v997
  %v999 = vpop.f32.mrb[0].mxu0
  %1000 = vmatprep.mubr.f32.mxu0 0.0
  %v1001 = vand.u32 %v877, 4294901760
  %v1002 = vsub.f32 %v877, %v1001
  %v1003 = vand.u32 %v1002, 4294901760
  %v1004 = vsub.f32 %v1002, %v1003
  %v1005 = vand.u32 %v1004, 4294901760
  %1006 = vmatmul.mubr.f32.gmra.mrb[0].mxu0 %v1005
  %v1007 = vpop.f32.mrb[0].mxu0
  %v1008 = vadd.f32 0.0, %v1007
  %v1009 = vpop.f32.mrb[0].mxu0
  %1010 = vmatprep.mubr.f32.mxu0 0.0
  %v1011 = vand.u32 %v880, 4294901760
  %v1012 = vsub.f32 %v880, %v1011
  %v1013 = vand.u32 %v1012, 4294901760
  %v1014 = vsub.f32 %v1012, %v1013
  %v1015 = vand.u32 %v1014, 4294901760
  %1016 = vmatmul.mubr.f32.gmra.mrb[0].mxu0 %v1015
  %v1017 = vpop.f32.mrb[0].mxu0
  %v1018 = vadd.f32 0.0, %v1017
  %v1019 = vpop.f32.mrb[0].mxu0
  %1020 = vmatprep.mubr.f32.mxu0 0.0
  %v1021 = vand.u32 %v883, 4294901760
  %v1022 = vsub.f32 %v883, %v1021
  %v1023 = vand.u32 %v1022, 4294901760
  %v1024 = vsub.f32 %v1022, %v1023
  %v1025 = vand.u32 %v1024, 4294901760
  %1026 = vmatmul.mubr.f32.gmra.mrb[0].mxu0 %v1025
  %v1027 = vpop.f32.mrb[0].mxu0
  %v1028 = vadd.f32 0.0, %v1027
  %v1029 = vpop.f32.mrb[0].mxu0
  %1030 = vdwg.mxu0
  %1031 = vmatprep.subr.mxu0 0.0
  %v1032 = vand.u32 %v87, 4294901760
  %v1033 = vsub.f32 %v87, %v1032
  %v1034 = vand.u32 %v1033, 4294901760
  %v1035 = vsub.f32 %v1033, %v1034
  %v1036 = vand.u32 %v1035, 4294901760
  %1037 = vmatpush1.msra.mxu0 %v1036
  %1038 = vmatprep.subr.mxu0 0.0
  %1039 = vmatpush1.msra.mxu0 0.0
  %1040 = vmatprep.subr.mxu0 0.0
  %1041 = vmatpush1.msra.mxu0 0.0
  %1042 = vmatprep.subr.mxu0 0.0
  %1043 = vmatpush1.msra.mxu0 0.0
  %1044 = vmatprep.subr.mxu0 0.0
  %1045 = vmatpush1.msra.mxu0 0.0
  %1046 = vmatprep.subr.mxu0 0.0
  %1047 = vmatpush1.msra.mxu0 0.0
  %1048 = vmatprep.subr.mxu0 0.0
  %1049 = vmatpush1.msra.mxu0 0.0
  %1050 = vmatprep.subr.mxu0 0.0
  %1051 = vmatpush1.msra.mxu0 0.0
  %1052 = vmatprep.subr.mxu0 0.0
  %1053 = vmatpush1.msra.mxu0 0.0
  %1054 = vmatprep.subr.mxu0 0.0
  %1055 = vmatpush1.msra.mxu0 0.0
  %1056 = vmatprep.subr.mxu0 0.0
  %1057 = vmatpush1.msra.mxu0 0.0
  %1058 = vmatprep.subr.mxu0 0.0
  %1059 = vmatpush1.msra.mxu0 0.0
  %1060 = vmatprep.subr.mxu0 0.0
  %1061 = vmatpush1.msra.mxu0 0.0
  %1062 = vmatprep.subr.mxu0 0.0
  %1063 = vmatpush1.msra.mxu0 0.0
  %1064 = vmatprep.subr.mxu0 0.0
  %1065 = vmatpush1.msra.mxu0 0.0
  %1066 = vmatprep.subr.mxu0 0.0
  %1067 = vmatpush1.msra.mxu0 0.0
  %1068 = vmatprep.subr.mxu0 0.0
  %1069 = vmatpush1.msra.mxu0 0.0
  %1070 = vmatprep.subr.mxu0 0.0
  %1071 = vmatpush1.msra.mxu0 0.0
  %1072 = vmatprep.subr.mxu0 0.0
  %1073 = vmatpush1.msra.mxu0 0.0
  %1074 = vmatprep.subr.mxu0 0.0
  %1075 = vmatpush1.msra.mxu0 0.0
  %1076 = vmatprep.subr.mxu0 0.0
  %1077 = vmatpush1.msra.mxu0 0.0
  %1078 = vmatprep.subr.mxu0 0.0
  %1079 = vmatpush1.msra.mxu0 0.0
  %1080 = vmatprep.subr.mxu0 0.0
  %1081 = vmatpush1.msra.mxu0 0.0
  %1082 = vmatprep.subr.mxu0 0.0
  %1083 = vmatpush1.msra.mxu0 0.0
  %1084 = vmatprep.subr.mxu0 0.0
  %1085 = vmatpush1.msra.mxu0 0.0
  %1086 = vmatprep.subr.mxu0 0.0
  %1087 = vmatpush1.msra.mxu0 0.0
  %1088 = vmatprep.subr.mxu0 0.0
  %1089 = vmatpush1.msra.mxu0 0.0
  %1090 = vmatprep.subr.mxu0 0.0
  %1091 = vmatpush1.msra.mxu0 0.0
  %1092 = vmatprep.subr.mxu0 0.0
  %1093 = vmatpush1.msra.mxu0 0.0
  %1094 = vmatprep.subr.mxu0 0.0
  %1095 = vmatpush1.msra.mxu0 0.0
  %1096 = vmatprep.subr.mxu0 0.0
  %1097 = vmatpush1.msra.mxu0 0.0
  %1098 = vmatprep.subr.mxu0 0.0
  %1099 = vmatpush1.msra.mxu0 0.0
  %1100 = vmatprep.mubr.f32.mxu0 0.0
  %v1101 = vand.u32 %v862, 4294901760
  %1102 = vmatmul.mubr.f32.gmra.mrb[0].mxu0 %v1101
  %v1103 = vpop.f32.mrb[0].mxu0
  %v1104 = vadd.f32 %v958, %v1103
  %v1105 = vpop.f32.mrb[0].mxu0
  %1106 = vmatprep.mubr.f32.mxu0 0.0
  %v1107 = vand.u32 %v865, 4294901760
  %1108 = vmatmul.mubr.f32.gmra.mrb[0].mxu0 %v1107
  %v1109 = vpop.f32.mrb[0].mxu0
  %v1110 = vadd.f32 %v968, %v1109
  %v1111 = vpop.f32.mrb[0].mxu0
  %1112 = vmatprep.mubr.f32.mxu0 0.0
  %v1113 = vand.u32 %v868, 4294901760
  %1114 = vmatmul.mubr.f32.gmra.mrb[0].mxu0 %v1113
  %v1115 = vpop.f32.mrb[0].mxu0
  %v1116 = vadd.f32 %v978, %v1115
  %v1117 = vpop.f32.mrb[0].mxu0
  %1118 = vmatprep.mubr.f32.mxu0 0.0
  %v1119 = vand.u32 %v871, 4294901760
  %1120 = vmatmul.mubr.f32.gmra.mrb[0].mxu0 %v1119
  %v1121 = vpop.f32.mrb[0].mxu0
  %v1122 = vadd.f32 %v988, %v1121
  %v1123 = vpop.f32.mrb[0].mxu0
  %1124 = vmatprep.mubr.f32.mxu0 0.0
  %v1125 = vand.u32 %v874, 4294901760
  %1126 = vmatmul.mubr.f32.gmra.mrb[0].mxu0 %v1125
  %v1127 = vpop.f32.mrb[0].mxu0
  %v1128 = vadd.f32 %v998, %v1127
  %v1129 = vpop.f32.mrb[0].mxu0
  %1130 = vmatprep.mubr.f32.mxu0 0.0
  %v1131 = vand.u32 %v877, 4294901760
  %1132 = vmatmul.mubr.f32.gmra.mrb[0].mxu0 %v1131
  %v1133 = vpop.f32.mrb[0].mxu0
  %v1134 = vadd.f32 %v1008, %v1133
  %v1135 = vpop.f32.mrb[0].mxu0
  %1136 = vmatprep.mubr.f32.mxu0 0.0
  %v1137 = vand.u32 %v880, 4294901760
  %1138 = vmatmul.mubr.f32.gmra.mrb[0].mxu0 %v1137
  %v1139 = vpop.f32.mrb[0].mxu0
  %v1140 = vadd.f32 %v1018, %v1139
  %v1141 = vpop.f32.mrb[0].mxu0
  %1142 = vmatprep.mubr.f32.mxu0 0.0
  %v1143 = vand.u32 %v883, 4294901760
  %1144 = vmatmul.mubr.f32.gmra.mrb[0].mxu0 %v1143
  %v1145 = vpop.f32.mrb[0].mxu0
  %v1146 = vadd.f32 %v1028, %v1145
  %v1147 = vpop.f32.mrb[0].mxu0
  %1148 = vdwg.mxu0
  %1149 = vmatprep.subr.mxu0 0.0
  %v1150 = vand.u32 %v87, 4294901760
  %v1151 = vsub.f32 %v87, %v1150
  %1152 = vmatpush1.msra.mxu0 %v1151
  %1153 = vmatprep.subr.mxu0 0.0
  %1154 = vmatpush1.msra.mxu0 0.0
  %1155 = vmatprep.subr.mxu0 0.0
  %1156 = vmatpush1.msra.mxu0 0.0
  %1157 = vmatprep.subr.mxu0 0.0
  %1158 = vmatpush1.msra.mxu0 0.0
  %1159 = vmatprep.subr.mxu0 0.0
  %1160 = vmatpush1.msra.mxu0 0.0
  %1161 = vmatprep.subr.mxu0 0.0
  %1162 = vmatpush1.msra.mxu0 0.0
  %1163 = vmatprep.subr.mxu0 0.0
  %1164 = vmatpush1.msra.mxu0 0.0
  %1165 = vmatprep.subr.mxu0 0.0
  %1166 = vmatpush1.msra.mxu0 0.0
  %1167 = vmatprep.subr.mxu0 0.0
  %1168 = vmatpush1.msra.mxu0 0.0
  %1169 = vmatprep.subr.mxu0 0.0
  %1170 = vmatpush1.msra.mxu0 0.0
  %1171 = vmatprep.subr.mxu0 0.0
  %1172 = vmatpush1.msra.mxu0 0.0
  %1173 = vmatprep.subr.mxu0 0.0
  %1174 = vmatpush1.msra.mxu0 0.0
  %1175 = vmatprep.subr.mxu0 0.0
  %1176 = vmatpush1.msra.mxu0 0.0
  %1177 = vmatprep.subr.mxu0 0.0
  %1178 = vmatpush1.msra.mxu0 0.0
  %1179 = vmatprep.subr.mxu0 0.0
  %1180 = vmatpush1.msra.mxu0 0.0
  %1181 = vmatprep.subr.mxu0 0.0
  %1182 = vmatpush1.msra.mxu0 0.0
  %1183 = vmatprep.subr.mxu0 0.0
  %1184 = vmatpush1.msra.mxu0 0.0
  %1185 = vmatprep.subr.mxu0 0.0
  %1186 = vmatpush1.msra.mxu0 0.0
  %1187 = vmatprep.subr.mxu0 0.0
  %1188 = vmatpush1.msra.mxu0 0.0
  %1189 = vmatprep.subr.mxu0 0.0
  %1190 = vmatpush1.msra.mxu0 0.0
  %1191 = vmatprep.subr.mxu0 0.0
  %1192 = vmatpush1.msra.mxu0 0.0
  %1193 = vmatprep.subr.mxu0 0.0
  %1194 = vmatpush1.msra.mxu0 0.0
  %1195 = vmatprep.subr.mxu0 0.0
  %1196 = vmatpush1.msra.mxu0 0.0
  %1197 = vmatprep.subr.mxu0 0.0
  %1198 = vmatpush1.msra.mxu0 0.0
  %1199 = vmatprep.subr.mxu0 0.0
  %1200 = vmatpush1.msra.mxu0 0.0
  %1201 = vmatprep.subr.mxu0 0.0
  %1202 = vmatpush1.msra.mxu0 0.0
  %1203 = vmatprep.subr.mxu0 0.0
  %1204 = vmatpush1.msra.mxu0 0.0
  %1205 = vmatprep.subr.mxu0 0.0
  %1206 = vmatpush1.msra.mxu0 0.0
  %1207 = vmatprep.subr.mxu0 0.0
  %1208 = vmatpush1.msra.mxu0 0.0
  %1209 = vmatprep.subr.mxu0 0.0
  %1210 = vmatpush1.msra.mxu0 0.0
  %1211 = vmatprep.subr.mxu0 0.0
  %1212 = vmatpush1.msra.mxu0 0.0
  %1213 = vmatprep.subr.mxu0 0.0
  %1214 = vmatpush1.msra.mxu0 0.0
  %1215 = vmatprep.mubr.f32.mxu0 0.0
  %v1216 = vand.u32 %v862, 4294901760
  %v1217 = vsub.f32 %v862, %v1216
  %1218 = vmatmul.mubr.f32.gmra.mrb[0].mxu0 %v1217
  %v1219 = vpop.f32.mrb[0].mxu0
  %v1220 = vadd.f32 %v1104, %v1219
  %v1221 = vpop.f32.mrb[0].mxu0
  %1222 = vmatprep.mubr.f32.mxu0 0.0
  %v1223 = vand.u32 %v865, 4294901760
  %v1224 = vsub.f32 %v865, %v1223
  %1225 = vmatmul.mubr.f32.gmra.mrb[0].mxu0 %v1224
  %v1226 = vpop.f32.mrb[0].mxu0
  %v1227 = vadd.f32 %v1110, %v1226
  %v1228 = vpop.f32.mrb[0].mxu0
  %1229 = vmatprep.mubr.f32.mxu0 0.0
  %v1230 = vand.u32 %v868, 4294901760
  %v1231 = vsub.f32 %v868, %v1230
  %1232 = vmatmul.mubr.f32.gmra.mrb[0].mxu0 %v1231
  %v1233 = vpop.f32.mrb[0].mxu0
  %v1234 = vadd.f32 %v1116, %v1233
  %v1235 = vpop.f32.mrb[0].mxu0
  %1236 = vmatprep.mubr.f32.mxu0 0.0
  %v1237 = vand.u32 %v871, 4294901760
  %v1238 = vsub.f32 %v871, %v1237
  %1239 = vmatmul.mubr.f32.gmra.mrb[0].mxu0 %v1238
  %v1240 = vpop.f32.mrb[0].mxu0
  %v1241 = vadd.f32 %v1122, %v1240
  %v1242 = vpop.f32.mrb[0].mxu0
  %1243 = vmatprep.mubr.f32.mxu0 0.0
  %v1244 = vand.u32 %v874, 4294901760
  %v1245 = vsub.f32 %v874, %v1244
  %1246 = vmatmul.mubr.f32.gmra.mrb[0].mxu0 %v1245
  %v1247 = vpop.f32.mrb[0].mxu0
  %v1248 = vadd.f32 %v1128, %v1247
  %v1249 = vpop.f32.mrb[0].mxu0
  %1250 = vmatprep.mubr.f32.mxu0 0.0
  %v1251 = vand.u32 %v877, 4294901760
  %v1252 = vsub.f32 %v877, %v1251
  %1253 = vmatmul.mubr.f32.gmra.mrb[0].mxu0 %v1252
  %v1254 = vpop.f32.mrb[0].mxu0
  %v1255 = vadd.f32 %v1134, %v1254
  %v1256 = vpop.f32.mrb[0].mxu0
  %1257 = vmatprep.mubr.f32.mxu0 0.0
  %v1258 = vand.u32 %v880, 4294901760
  %v1259 = vsub.f32 %v880, %v1258
  %1260 = vmatmul.mubr.f32.gmra.mrb[0].mxu0 %v1259
  %v1261 = vpop.f32.mrb[0].mxu0
  %v1262 = vadd.f32 %v1140, %v1261
  %v1263 = vpop.f32.mrb[0].mxu0
  %1264 = vmatprep.mubr.f32.mxu0 0.0
  %v1265 = vand.u32 %v883, 4294901760
  %v1266 = vsub.f32 %v883, %v1265
  %1267 = vmatmul.mubr.f32.gmra.mrb[0].mxu0 %v1266
  %v1268 = vpop.f32.mrb[0].mxu0
  %v1269 = vadd.f32 %v1146, %v1268
  %v1270 = vpop.f32.mrb[0].mxu0
  %1271 = vdwg.mxu0
  %1272 = vmatprep.subr.mxu0 0.0
  %v1273 = vand.u32 %v87, 4294901760
  %1274 = vmatpush1.msra.mxu0 %v1273
  %1275 = vmatprep.subr.mxu0 0.0
  %1276 = vmatpush1.msra.mxu0 0.0
  %1277 = vmatprep.subr.mxu0 0.0
  %1278 = vmatpush1.msra.mxu0 0.0
  %1279 = vmatprep.subr.mxu0 0.0
  %1280 = vmatpush1.msra.mxu0 0.0
  %1281 = vmatprep.subr.mxu0 0.0
  %1282 = vmatpush1.msra.mxu0 0.0
  %1283 = vmatprep.subr.mxu0 0.0
  %1284 = vmatpush1.msra.mxu0 0.0
  %1285 = vmatprep.subr.mxu0 0.0
  %1286 = vmatpush1.msra.mxu0 0.0
  %1287 = vmatprep.subr.mxu0 0.0
  %1288 = vmatpush1.msra.mxu0 0.0
  %1289 = vmatprep.subr.mxu0 0.0
  %1290 = vmatpush1.msra.mxu0 0.0
  %1291 = vmatprep.subr.mxu0 0.0
  %1292 = vmatpush1.msra.mxu0 0.0
  %1293 = vmatprep.subr.mxu0 0.0
  %1294 = vmatpush1.msra.mxu0 0.0
  %1295 = vmatprep.subr.mxu0 0.0
  %1296 = vmatpush1.msra.mxu0 0.0
  %1297 = vmatprep.subr.mxu0 0.0
  %1298 = vmatpush1.msra.mxu0 0.0
  %1299 = vmatprep.subr.mxu0 0.0
  %1300 = vmatpush1.msra.mxu0 0.0
  %1301 = vmatprep.subr.mxu0 0.0
  %1302 = vmatpush1.msra.mxu0 0.0
  %1303 = vmatprep.subr.mxu0 0.0
  %1304 = vmatpush1.msra.mxu0 0.0
  %1305 = vmatprep.subr.mxu0 0.0
  %1306 = vmatpush1.msra.mxu0 0.0
  %1307 = vmatprep.subr.mxu0 0.0
  %1308 = vmatpush1.msra.mxu0 0.0
  %1309 = vmatprep.subr.mxu0 0.0
  %1310 = vmatpush1.msra.mxu0 0.0
  %1311 = vmatprep.subr.mxu0 0.0
  %1312 = vmatpush1.msra.mxu0 0.0
  %1313 = vmatprep.subr.mxu0 0.0
  %1314 = vmatpush1.msra.mxu0 0.0
  %1315 = vmatprep.subr.mxu0 0.0
  %1316 = vmatpush1.msra.mxu0 0.0
  %1317 = vmatprep.subr.mxu0 0.0
  %1318 = vmatpush1.msra.mxu0 0.0
  %1319 = vmatprep.subr.mxu0 0.0
  %1320 = vmatpush1.msra.mxu0 0.0
  %1321 = vmatprep.subr.mxu0 0.0
  %1322 = vmatpush1.msra.mxu0 0.0
  %1323 = vmatprep.subr.mxu0 0.0
  %1324 = vmatpush1.msra.mxu0 0.0
  %1325 = vmatprep.subr.mxu0 0.0
  %1326 = vmatpush1.msra.mxu0 0.0
  %1327 = vmatprep.subr.mxu0 0.0
  %1328 = vmatpush1.msra.mxu0 0.0
  %1329 = vmatprep.subr.mxu0 0.0
  %1330 = vmatpush1.msra.mxu0 0.0
  %1331 = vmatprep.subr.mxu0 0.0
  %1332 = vmatpush1.msra.mxu0 0.0
  %1333 = vmatprep.subr.mxu0 0.0
  %1334 = vmatpush1.msra.mxu0 0.0
  %1335 = vmatprep.subr.mxu0 0.0
  %1336 = vmatpush1.msra.mxu0 0.0
  %1337 = vmatprep.mubr.f32.mxu0 0.0
  %v1338 = vand.u32 %v862, 4294901760
  %v1339 = vsub.f32 %v862, %v1338
  %v1340 = vand.u32 %v1339, 4294901760
  %1341 = vmatmul.mubr.f32.gmra.mrb[0].mxu0 %v1340
  %v1342 = vpop.f32.mrb[0].mxu0
  %v1343 = vadd.f32 %v1220, %v1342
  %v1344 = vpop.f32.mrb[0].mxu0
  %1345 = vmatprep.mubr.f32.mxu0 0.0
  %v1346 = vand.u32 %v865, 4294901760
  %v1347 = vsub.f32 %v865, %v1346
  %v1348 = vand.u32 %v1347, 4294901760
  %1349 = vmatmul.mubr.f32.gmra.mrb[0].mxu0 %v1348
  %v1350 = vpop.f32.mrb[0].mxu0
  %v1351 = vadd.f32 %v1227, %v1350
  %v1352 = vpop.f32.mrb[0].mxu0
  %1353 = vmatprep.mubr.f32.mxu0 0.0
  %v1354 = vand.u32 %v868, 4294901760
  %v1355 = vsub.f32 %v868, %v1354
  %v1356 = vand.u32 %v1355, 4294901760
  %1357 = vmatmul.mubr.f32.gmra.mrb[0].mxu0 %v1356
  %v1358 = vpop.f32.mrb[0].mxu0
  %v1359 = vadd.f32 %v1234, %v1358
  %v1360 = vpop.f32.mrb[0].mxu0
  %1361 = vmatprep.mubr.f32.mxu0 0.0
  %v1362 = vand.u32 %v871, 4294901760
  %v1363 = vsub.f32 %v871, %v1362
  %v1364 = vand.u32 %v1363, 4294901760
  %1365 = vmatmul.mubr.f32.gmra.mrb[0].mxu0 %v1364
  %v1366 = vpop.f32.mrb[0].mxu0
  %v1367 = vadd.f32 %v1241, %v1366
  %v1368 = vpop.f32.mrb[0].mxu0
  %1369 = vmatprep.mubr.f32.mxu0 0.0
  %v1370 = vand.u32 %v874, 4294901760
  %v1371 = vsub.f32 %v874, %v1370
  %v1372 = vand.u32 %v1371, 4294901760
  %1373 = vmatmul.mubr.f32.gmra.mrb[0].mxu0 %v1372
  %v1374 = vpop.f32.mrb[0].mxu0
  %v1375 = vadd.f32 %v1248, %v1374
  %v1376 = vpop.f32.mrb[0].mxu0
  %1377 = vmatprep.mubr.f32.mxu0 0.0
  %v1378 = vand.u32 %v877, 4294901760
  %v1379 = vsub.f32 %v877, %v1378
  %v1380 = vand.u32 %v1379, 4294901760
  %1381 = vmatmul.mubr.f32.gmra.mrb[0].mxu0 %v1380
  %v1382 = vpop.f32.mrb[0].mxu0
  %v1383 = vadd.f32 %v1255, %v1382
  %v1384 = vpop.f32.mrb[0].mxu0
  %1385 = vmatprep.mubr.f32.mxu0 0.0
  %v1386 = vand.u32 %v880, 4294901760
  %v1387 = vsub.f32 %v880, %v1386
  %v1388 = vand.u32 %v1387, 4294901760
  %1389 = vmatmul.mubr.f32.gmra.mrb[0].mxu0 %v1388
  %v1390 = vpop.f32.mrb[0].mxu0
  %v1391 = vadd.f32 %v1262, %v1390
  %v1392 = vpop.f32.mrb[0].mxu0
  %1393 = vmatprep.mubr.f32.mxu0 0.0
  %v1394 = vand.u32 %v883, 4294901760
  %v1395 = vsub.f32 %v883, %v1394
  %v1396 = vand.u32 %v1395, 4294901760
  %1397 = vmatmul.mubr.f32.gmra.mrb[0].mxu0 %v1396
  %v1398 = vpop.f32.mrb[0].mxu0
  %v1399 = vadd.f32 %v1269, %v1398
  %v1400 = vpop.f32.mrb[0].mxu0
  %1401 = vdwg.mxu0
  %1402 = vmatprep.subr.mxu0 0.0
  %v1403 = vand.u32 %v87, 4294901760
  %v1404 = vsub.f32 %v87, %v1403
  %v1405 = vand.u32 %v1404, 4294901760
  %1406 = vmatpush1.msra.mxu0 %v1405
  %1407 = vmatprep.subr.mxu0 0.0
  %1408 = vmatpush1.msra.mxu0 0.0
  %1409 = vmatprep.subr.mxu0 0.0
  %1410 = vmatpush1.msra.mxu0 0.0
  %1411 = vmatprep.subr.mxu0 0.0
  %1412 = vmatpush1.msra.mxu0 0.0
  %1413 = vmatprep.subr.mxu0 0.0
  %1414 = vmatpush1.msra.mxu0 0.0
  %1415 = vmatprep.subr.mxu0 0.0
  %1416 = vmatpush1.msra.mxu0 0.0
  %1417 = vmatprep.subr.mxu0 0.0
  %1418 = vmatpush1.msra.mxu0 0.0
  %1419 = vmatprep.subr.mxu0 0.0
  %1420 = vmatpush1.msra.mxu0 0.0
  %1421 = vmatprep.subr.mxu0 0.0
  %1422 = vmatpush1.msra.mxu0 0.0
  %1423 = vmatprep.subr.mxu0 0.0
  %1424 = vmatpush1.msra.mxu0 0.0
  %1425 = vmatprep.subr.mxu0 0.0
  %1426 = vmatpush1.msra.mxu0 0.0
  %1427 = vmatprep.subr.mxu0 0.0
  %1428 = vmatpush1.msra.mxu0 0.0
  %1429 = vmatprep.subr.mxu0 0.0
  %1430 = vmatpush1.msra.mxu0 0.0
  %1431 = vmatprep.subr.mxu0 0.0
  %1432 = vmatpush1.msra.mxu0 0.0
  %1433 = vmatprep.subr.mxu0 0.0
  %1434 = vmatpush1.msra.mxu0 0.0
  %1435 = vmatprep.subr.mxu0 0.0
  %1436 = vmatpush1.msra.mxu0 0.0
  %1437 = vmatprep.subr.mxu0 0.0
  %1438 = vmatpush1.msra.mxu0 0.0
  %1439 = vmatprep.subr.mxu0 0.0
  %1440 = vmatpush1.msra.mxu0 0.0
  %1441 = vmatprep.subr.mxu0 0.0
  %1442 = vmatpush1.msra.mxu0 0.0
  %1443 = vmatprep.subr.mxu0 0.0
  %1444 = vmatpush1.msra.mxu0 0.0
  %1445 = vmatprep.subr.mxu0 0.0
  %1446 = vmatpush1.msra.mxu0 0.0
  %1447 = vmatprep.subr.mxu0 0.0
  %1448 = vmatpush1.msra.mxu0 0.0
  %1449 = vmatprep.subr.mxu0 0.0
  %1450 = vmatpush1.msra.mxu0 0.0
  %1451 = vmatprep.subr.mxu0 0.0
  %1452 = vmatpush1.msra.mxu0 0.0
  %1453 = vmatprep.subr.mxu0 0.0
  %1454 = vmatpush1.msra.mxu0 0.0
  %1455 = vmatprep.subr.mxu0 0.0
  %1456 = vmatpush1.msra.mxu0 0.0
  %1457 = vmatprep.subr.mxu0 0.0
  %1458 = vmatpush1.msra.mxu0 0.0
  %1459 = vmatprep.subr.mxu0 0.0
  %1460 = vmatpush1.msra.mxu0 0.0
  %1461 = vmatprep.subr.mxu0 0.0
  %1462 = vmatpush1.msra.mxu0 0.0
  %1463 = vmatprep.subr.mxu0 0.0
  %1464 = vmatpush1.msra.mxu0 0.0
  %1465 = vmatprep.subr.mxu0 0.0
  %1466 = vmatpush1.msra.mxu0 0.0
  %1467 = vmatprep.subr.mxu0 0.0
  %1468 = vmatpush1.msra.mxu0 0.0
  %1469 = vmatprep.mubr.f32.mxu0 0.0
  %v1470 = vand.u32 %v862, 4294901760
  %1471 = vmatmul.mubr.f32.gmra.mrb[0].mxu0 %v1470
  %v1472 = vpop.f32.mrb[0].mxu0
  %v1473 = vadd.f32 %v1343, %v1472
  %v1474 = vpop.f32.mrb[0].mxu0
  %1475 = vmatprep.mubr.f32.mxu0 0.0
  %v1476 = vand.u32 %v865, 4294901760
  %1477 = vmatmul.mubr.f32.gmra.mrb[0].mxu0 %v1476
  %v1478 = vpop.f32.mrb[0].mxu0
  %v1479 = vadd.f32 %v1351, %v1478
  %v1480 = vpop.f32.mrb[0].mxu0
  %1481 = vmatprep.mubr.f32.mxu0 0.0
  %v1482 = vand.u32 %v868, 4294901760
  %1483 = vmatmul.mubr.f32.gmra.mrb[0].mxu0 %v1482
  %v1484 = vpop.f32.mrb[0].mxu0
  %v1485 = vadd.f32 %v1359, %v1484
  %v1486 = vpop.f32.mrb[0].mxu0
  %1487 = vmatprep.mubr.f32.mxu0 0.0
  %v1488 = vand.u32 %v871, 4294901760
  %1489 = vmatmul.mubr.f32.gmra.mrb[0].mxu0 %v1488
  %v1490 = vpop.f32.mrb[0].mxu0
  %v1491 = vadd.f32 %v1367, %v1490
  %v1492 = vpop.f32.mrb[0].mxu0
  %1493 = vmatprep.mubr.f32.mxu0 0.0
  %v1494 = vand.u32 %v874, 4294901760
  %1495 = vmatmul.mubr.f32.gmra.mrb[0].mxu0 %v1494
  %v1496 = vpop.f32.mrb[0].mxu0
  %v1497 = vadd.f32 %v1375, %v1496
  %v1498 = vpop.f32.mrb[0].mxu0
  %1499 = vmatprep.mubr.f32.mxu0 0.0
  %v1500 = vand.u32 %v877, 4294901760
  %1501 = vmatmul.mubr.f32.gmra.mrb[0].mxu0 %v1500
  %v1502 = vpop.f32.mrb[0].mxu0
  %v1503 = vadd.f32 %v1383, %v1502
  %v1504 = vpop.f32.mrb[0].mxu0
  %1505 = vmatprep.mubr.f32.mxu0 0.0
  %v1506 = vand.u32 %v880, 4294901760
  %1507 = vmatmul.mubr.f32.gmra.mrb[0].mxu0 %v1506
  %v1508 = vpop.f32.mrb[0].mxu0
  %v1509 = vadd.f32 %v1391, %v1508
  %v1510 = vpop.f32.mrb[0].mxu0
  %1511 = vmatprep.mubr.f32.mxu0 0.0
  %v1512 = vand.u32 %v883, 4294901760
  %1513 = vmatmul.mubr.f32.gmra.mrb[0].mxu0 %v1512
  %v1514 = vpop.f32.mrb[0].mxu0
  %v1515 = vadd.f32 %v1399, %v1514
  %v1516 = vpop.f32.mrb[0].mxu0
  %1517 = vdwg.mxu0
  %1518 = vmatprep.subr.mxu0 0.0
  %v1519 = vand.u32 %v87, 4294901760
  %1520 = vmatpush1.msra.mxu0 %v1519
  %1521 = vmatprep.subr.mxu0 0.0
  %1522 = vmatpush1.msra.mxu0 0.0
  %1523 = vmatprep.subr.mxu0 0.0
  %1524 = vmatpush1.msra.mxu0 0.0
  %1525 = vmatprep.subr.mxu0 0.0
  %1526 = vmatpush1.msra.mxu0 0.0
  %1527 = vmatprep.subr.mxu0 0.0
  %1528 = vmatpush1.msra.mxu0 0.0
  %1529 = vmatprep.subr.mxu0 0.0
  %1530 = vmatpush1.msra.mxu0 0.0
  %1531 = vmatprep.subr.mxu0 0.0
  %1532 = vmatpush1.msra.mxu0 0.0
  %1533 = vmatprep.subr.mxu0 0.0
  %1534 = vmatpush1.msra.mxu0 0.0
  %1535 = vmatprep.subr.mxu0 0.0
  %1536 = vmatpush1.msra.mxu0 0.0
  %1537 = vmatprep.subr.mxu0 0.0
  %1538 = vmatpush1.msra.mxu0 0.0
  %1539 = vmatprep.subr.mxu0 0.0
  %1540 = vmatpush1.msra.mxu0 0.0
  %1541 = vmatprep.subr.mxu0 0.0
  %1542 = vmatpush1.msra.mxu0 0.0
  %1543 = vmatprep.subr.mxu0 0.0
  %1544 = vmatpush1.msra.mxu0 0.0
  %1545 = vmatprep.subr.mxu0 0.0
  %1546 = vmatpush1.msra.mxu0 0.0
  %1547 = vmatprep.subr.mxu0 0.0
  %1548 = vmatpush1.msra.mxu0 0.0
  %1549 = vmatprep.subr.mxu0 0.0
  %1550 = vmatpush1.msra.mxu0 0.0
  %1551 = vmatprep.subr.mxu0 0.0
  %1552 = vmatpush1.msra.mxu0 0.0
  %1553 = vmatprep.subr.mxu0 0.0
  %1554 = vmatpush1.msra.mxu0 0.0
  %1555 = vmatprep.subr.mxu0 0.0
  %1556 = vmatpush1.msra.mxu0 0.0
  %1557 = vmatprep.subr.mxu0 0.0
  %1558 = vmatpush1.msra.mxu0 0.0
  %1559 = vmatprep.subr.mxu0 0.0
  %1560 = vmatpush1.msra.mxu0 0.0
  %1561 = vmatprep.subr.mxu0 0.0
  %1562 = vmatpush1.msra.mxu0 0.0
  %1563 = vmatprep.subr.mxu0 0.0
  %1564 = vmatpush1.msra.mxu0 0.0
  %1565 = vmatprep.subr.mxu0 0.0
  %1566 = vmatpush1.msra.mxu0 0.0
  %1567 = vmatprep.subr.mxu0 0.0
  %1568 = vmatpush1.msra.mxu0 0.0
  %1569 = vmatprep.subr.mxu0 0.0
  %1570 = vmatpush1.msra.mxu0 0.0
  %1571 = vmatprep.subr.mxu0 0.0
  %1572 = vmatpush1.msra.mxu0 0.0
  %1573 = vmatprep.subr.mxu0 0.0
  %1574 = vmatpush1.msra.mxu0 0.0
  %1575 = vmatprep.subr.mxu0 0.0
  %1576 = vmatpush1.msra.mxu0 0.0
  %1577 = vmatprep.subr.mxu0 0.0
  %1578 = vmatpush1.msra.mxu0 0.0
  %1579 = vmatprep.subr.mxu0 0.0
  %1580 = vmatpush1.msra.mxu0 0.0
  %1581 = vmatprep.subr.mxu0 0.0
  %1582 = vmatpush1.msra.mxu0 0.0
  %1583 = vmatprep.mubr.f32.mxu0 0.0
  %v1584 = vand.u32 %v862, 4294901760
  %1585 = vmatmul.mubr.f32.gmra.mrb[0].mxu0 %v1584
  %v1586 = vpop.f32.mrb[0].mxu0
  %v1587 = vadd.f32 %v1473, %v1586
  %v1588 = vpop.f32.mrb[0].mxu0
  %1589 = vmatprep.mubr.f32.mxu0 0.0
  %v1590 = vand.u32 %v865, 4294901760
  %1591 = vmatmul.mubr.f32.gmra.mrb[0].mxu0 %v1590
  %v1592 = vpop.f32.mrb[0].mxu0
  %v1593 = vadd.f32 %v1479, %v1592
  %v1594 = vpop.f32.mrb[0].mxu0
  %1595 = vmatprep.mubr.f32.mxu0 0.0
  %v1596 = vand.u32 %v868, 4294901760
  %1597 = vmatmul.mubr.f32.gmra.mrb[0].mxu0 %v1596
  %v1598 = vpop.f32.mrb[0].mxu0
  %v1599 = vadd.f32 %v1485, %v1598
  %v1600 = vpop.f32.mrb[0].mxu0
  %1601 = vmatprep.mubr.f32.mxu0 0.0
  %v1602 = vand.u32 %v871, 4294901760
  %1603 = vmatmul.mubr.f32.gmra.mrb[0].mxu0 %v1602
  %v1604 = vpop.f32.mrb[0].mxu0
  %v1605 = vadd.f32 %v1491, %v1604
  %v1606 = vpop.f32.mrb[0].mxu0
  %1607 = vmatprep.mubr.f32.mxu0 0.0
  %v1608 = vand.u32 %v874, 4294901760
  %1609 = vmatmul.mubr.f32.gmra.mrb[0].mxu0 %v1608
  %v1610 = vpop.f32.mrb[0].mxu0
  %v1611 = vadd.f32 %v1497, %v1610
  %v1612 = vpop.f32.mrb[0].mxu0
  %1613 = vmatprep.mubr.f32.mxu0 0.0
  %v1614 = vand.u32 %v877, 4294901760
  %1615 = vmatmul.mubr.f32.gmra.mrb[0].mxu0 %v1614
  %v1616 = vpop.f32.mrb[0].mxu0
  %v1617 = vadd.f32 %v1503, %v1616
  %v1618 = vpop.f32.mrb[0].mxu0
  %1619 = vmatprep.mubr.f32.mxu0 0.0
  %v1620 = vand.u32 %v880, 4294901760
  %1621 = vmatmul.mubr.f32.gmra.mrb[0].mxu0 %v1620
  %v1622 = vpop.f32.mrb[0].mxu0
  %v1623 = vadd.f32 %v1509, %v1622
  %v1624 = vpop.f32.mrb[0].mxu0
  %1625 = vmatprep.mubr.f32.mxu0 0.0
  %v1626 = vand.u32 %v883, 4294901760
  %1627 = vmatmul.mubr.f32.gmra.mrb[0].mxu0 %v1626
  %v1628 = vpop.f32.mrb[0].mxu0
  %v1629 = vadd.f32 %v1515, %v1628
  %v1630 = vpop.f32.mrb[0].mxu0
  %1631 = vdwg.mxu0
  %v1633 = vsel %vm89, %v79, 0
  %v1636 = vsel %vm89, %v80, 0
  %v1639 = vsel %vm89, %v81, 0
  %v1642 = vsel %vm89, %v82, 0
  %v1645 = vsel %vm89, %v83, 0
  %v1648 = vsel %vm89, %v84, 0
  %v1651 = vsel %vm89, %v85, 0
  %v1654 = vsel %vm89, %v86, 0
  %1656 = vmatprep.subr.mxu0 0.0
  %v1657 = vand.u32 %v88, 4294901760
  %1658 = vmatpush1.msra.mxu0 %v1657
  %1659 = vmatprep.subr.mxu0 0.0
  %1660 = vmatpush1.msra.mxu0 0.0
  %1661 = vmatprep.subr.mxu0 0.0
  %1662 = vmatpush1.msra.mxu0 0.0
  %1663 = vmatprep.subr.mxu0 0.0
  %1664 = vmatpush1.msra.mxu0 0.0
  %1665 = vmatprep.subr.mxu0 0.0
  %1666 = vmatpush1.msra.mxu0 0.0
  %1667 = vmatprep.subr.mxu0 0.0
  %1668 = vmatpush1.msra.mxu0 0.0
  %1669 = vmatprep.subr.mxu0 0.0
  %1670 = vmatpush1.msra.mxu0 0.0
  %1671 = vmatprep.subr.mxu0 0.0
  %1672 = vmatpush1.msra.mxu0 0.0
  %1673 = vmatprep.subr.mxu0 0.0
  %1674 = vmatpush1.msra.mxu0 0.0
  %1675 = vmatprep.subr.mxu0 0.0
  %1676 = vmatpush1.msra.mxu0 0.0
  %1677 = vmatprep.subr.mxu0 0.0
  %1678 = vmatpush1.msra.mxu0 0.0
  %1679 = vmatprep.subr.mxu0 0.0
  %1680 = vmatpush1.msra.mxu0 0.0
  %1681 = vmatprep.subr.mxu0 0.0
  %1682 = vmatpush1.msra.mxu0 0.0
  %1683 = vmatprep.subr.mxu0 0.0
  %1684 = vmatpush1.msra.mxu0 0.0
  %1685 = vmatprep.subr.mxu0 0.0
  %1686 = vmatpush1.msra.mxu0 0.0
  %1687 = vmatprep.subr.mxu0 0.0
  %1688 = vmatpush1.msra.mxu0 0.0
  %1689 = vmatprep.subr.mxu0 0.0
  %1690 = vmatpush1.msra.mxu0 0.0
  %1691 = vmatprep.subr.mxu0 0.0
  %1692 = vmatpush1.msra.mxu0 0.0
  %1693 = vmatprep.subr.mxu0 0.0
  %1694 = vmatpush1.msra.mxu0 0.0
  %1695 = vmatprep.subr.mxu0 0.0
  %1696 = vmatpush1.msra.mxu0 0.0
  %1697 = vmatprep.subr.mxu0 0.0
  %1698 = vmatpush1.msra.mxu0 0.0
  %1699 = vmatprep.subr.mxu0 0.0
  %1700 = vmatpush1.msra.mxu0 0.0
  %1701 = vmatprep.subr.mxu0 0.0
  %1702 = vmatpush1.msra.mxu0 0.0
  %1703 = vmatprep.subr.mxu0 0.0
  %1704 = vmatpush1.msra.mxu0 0.0
  %1705 = vmatprep.subr.mxu0 0.0
  %1706 = vmatpush1.msra.mxu0 0.0
  %1707 = vmatprep.subr.mxu0 0.0
  %1708 = vmatpush1.msra.mxu0 0.0
  %1709 = vmatprep.subr.mxu0 0.0
  %1710 = vmatpush1.msra.mxu0 0.0
  %1711 = vmatprep.subr.mxu0 0.0
  %1712 = vmatpush1.msra.mxu0 0.0
  %1713 = vmatprep.subr.mxu0 0.0
  %1714 = vmatpush1.msra.mxu0 0.0
  %1715 = vmatprep.subr.mxu0 0.0
  %1716 = vmatpush1.msra.mxu0 0.0
  %1717 = vmatprep.subr.mxu0 0.0
  %1718 = vmatpush1.msra.mxu0 0.0
  %1719 = vmatprep.subr.mxu0 0.0
  %1720 = vmatpush1.msra.mxu0 0.0
  %1721 = vmatprep.mubr.f32.mxu0 0.0
  %v1722 = vand.u32 %v1633, 4294901760
  %v1723 = vsub.f32 %v1633, %v1722
  %v1724 = vand.u32 %v1723, 4294901760
  %v1725 = vsub.f32 %v1723, %v1724
  %v1726 = vand.u32 %v1725, 4294901760
  %1727 = vmatmul.mubr.f32.gmra.mrb[0].mxu0 %v1726
  %v1728 = vpop.f32.mrb[0].mxu0
  %v1729 = vadd.f32 0.0, %v1728
  %v1730 = vpop.f32.mrb[0].mxu0
  %1731 = vmatprep.mubr.f32.mxu0 0.0
  %v1732 = vand.u32 %v1636, 4294901760
  %v1733 = vsub.f32 %v1636, %v1732
  %v1734 = vand.u32 %v1733, 4294901760
  %v1735 = vsub.f32 %v1733, %v1734
  %v1736 = vand.u32 %v1735, 4294901760
  %1737 = vmatmul.mubr.f32.gmra.mrb[0].mxu0 %v1736
  %v1738 = vpop.f32.mrb[0].mxu0
  %v1739 = vadd.f32 0.0, %v1738
  %v1740 = vpop.f32.mrb[0].mxu0
  %1741 = vmatprep.mubr.f32.mxu0 0.0
  %v1742 = vand.u32 %v1639, 4294901760
  %v1743 = vsub.f32 %v1639, %v1742
  %v1744 = vand.u32 %v1743, 4294901760
  %v1745 = vsub.f32 %v1743, %v1744
  %v1746 = vand.u32 %v1745, 4294901760
  %1747 = vmatmul.mubr.f32.gmra.mrb[0].mxu0 %v1746
  %v1748 = vpop.f32.mrb[0].mxu0
  %v1749 = vadd.f32 0.0, %v1748
  %v1750 = vpop.f32.mrb[0].mxu0
  %1751 = vmatprep.mubr.f32.mxu0 0.0
  %v1752 = vand.u32 %v1642, 4294901760
  %v1753 = vsub.f32 %v1642, %v1752
  %v1754 = vand.u32 %v1753, 4294901760
  %v1755 = vsub.f32 %v1753, %v1754
  %v1756 = vand.u32 %v1755, 4294901760
  %1757 = vmatmul.mubr.f32.gmra.mrb[0].mxu0 %v1756
  %v1758 = vpop.f32.mrb[0].mxu0
  %v1759 = vadd.f32 0.0, %v1758
  %v1760 = vpop.f32.mrb[0].mxu0
  %1761 = vmatprep.mubr.f32.mxu0 0.0
  %v1762 = vand.u32 %v1645, 4294901760
  %v1763 = vsub.f32 %v1645, %v1762
  %v1764 = vand.u32 %v1763, 4294901760
  %v1765 = vsub.f32 %v1763, %v1764
  %v1766 = vand.u32 %v1765, 4294901760
  %1767 = vmatmul.mubr.f32.gmra.mrb[0].mxu0 %v1766
  %v1768 = vpop.f32.mrb[0].mxu0
  %v1769 = vadd.f32 0.0, %v1768
  %v1770 = vpop.f32.mrb[0].mxu0
  %1771 = vmatprep.mubr.f32.mxu0 0.0
  %v1772 = vand.u32 %v1648, 4294901760
  %v1773 = vsub.f32 %v1648, %v1772
  %v1774 = vand.u32 %v1773, 4294901760
  %v1775 = vsub.f32 %v1773, %v1774
  %v1776 = vand.u32 %v1775, 4294901760
  %1777 = vmatmul.mubr.f32.gmra.mrb[0].mxu0 %v1776
  %v1778 = vpop.f32.mrb[0].mxu0
  %v1779 = vadd.f32 0.0, %v1778
  %v1780 = vpop.f32.mrb[0].mxu0
  %1781 = vmatprep.mubr.f32.mxu0 0.0
  %v1782 = vand.u32 %v1651, 4294901760
  %v1783 = vsub.f32 %v1651, %v1782
  %v1784 = vand.u32 %v1783, 4294901760
  %v1785 = vsub.f32 %v1783, %v1784
  %v1786 = vand.u32 %v1785, 4294901760
  %1787 = vmatmul.mubr.f32.gmra.mrb[0].mxu0 %v1786
  %v1788 = vpop.f32.mrb[0].mxu0
  %v1789 = vadd.f32 0.0, %v1788
  %v1790 = vpop.f32.mrb[0].mxu0
  %1791 = vmatprep.mubr.f32.mxu0 0.0
  %v1792 = vand.u32 %v1654, 4294901760
  %v1793 = vsub.f32 %v1654, %v1792
  %v1794 = vand.u32 %v1793, 4294901760
  %v1795 = vsub.f32 %v1793, %v1794
  %v1796 = vand.u32 %v1795, 4294901760
  %1797 = vmatmul.mubr.f32.gmra.mrb[0].mxu0 %v1796
  %v1798 = vpop.f32.mrb[0].mxu0
  %v1799 = vadd.f32 0.0, %v1798
  %v1800 = vpop.f32.mrb[0].mxu0
  %1801 = vdwg.mxu0
  %1802 = vmatprep.subr.mxu0 0.0
  %v1803 = vand.u32 %v88, 4294901760
  %v1804 = vsub.f32 %v88, %v1803
  %v1805 = vand.u32 %v1804, 4294901760
  %v1806 = vsub.f32 %v1804, %v1805
  %v1807 = vand.u32 %v1806, 4294901760
  %1808 = vmatpush1.msra.mxu0 %v1807
  %1809 = vmatprep.subr.mxu0 0.0
  %1810 = vmatpush1.msra.mxu0 0.0
  %1811 = vmatprep.subr.mxu0 0.0
  %1812 = vmatpush1.msra.mxu0 0.0
  %1813 = vmatprep.subr.mxu0 0.0
  %1814 = vmatpush1.msra.mxu0 0.0
  %1815 = vmatprep.subr.mxu0 0.0
  %1816 = vmatpush1.msra.mxu0 0.0
  %1817 = vmatprep.subr.mxu0 0.0
  %1818 = vmatpush1.msra.mxu0 0.0
  %1819 = vmatprep.subr.mxu0 0.0
  %1820 = vmatpush1.msra.mxu0 0.0
  %1821 = vmatprep.subr.mxu0 0.0
  %1822 = vmatpush1.msra.mxu0 0.0
  %1823 = vmatprep.subr.mxu0 0.0
  %1824 = vmatpush1.msra.mxu0 0.0
  %1825 = vmatprep.subr.mxu0 0.0
  %1826 = vmatpush1.msra.mxu0 0.0
  %1827 = vmatprep.subr.mxu0 0.0
  %1828 = vmatpush1.msra.mxu0 0.0
  %1829 = vmatprep.subr.mxu0 0.0
  %1830 = vmatpush1.msra.mxu0 0.0
  %1831 = vmatprep.subr.mxu0 0.0
  %1832 = vmatpush1.msra.mxu0 0.0
  %1833 = vmatprep.subr.mxu0 0.0
  %1834 = vmatpush1.msra.mxu0 0.0
  %1835 = vmatprep.subr.mxu0 0.0
  %1836 = vmatpush1.msra.mxu0 0.0
  %1837 = vmatprep.subr.mxu0 0.0
  %1838 = vmatpush1.msra.mxu0 0.0
  %1839 = vmatprep.subr.mxu0 0.0
  %1840 = vmatpush1.msra.mxu0 0.0
  %1841 = vmatprep.subr.mxu0 0.0
  %1842 = vmatpush1.msra.mxu0 0.0
  %1843 = vmatprep.subr.mxu0 0.0
  %1844 = vmatpush1.msra.mxu0 0.0
  %1845 = vmatprep.subr.mxu0 0.0
  %1846 = vmatpush1.msra.mxu0 0.0
  %1847 = vmatprep.subr.mxu0 0.0
  %1848 = vmatpush1.msra.mxu0 0.0
  %1849 = vmatprep.subr.mxu0 0.0
  %1850 = vmatpush1.msra.mxu0 0.0
  %1851 = vmatprep.subr.mxu0 0.0
  %1852 = vmatpush1.msra.mxu0 0.0
  %1853 = vmatprep.subr.mxu0 0.0
  %1854 = vmatpush1.msra.mxu0 0.0
  %1855 = vmatprep.subr.mxu0 0.0
  %1856 = vmatpush1.msra.mxu0 0.0
  %1857 = vmatprep.subr.mxu0 0.0
  %1858 = vmatpush1.msra.mxu0 0.0
  %1859 = vmatprep.subr.mxu0 0.0
  %1860 = vmatpush1.msra.mxu0 0.0
  %1861 = vmatprep.subr.mxu0 0.0
  %1862 = vmatpush1.msra.mxu0 0.0
  %1863 = vmatprep.subr.mxu0 0.0
  %1864 = vmatpush1.msra.mxu0 0.0
  %1865 = vmatprep.subr.mxu0 0.0
  %1866 = vmatpush1.msra.mxu0 0.0
  %1867 = vmatprep.subr.mxu0 0.0
  %1868 = vmatpush1.msra.mxu0 0.0
  %1869 = vmatprep.subr.mxu0 0.0
  %1870 = vmatpush1.msra.mxu0 0.0
  %1871 = vmatprep.mubr.f32.mxu0 0.0
  %v1872 = vand.u32 %v1633, 4294901760
  %1873 = vmatmul.mubr.f32.gmra.mrb[0].mxu0 %v1872
  %v1874 = vpop.f32.mrb[0].mxu0
  %v1875 = vadd.f32 %v1729, %v1874
  %v1876 = vpop.f32.mrb[0].mxu0
  %1877 = vmatprep.mubr.f32.mxu0 0.0
  %v1878 = vand.u32 %v1636, 4294901760
  %1879 = vmatmul.mubr.f32.gmra.mrb[0].mxu0 %v1878
  %v1880 = vpop.f32.mrb[0].mxu0
  %v1881 = vadd.f32 %v1739, %v1880
  %v1882 = vpop.f32.mrb[0].mxu0
  %1883 = vmatprep.mubr.f32.mxu0 0.0
  %v1884 = vand.u32 %v1639, 4294901760
  %1885 = vmatmul.mubr.f32.gmra.mrb[0].mxu0 %v1884
  %v1886 = vpop.f32.mrb[0].mxu0
  %v1887 = vadd.f32 %v1749, %v1886
  %v1888 = vpop.f32.mrb[0].mxu0
  %1889 = vmatprep.mubr.f32.mxu0 0.0
  %v1890 = vand.u32 %v1642, 4294901760
  %1891 = vmatmul.mubr.f32.gmra.mrb[0].mxu0 %v1890
  %v1892 = vpop.f32.mrb[0].mxu0
  %v1893 = vadd.f32 %v1759, %v1892
  %v1894 = vpop.f32.mrb[0].mxu0
  %1895 = vmatprep.mubr.f32.mxu0 0.0
  %v1896 = vand.u32 %v1645, 4294901760
  %1897 = vmatmul.mubr.f32.gmra.mrb[0].mxu0 %v1896
  %v1898 = vpop.f32.mrb[0].mxu0
  %v1899 = vadd.f32 %v1769, %v1898
  %v1900 = vpop.f32.mrb[0].mxu0
  %1901 = vmatprep.mubr.f32.mxu0 0.0
  %v1902 = vand.u32 %v1648, 4294901760
  %1903 = vmatmul.mubr.f32.gmra.mrb[0].mxu0 %v1902
  %v1904 = vpop.f32.mrb[0].mxu0
  %v1905 = vadd.f32 %v1779, %v1904
  %v1906 = vpop.f32.mrb[0].mxu0
  %1907 = vmatprep.mubr.f32.mxu0 0.0
  %v1908 = vand.u32 %v1651, 4294901760
  %1909 = vmatmul.mubr.f32.gmra.mrb[0].mxu0 %v1908
  %v1910 = vpop.f32.mrb[0].mxu0
  %v1911 = vadd.f32 %v1789, %v1910
  %v1912 = vpop.f32.mrb[0].mxu0
  %1913 = vmatprep.mubr.f32.mxu0 0.0
  %v1914 = vand.u32 %v1654, 4294901760
  %1915 = vmatmul.mubr.f32.gmra.mrb[0].mxu0 %v1914
  %v1916 = vpop.f32.mrb[0].mxu0
  %v1917 = vadd.f32 %v1799, %v1916
  %v1918 = vpop.f32.mrb[0].mxu0
  %1919 = vdwg.mxu0
  %1920 = vmatprep.subr.mxu0 0.0
  %v1921 = vand.u32 %v88, 4294901760
  %v1922 = vsub.f32 %v88, %v1921
  %1923 = vmatpush1.msra.mxu0 %v1922
  %1924 = vmatprep.subr.mxu0 0.0
  %1925 = vmatpush1.msra.mxu0 0.0
  %1926 = vmatprep.subr.mxu0 0.0
  %1927 = vmatpush1.msra.mxu0 0.0
  %1928 = vmatprep.subr.mxu0 0.0
  %1929 = vmatpush1.msra.mxu0 0.0
  %1930 = vmatprep.subr.mxu0 0.0
  %1931 = vmatpush1.msra.mxu0 0.0
  %1932 = vmatprep.subr.mxu0 0.0
  %1933 = vmatpush1.msra.mxu0 0.0
  %1934 = vmatprep.subr.mxu0 0.0
  %1935 = vmatpush1.msra.mxu0 0.0
  %1936 = vmatprep.subr.mxu0 0.0
  %1937 = vmatpush1.msra.mxu0 0.0
  %1938 = vmatprep.subr.mxu0 0.0
  %1939 = vmatpush1.msra.mxu0 0.0
  %1940 = vmatprep.subr.mxu0 0.0
  %1941 = vmatpush1.msra.mxu0 0.0
  %1942 = vmatprep.subr.mxu0 0.0
  %1943 = vmatpush1.msra.mxu0 0.0
  %1944 = vmatprep.subr.mxu0 0.0
  %1945 = vmatpush1.msra.mxu0 0.0
  %1946 = vmatprep.subr.mxu0 0.0
  %1947 = vmatpush1.msra.mxu0 0.0
  %1948 = vmatprep.subr.mxu0 0.0
  %1949 = vmatpush1.msra.mxu0 0.0
  %1950 = vmatprep.subr.mxu0 0.0
  %1951 = vmatpush1.msra.mxu0 0.0
  %1952 = vmatprep.subr.mxu0 0.0
  %1953 = vmatpush1.msra.mxu0 0.0
  %1954 = vmatprep.subr.mxu0 0.0
  %1955 = vmatpush1.msra.mxu0 0.0
  %1956 = vmatprep.subr.mxu0 0.0
  %1957 = vmatpush1.msra.mxu0 0.0
  %1958 = vmatprep.subr.mxu0 0.0
  %1959 = vmatpush1.msra.mxu0 0.0
  %1960 = vmatprep.subr.mxu0 0.0
  %1961 = vmatpush1.msra.mxu0 0.0
  %1962 = vmatprep.subr.mxu0 0.0
  %1963 = vmatpush1.msra.mxu0 0.0
  %1964 = vmatprep.subr.mxu0 0.0
  %1965 = vmatpush1.msra.mxu0 0.0
  %1966 = vmatprep.subr.mxu0 0.0
  %1967 = vmatpush1.msra.mxu0 0.0
  %1968 = vmatprep.subr.mxu0 0.0
  %1969 = vmatpush1.msra.mxu0 0.0
  %1970 = vmatprep.subr.mxu0 0.0
  %1971 = vmatpush1.msra.mxu0 0.0
  %1972 = vmatprep.subr.mxu0 0.0
  %1973 = vmatpush1.msra.mxu0 0.0
  %1974 = vmatprep.subr.mxu0 0.0
  %1975 = vmatpush1.msra.mxu0 0.0
  %1976 = vmatprep.subr.mxu0 0.0
  %1977 = vmatpush1.msra.mxu0 0.0
  %1978 = vmatprep.subr.mxu0 0.0
  %1979 = vmatpush1.msra.mxu0 0.0
  %1980 = vmatprep.subr.mxu0 0.0
  %1981 = vmatpush1.msra.mxu0 0.0
  %1982 = vmatprep.subr.mxu0 0.0
  %1983 = vmatpush1.msra.mxu0 0.0
  %1984 = vmatprep.subr.mxu0 0.0
  %1985 = vmatpush1.msra.mxu0 0.0
  %1986 = vmatprep.mubr.f32.mxu0 0.0
  %v1987 = vand.u32 %v1633, 4294901760
  %v1988 = vsub.f32 %v1633, %v1987
  %1989 = vmatmul.mubr.f32.gmra.mrb[0].mxu0 %v1988
  %v1990 = vpop.f32.mrb[0].mxu0
  %v1991 = vadd.f32 %v1875, %v1990
  %v1992 = vpop.f32.mrb[0].mxu0
  %1993 = vmatprep.mubr.f32.mxu0 0.0
  %v1994 = vand.u32 %v1636, 4294901760
  %v1995 = vsub.f32 %v1636, %v1994
  %1996 = vmatmul.mubr.f32.gmra.mrb[0].mxu0 %v1995
  %v1997 = vpop.f32.mrb[0].mxu0
  %v1998 = vadd.f32 %v1881, %v1997
  %v1999 = vpop.f32.mrb[0].mxu0
  %2000 = vmatprep.mubr.f32.mxu0 0.0
  %v2001 = vand.u32 %v1639, 4294901760
  %v2002 = vsub.f32 %v1639, %v2001
  %2003 = vmatmul.mubr.f32.gmra.mrb[0].mxu0 %v2002
  %v2004 = vpop.f32.mrb[0].mxu0
  %v2005 = vadd.f32 %v1887, %v2004
  %v2006 = vpop.f32.mrb[0].mxu0
  %2007 = vmatprep.mubr.f32.mxu0 0.0
  %v2008 = vand.u32 %v1642, 4294901760
  %v2009 = vsub.f32 %v1642, %v2008
  %2010 = vmatmul.mubr.f32.gmra.mrb[0].mxu0 %v2009
  %v2011 = vpop.f32.mrb[0].mxu0
  %v2012 = vadd.f32 %v1893, %v2011
  %v2013 = vpop.f32.mrb[0].mxu0
  %2014 = vmatprep.mubr.f32.mxu0 0.0
  %v2015 = vand.u32 %v1645, 4294901760
  %v2016 = vsub.f32 %v1645, %v2015
  %2017 = vmatmul.mubr.f32.gmra.mrb[0].mxu0 %v2016
  %v2018 = vpop.f32.mrb[0].mxu0
  %v2019 = vadd.f32 %v1899, %v2018
  %v2020 = vpop.f32.mrb[0].mxu0
  %2021 = vmatprep.mubr.f32.mxu0 0.0
  %v2022 = vand.u32 %v1648, 4294901760
  %v2023 = vsub.f32 %v1648, %v2022
  %2024 = vmatmul.mubr.f32.gmra.mrb[0].mxu0 %v2023
  %v2025 = vpop.f32.mrb[0].mxu0
  %v2026 = vadd.f32 %v1905, %v2025
  %v2027 = vpop.f32.mrb[0].mxu0
  %2028 = vmatprep.mubr.f32.mxu0 0.0
  %v2029 = vand.u32 %v1651, 4294901760
  %v2030 = vsub.f32 %v1651, %v2029
  %2031 = vmatmul.mubr.f32.gmra.mrb[0].mxu0 %v2030
  %v2032 = vpop.f32.mrb[0].mxu0
  %v2033 = vadd.f32 %v1911, %v2032
  %v2034 = vpop.f32.mrb[0].mxu0
  %2035 = vmatprep.mubr.f32.mxu0 0.0
  %v2036 = vand.u32 %v1654, 4294901760
  %v2037 = vsub.f32 %v1654, %v2036
  %2038 = vmatmul.mubr.f32.gmra.mrb[0].mxu0 %v2037
  %v2039 = vpop.f32.mrb[0].mxu0
  %v2040 = vadd.f32 %v1917, %v2039
  %v2041 = vpop.f32.mrb[0].mxu0
  %2042 = vdwg.mxu0
  %2043 = vmatprep.subr.mxu0 0.0
  %v2044 = vand.u32 %v88, 4294901760
  %2045 = vmatpush1.msra.mxu0 %v2044
  %2046 = vmatprep.subr.mxu0 0.0
  %2047 = vmatpush1.msra.mxu0 0.0
  %2048 = vmatprep.subr.mxu0 0.0
  %2049 = vmatpush1.msra.mxu0 0.0
  %2050 = vmatprep.subr.mxu0 0.0
  %2051 = vmatpush1.msra.mxu0 0.0
  %2052 = vmatprep.subr.mxu0 0.0
  %2053 = vmatpush1.msra.mxu0 0.0
  %2054 = vmatprep.subr.mxu0 0.0
  %2055 = vmatpush1.msra.mxu0 0.0
  %2056 = vmatprep.subr.mxu0 0.0
  %2057 = vmatpush1.msra.mxu0 0.0
  %2058 = vmatprep.subr.mxu0 0.0
  %2059 = vmatpush1.msra.mxu0 0.0
  %2060 = vmatprep.subr.mxu0 0.0
  %2061 = vmatpush1.msra.mxu0 0.0
  %2062 = vmatprep.subr.mxu0 0.0
  %2063 = vmatpush1.msra.mxu0 0.0
  %2064 = vmatprep.subr.mxu0 0.0
  %2065 = vmatpush1.msra.mxu0 0.0
  %2066 = vmatprep.subr.mxu0 0.0
  %2067 = vmatpush1.msra.mxu0 0.0
  %2068 = vmatprep.subr.mxu0 0.0
  %2069 = vmatpush1.msra.mxu0 0.0
  %2070 = vmatprep.subr.mxu0 0.0
  %2071 = vmatpush1.msra.mxu0 0.0
  %2072 = vmatprep.subr.mxu0 0.0
  %2073 = vmatpush1.msra.mxu0 0.0
  %2074 = vmatprep.subr.mxu0 0.0
  %2075 = vmatpush1.msra.mxu0 0.0
  %2076 = vmatprep.subr.mxu0 0.0
  %2077 = vmatpush1.msra.mxu0 0.0
  %2078 = vmatprep.subr.mxu0 0.0
  %2079 = vmatpush1.msra.mxu0 0.0
  %2080 = vmatprep.subr.mxu0 0.0
  %2081 = vmatpush1.msra.mxu0 0.0
  %2082 = vmatprep.subr.mxu0 0.0
  %2083 = vmatpush1.msra.mxu0 0.0
  %2084 = vmatprep.subr.mxu0 0.0
  %2085 = vmatpush1.msra.mxu0 0.0
  %2086 = vmatprep.subr.mxu0 0.0
  %2087 = vmatpush1.msra.mxu0 0.0
  %2088 = vmatprep.subr.mxu0 0.0
  %2089 = vmatpush1.msra.mxu0 0.0
  %2090 = vmatprep.subr.mxu0 0.0
  %2091 = vmatpush1.msra.mxu0 0.0
  %2092 = vmatprep.subr.mxu0 0.0
  %2093 = vmatpush1.msra.mxu0 0.0
  %2094 = vmatprep.subr.mxu0 0.0
  %2095 = vmatpush1.msra.mxu0 0.0
  %2096 = vmatprep.subr.mxu0 0.0
  %2097 = vmatpush1.msra.mxu0 0.0
  %2098 = vmatprep.subr.mxu0 0.0
  %2099 = vmatpush1.msra.mxu0 0.0
  %2100 = vmatprep.subr.mxu0 0.0
  %2101 = vmatpush1.msra.mxu0 0.0
  %2102 = vmatprep.subr.mxu0 0.0
  %2103 = vmatpush1.msra.mxu0 0.0
  %2104 = vmatprep.subr.mxu0 0.0
  %2105 = vmatpush1.msra.mxu0 0.0
  %2106 = vmatprep.subr.mxu0 0.0
  %2107 = vmatpush1.msra.mxu0 0.0
  %2108 = vmatprep.mubr.f32.mxu0 0.0
  %v2109 = vand.u32 %v1633, 4294901760
  %v2110 = vsub.f32 %v1633, %v2109
  %v2111 = vand.u32 %v2110, 4294901760
  %2112 = vmatmul.mubr.f32.gmra.mrb[0].mxu0 %v2111
  %v2113 = vpop.f32.mrb[0].mxu0
  %v2114 = vadd.f32 %v1991, %v2113
  %v2115 = vpop.f32.mrb[0].mxu0
  %2116 = vmatprep.mubr.f32.mxu0 0.0
  %v2117 = vand.u32 %v1636, 4294901760
  %v2118 = vsub.f32 %v1636, %v2117
  %v2119 = vand.u32 %v2118, 4294901760
  %2120 = vmatmul.mubr.f32.gmra.mrb[0].mxu0 %v2119
  %v2121 = vpop.f32.mrb[0].mxu0
  %v2122 = vadd.f32 %v1998, %v2121
  %v2123 = vpop.f32.mrb[0].mxu0
  %2124 = vmatprep.mubr.f32.mxu0 0.0
  %v2125 = vand.u32 %v1639, 4294901760
  %v2126 = vsub.f32 %v1639, %v2125
  %v2127 = vand.u32 %v2126, 4294901760
  %2128 = vmatmul.mubr.f32.gmra.mrb[0].mxu0 %v2127
  %v2129 = vpop.f32.mrb[0].mxu0
  %v2130 = vadd.f32 %v2005, %v2129
  %v2131 = vpop.f32.mrb[0].mxu0
  %2132 = vmatprep.mubr.f32.mxu0 0.0
  %v2133 = vand.u32 %v1642, 4294901760
  %v2134 = vsub.f32 %v1642, %v2133
  %v2135 = vand.u32 %v2134, 4294901760
  %2136 = vmatmul.mubr.f32.gmra.mrb[0].mxu0 %v2135
  %v2137 = vpop.f32.mrb[0].mxu0
  %v2138 = vadd.f32 %v2012, %v2137
  %v2139 = vpop.f32.mrb[0].mxu0
  %2140 = vmatprep.mubr.f32.mxu0 0.0
  %v2141 = vand.u32 %v1645, 4294901760
  %v2142 = vsub.f32 %v1645, %v2141
  %v2143 = vand.u32 %v2142, 4294901760
  %2144 = vmatmul.mubr.f32.gmra.mrb[0].mxu0 %v2143
  %v2145 = vpop.f32.mrb[0].mxu0
  %v2146 = vadd.f32 %v2019, %v2145
  %v2147 = vpop.f32.mrb[0].mxu0
  %2148 = vmatprep.mubr.f32.mxu0 0.0
  %v2149 = vand.u32 %v1648, 4294901760
  %v2150 = vsub.f32 %v1648, %v2149
  %v2151 = vand.u32 %v2150, 4294901760
  %2152 = vmatmul.mubr.f32.gmra.mrb[0].mxu0 %v2151
  %v2153 = vpop.f32.mrb[0].mxu0
  %v2154 = vadd.f32 %v2026, %v2153
  %v2155 = vpop.f32.mrb[0].mxu0
  %2156 = vmatprep.mubr.f32.mxu0 0.0
  %v2157 = vand.u32 %v1651, 4294901760
  %v2158 = vsub.f32 %v1651, %v2157
  %v2159 = vand.u32 %v2158, 4294901760
  %2160 = vmatmul.mubr.f32.gmra.mrb[0].mxu0 %v2159
  %v2161 = vpop.f32.mrb[0].mxu0
  %v2162 = vadd.f32 %v2033, %v2161
  %v2163 = vpop.f32.mrb[0].mxu0
  %2164 = vmatprep.mubr.f32.mxu0 0.0
  %v2165 = vand.u32 %v1654, 4294901760
  %v2166 = vsub.f32 %v1654, %v2165
  %v2167 = vand.u32 %v2166, 4294901760
  %2168 = vmatmul.mubr.f32.gmra.mrb[0].mxu0 %v2167
  %v2169 = vpop.f32.mrb[0].mxu0
  %v2170 = vadd.f32 %v2040, %v2169
  %v2171 = vpop.f32.mrb[0].mxu0
  %2172 = vdwg.mxu0
  %2173 = vmatprep.subr.mxu0 0.0
  %v2174 = vand.u32 %v88, 4294901760
  %v2175 = vsub.f32 %v88, %v2174
  %v2176 = vand.u32 %v2175, 4294901760
  %2177 = vmatpush1.msra.mxu0 %v2176
  %2178 = vmatprep.subr.mxu0 0.0
  %2179 = vmatpush1.msra.mxu0 0.0
  %2180 = vmatprep.subr.mxu0 0.0
  %2181 = vmatpush1.msra.mxu0 0.0
  %2182 = vmatprep.subr.mxu0 0.0
  %2183 = vmatpush1.msra.mxu0 0.0
  %2184 = vmatprep.subr.mxu0 0.0
  %2185 = vmatpush1.msra.mxu0 0.0
  %2186 = vmatprep.subr.mxu0 0.0
  %2187 = vmatpush1.msra.mxu0 0.0
  %2188 = vmatprep.subr.mxu0 0.0
  %2189 = vmatpush1.msra.mxu0 0.0
  %2190 = vmatprep.subr.mxu0 0.0
  %2191 = vmatpush1.msra.mxu0 0.0
  %2192 = vmatprep.subr.mxu0 0.0
  %2193 = vmatpush1.msra.mxu0 0.0
  %2194 = vmatprep.subr.mxu0 0.0
  %2195 = vmatpush1.msra.mxu0 0.0
  %2196 = vmatprep.subr.mxu0 0.0
  %2197 = vmatpush1.msra.mxu0 0.0
  %2198 = vmatprep.subr.mxu0 0.0
  %2199 = vmatpush1.msra.mxu0 0.0
  %2200 = vmatprep.subr.mxu0 0.0
  %2201 = vmatpush1.msra.mxu0 0.0
  %2202 = vmatprep.subr.mxu0 0.0
  %2203 = vmatpush1.msra.mxu0 0.0
  %2204 = vmatprep.subr.mxu0 0.0
  %2205 = vmatpush1.msra.mxu0 0.0
  %2206 = vmatprep.subr.mxu0 0.0
  %2207 = vmatpush1.msra.mxu0 0.0
  %2208 = vmatprep.subr.mxu0 0.0
  %2209 = vmatpush1.msra.mxu0 0.0
  %2210 = vmatprep.subr.mxu0 0.0
  %2211 = vmatpush1.msra.mxu0 0.0
  %2212 = vmatprep.subr.mxu0 0.0
  %2213 = vmatpush1.msra.mxu0 0.0
  %2214 = vmatprep.subr.mxu0 0.0
  %2215 = vmatpush1.msra.mxu0 0.0
  %2216 = vmatprep.subr.mxu0 0.0
  %2217 = vmatpush1.msra.mxu0 0.0
  %2218 = vmatprep.subr.mxu0 0.0
  %2219 = vmatpush1.msra.mxu0 0.0
  %2220 = vmatprep.subr.mxu0 0.0
  %2221 = vmatpush1.msra.mxu0 0.0
  %2222 = vmatprep.subr.mxu0 0.0
  %2223 = vmatpush1.msra.mxu0 0.0
  %2224 = vmatprep.subr.mxu0 0.0
  %2225 = vmatpush1.msra.mxu0 0.0
  %2226 = vmatprep.subr.mxu0 0.0
  %2227 = vmatpush1.msra.mxu0 0.0
  %2228 = vmatprep.subr.mxu0 0.0
  %2229 = vmatpush1.msra.mxu0 0.0
  %2230 = vmatprep.subr.mxu0 0.0
  %2231 = vmatpush1.msra.mxu0 0.0
  %2232 = vmatprep.subr.mxu0 0.0
  %2233 = vmatpush1.msra.mxu0 0.0
  %2234 = vmatprep.subr.mxu0 0.0
  %2235 = vmatpush1.msra.mxu0 0.0
  %2236 = vmatprep.subr.mxu0 0.0
  %2237 = vmatpush1.msra.mxu0 0.0
  %2238 = vmatprep.subr.mxu0 0.0
  %2239 = vmatpush1.msra.mxu0 0.0
  %2240 = vmatprep.mubr.f32.mxu0 0.0
  %v2241 = vand.u32 %v1633, 4294901760
  %2242 = vmatmul.mubr.f32.gmra.mrb[0].mxu0 %v2241
  %v2243 = vpop.f32.mrb[0].mxu0
  %v2244 = vadd.f32 %v2114, %v2243
  %v2245 = vpop.f32.mrb[0].mxu0
  %2246 = vmatprep.mubr.f32.mxu0 0.0
  %v2247 = vand.u32 %v1636, 4294901760
  %2248 = vmatmul.mubr.f32.gmra.mrb[0].mxu0 %v2247
  %v2249 = vpop.f32.mrb[0].mxu0
  %v2250 = vadd.f32 %v2122, %v2249
  %v2251 = vpop.f32.mrb[0].mxu0
  %2252 = vmatprep.mubr.f32.mxu0 0.0
  %v2253 = vand.u32 %v1639, 4294901760
  %2254 = vmatmul.mubr.f32.gmra.mrb[0].mxu0 %v2253
  %v2255 = vpop.f32.mrb[0].mxu0
  %v2256 = vadd.f32 %v2130, %v2255
  %v2257 = vpop.f32.mrb[0].mxu0
  %2258 = vmatprep.mubr.f32.mxu0 0.0
  %v2259 = vand.u32 %v1642, 4294901760
  %2260 = vmatmul.mubr.f32.gmra.mrb[0].mxu0 %v2259
  %v2261 = vpop.f32.mrb[0].mxu0
  %v2262 = vadd.f32 %v2138, %v2261
  %v2263 = vpop.f32.mrb[0].mxu0
  %2264 = vmatprep.mubr.f32.mxu0 0.0
  %v2265 = vand.u32 %v1645, 4294901760
  %2266 = vmatmul.mubr.f32.gmra.mrb[0].mxu0 %v2265
  %v2267 = vpop.f32.mrb[0].mxu0
  %v2268 = vadd.f32 %v2146, %v2267
  %v2269 = vpop.f32.mrb[0].mxu0
  %2270 = vmatprep.mubr.f32.mxu0 0.0
  %v2271 = vand.u32 %v1648, 4294901760
  %2272 = vmatmul.mubr.f32.gmra.mrb[0].mxu0 %v2271
  %v2273 = vpop.f32.mrb[0].mxu0
  %v2274 = vadd.f32 %v2154, %v2273
  %v2275 = vpop.f32.mrb[0].mxu0
  %2276 = vmatprep.mubr.f32.mxu0 0.0
  %v2277 = vand.u32 %v1651, 4294901760
  %2278 = vmatmul.mubr.f32.gmra.mrb[0].mxu0 %v2277
  %v2279 = vpop.f32.mrb[0].mxu0
  %v2280 = vadd.f32 %v2162, %v2279
  %v2281 = vpop.f32.mrb[0].mxu0
  %2282 = vmatprep.mubr.f32.mxu0 0.0
  %v2283 = vand.u32 %v1654, 4294901760
  %2284 = vmatmul.mubr.f32.gmra.mrb[0].mxu0 %v2283
  %v2285 = vpop.f32.mrb[0].mxu0
  %v2286 = vadd.f32 %v2170, %v2285
  %v2287 = vpop.f32.mrb[0].mxu0
  %2288 = vdwg.mxu0
  %2289 = vmatprep.subr.mxu0 0.0
  %v2290 = vand.u32 %v88, 4294901760
  %2291 = vmatpush1.msra.mxu0 %v2290
  %2292 = vmatprep.subr.mxu0 0.0
  %2293 = vmatpush1.msra.mxu0 0.0
  %2294 = vmatprep.subr.mxu0 0.0
  %2295 = vmatpush1.msra.mxu0 0.0
  %2296 = vmatprep.subr.mxu0 0.0
  %2297 = vmatpush1.msra.mxu0 0.0
  %2298 = vmatprep.subr.mxu0 0.0
  %2299 = vmatpush1.msra.mxu0 0.0
  %2300 = vmatprep.subr.mxu0 0.0
  %2301 = vmatpush1.msra.mxu0 0.0
  %2302 = vmatprep.subr.mxu0 0.0
  %2303 = vmatpush1.msra.mxu0 0.0
  %2304 = vmatprep.subr.mxu0 0.0
  %2305 = vmatpush1.msra.mxu0 0.0
  %2306 = vmatprep.subr.mxu0 0.0
  %2307 = vmatpush1.msra.mxu0 0.0
  %2308 = vmatprep.subr.mxu0 0.0
  %2309 = vmatpush1.msra.mxu0 0.0
  %2310 = vmatprep.subr.mxu0 0.0
  %2311 = vmatpush1.msra.mxu0 0.0
  %2312 = vmatprep.subr.mxu0 0.0
  %2313 = vmatpush1.msra.mxu0 0.0
  %2314 = vmatprep.subr.mxu0 0.0
  %2315 = vmatpush1.msra.mxu0 0.0
  %2316 = vmatprep.subr.mxu0 0.0
  %2317 = vmatpush1.msra.mxu0 0.0
  %2318 = vmatprep.subr.mxu0 0.0
  %2319 = vmatpush1.msra.mxu0 0.0
  %2320 = vmatprep.subr.mxu0 0.0
  %2321 = vmatpush1.msra.mxu0 0.0
  %2322 = vmatprep.subr.mxu0 0.0
  %2323 = vmatpush1.msra.mxu0 0.0
  %2324 = vmatprep.subr.mxu0 0.0
  %2325 = vmatpush1.msra.mxu0 0.0
  %2326 = vmatprep.subr.mxu0 0.0
  %2327 = vmatpush1.msra.mxu0 0.0
  %2328 = vmatprep.subr.mxu0 0.0
  %2329 = vmatpush1.msra.mxu0 0.0
  %2330 = vmatprep.subr.mxu0 0.0
  %2331 = vmatpush1.msra.mxu0 0.0
  %2332 = vmatprep.subr.mxu0 0.0
  %2333 = vmatpush1.msra.mxu0 0.0
  %2334 = vmatprep.subr.mxu0 0.0
  %2335 = vmatpush1.msra.mxu0 0.0
  %2336 = vmatprep.subr.mxu0 0.0
  %2337 = vmatpush1.msra.mxu0 0.0
  %2338 = vmatprep.subr.mxu0 0.0
  %2339 = vmatpush1.msra.mxu0 0.0
  %2340 = vmatprep.subr.mxu0 0.0
  %2341 = vmatpush1.msra.mxu0 0.0
  %2342 = vmatprep.subr.mxu0 0.0
  %2343 = vmatpush1.msra.mxu0 0.0
  %2344 = vmatprep.subr.mxu0 0.0
  %2345 = vmatpush1.msra.mxu0 0.0
  %2346 = vmatprep.subr.mxu0 0.0
  %2347 = vmatpush1.msra.mxu0 0.0
  %2348 = vmatprep.subr.mxu0 0.0
  %2349 = vmatpush1.msra.mxu0 0.0
  %2350 = vmatprep.subr.mxu0 0.0
  %2351 = vmatpush1.msra.mxu0 0.0
  %2352 = vmatprep.subr.mxu0 0.0
  %2353 = vmatpush1.msra.mxu0 0.0
  %2354 = vmatprep.mubr.f32.mxu0 0.0
  %v2355 = vand.u32 %v1633, 4294901760
  %2356 = vmatmul.mubr.f32.gmra.mrb[0].mxu0 %v2355
  %v2357 = vpop.f32.mrb[0].mxu0
  %v2358 = vadd.f32 %v2244, %v2357
  %v2359 = vpop.f32.mrb[0].mxu0
  %2360 = vmatprep.mubr.f32.mxu0 0.0
  %v2361 = vand.u32 %v1636, 4294901760
  %2362 = vmatmul.mubr.f32.gmra.mrb[0].mxu0 %v2361
  %v2363 = vpop.f32.mrb[0].mxu0
  %v2364 = vadd.f32 %v2250, %v2363
  %v2365 = vpop.f32.mrb[0].mxu0
  %2366 = vmatprep.mubr.f32.mxu0 0.0
  %v2367 = vand.u32 %v1639, 4294901760
  %2368 = vmatmul.mubr.f32.gmra.mrb[0].mxu0 %v2367
  %v2369 = vpop.f32.mrb[0].mxu0
  %v2370 = vadd.f32 %v2256, %v2369
  %v2371 = vpop.f32.mrb[0].mxu0
  %2372 = vmatprep.mubr.f32.mxu0 0.0
  %v2373 = vand.u32 %v1642, 4294901760
  %2374 = vmatmul.mubr.f32.gmra.mrb[0].mxu0 %v2373
  %v2375 = vpop.f32.mrb[0].mxu0
  %v2376 = vadd.f32 %v2262, %v2375
  %v2377 = vpop.f32.mrb[0].mxu0
  %2378 = vmatprep.mubr.f32.mxu0 0.0
  %v2379 = vand.u32 %v1645, 4294901760
  %2380 = vmatmul.mubr.f32.gmra.mrb[0].mxu0 %v2379
  %v2381 = vpop.f32.mrb[0].mxu0
  %v2382 = vadd.f32 %v2268, %v2381
  %v2383 = vpop.f32.mrb[0].mxu0
  %2384 = vmatprep.mubr.f32.mxu0 0.0
  %v2385 = vand.u32 %v1648, 4294901760
  %2386 = vmatmul.mubr.f32.gmra.mrb[0].mxu0 %v2385
  %v2387 = vpop.f32.mrb[0].mxu0
  %v2388 = vadd.f32 %v2274, %v2387
  %v2389 = vpop.f32.mrb[0].mxu0
  %2390 = vmatprep.mubr.f32.mxu0 0.0
  %v2391 = vand.u32 %v1651, 4294901760
  %2392 = vmatmul.mubr.f32.gmra.mrb[0].mxu0 %v2391
  %v2393 = vpop.f32.mrb[0].mxu0
  %v2394 = vadd.f32 %v2280, %v2393
  %v2395 = vpop.f32.mrb[0].mxu0
  %2396 = vmatprep.mubr.f32.mxu0 0.0
  %v2397 = vand.u32 %v1654, 4294901760
  %2398 = vmatmul.mubr.f32.gmra.mrb[0].mxu0 %v2397
  %v2399 = vpop.f32.mrb[0].mxu0
  %v2400 = vadd.f32 %v2286, %v2399
  %v2401 = vpop.f32.mrb[0].mxu0
  %2402 = vdwg.mxu0
  %v2404 = vsel %vm89, %v55, 0
  %v2407 = vsel %vm89, %v56, 0
  %v2410 = vsel %vm89, %v57, 0
  %v2413 = vsel %vm89, %v58, 0
  %v2416 = vsel %vm89, %v59, 0
  %v2419 = vsel %vm89, %v60, 0
  %v2422 = vsel %vm89, %v61, 0
  %v2425 = vsel %vm89, %v62, 0
  %2427 = vmatprep.subr.mxu0 0.0
  %v2428 = vand.u32 %v87, 4294901760
  %2429 = vmatpush1.msra.mxu0 %v2428
  %2430 = vmatprep.subr.mxu0 0.0
  %2431 = vmatpush1.msra.mxu0 0.0
  %2432 = vmatprep.subr.mxu0 0.0
  %2433 = vmatpush1.msra.mxu0 0.0
  %2434 = vmatprep.subr.mxu0 0.0
  %2435 = vmatpush1.msra.mxu0 0.0
  %2436 = vmatprep.subr.mxu0 0.0
  %2437 = vmatpush1.msra.mxu0 0.0
  %2438 = vmatprep.subr.mxu0 0.0
  %2439 = vmatpush1.msra.mxu0 0.0
  %2440 = vmatprep.subr.mxu0 0.0
  %2441 = vmatpush1.msra.mxu0 0.0
  %2442 = vmatprep.subr.mxu0 0.0
  %2443 = vmatpush1.msra.mxu0 0.0
  %2444 = vmatprep.subr.mxu0 0.0
  %2445 = vmatpush1.msra.mxu0 0.0
  %2446 = vmatprep.subr.mxu0 0.0
  %2447 = vmatpush1.msra.mxu0 0.0
  %2448 = vmatprep.subr.mxu0 0.0
  %2449 = vmatpush1.msra.mxu0 0.0
  %2450 = vmatprep.subr.mxu0 0.0
  %2451 = vmatpush1.msra.mxu0 0.0
  %2452 = vmatprep.subr.mxu0 0.0
  %2453 = vmatpush1.msra.mxu0 0.0
  %2454 = vmatprep.subr.mxu0 0.0
  %2455 = vmatpush1.msra.mxu0 0.0
  %2456 = vmatprep.subr.mxu0 0.0
  %2457 = vmatpush1.msra.mxu0 0.0
  %2458 = vmatprep.subr.mxu0 0.0
  %2459 = vmatpush1.msra.mxu0 0.0
  %2460 = vmatprep.subr.mxu0 0.0
  %2461 = vmatpush1.msra.mxu0 0.0
  %2462 = vmatprep.subr.mxu0 0.0
  %2463 = vmatpush1.msra.mxu0 0.0
  %2464 = vmatprep.subr.mxu0 0.0
  %2465 = vmatpush1.msra.mxu0 0.0
  %2466 = vmatprep.subr.mxu0 0.0
  %2467 = vmatpush1.msra.mxu0 0.0
  %2468 = vmatprep.subr.mxu0 0.0
  %2469 = vmatpush1.msra.mxu0 0.0
  %2470 = vmatprep.subr.mxu0 0.0
  %2471 = vmatpush1.msra.mxu0 0.0
  %2472 = vmatprep.subr.mxu0 0.0
  %2473 = vmatpush1.msra.mxu0 0.0
  %2474 = vmatprep.subr.mxu0 0.0
  %2475 = vmatpush1.msra.mxu0 0.0
  %2476 = vmatprep.subr.mxu0 0.0
  %2477 = vmatpush1.msra.mxu0 0.0
  %2478 = vmatprep.subr.mxu0 0.0
  %2479 = vmatpush1.msra.mxu0 0.0
  %2480 = vmatprep.subr.mxu0 0.0
  %2481 = vmatpush1.msra.mxu0 0.0
  %2482 = vmatprep.subr.mxu0 0.0
  %2483 = vmatpush1.msra.mxu0 0.0
  %2484 = vmatprep.subr.mxu0 0.0
  %2485 = vmatpush1.msra.mxu0 0.0
  %2486 = vmatprep.subr.mxu0 0.0
  %2487 = vmatpush1.msra.mxu0 0.0
  %2488 = vmatprep.subr.mxu0 0.0
  %2489 = vmatpush1.msra.mxu0 0.0
  %2490 = vmatprep.subr.mxu0 0.0
  %2491 = vmatpush1.msra.mxu0 0.0
  %2492 = vmatprep.mubr.f32.mxu0 0.0
  %v2493 = vand.u32 %v2404, 4294901760
  %v2494 = vsub.f32 %v2404, %v2493
  %v2495 = vand.u32 %v2494, 4294901760
  %v2496 = vsub.f32 %v2494, %v2495
  %v2497 = vand.u32 %v2496, 4294901760
  %2498 = vmatmul.mubr.f32.gmra.mrb[0].mxu0 %v2497
  %v2499 = vpop.f32.mrb[0].mxu0
  %v2500 = vadd.f32 %v816, %v2499
  %v2501 = vpop.f32.mrb[0].mxu0
  %2502 = vmatprep.mubr.f32.mxu0 0.0
  %v2503 = vand.u32 %v2407, 4294901760
  %v2504 = vsub.f32 %v2407, %v2503
  %v2505 = vand.u32 %v2504, 4294901760
  %v2506 = vsub.f32 %v2504, %v2505
  %v2507 = vand.u32 %v2506, 4294901760
  %2508 = vmatmul.mubr.f32.gmra.mrb[0].mxu0 %v2507
  %v2509 = vpop.f32.mrb[0].mxu0
  %v2510 = vadd.f32 %v822, %v2509
  %v2511 = vpop.f32.mrb[0].mxu0
  %2512 = vmatprep.mubr.f32.mxu0 0.0
  %v2513 = vand.u32 %v2410, 4294901760
  %v2514 = vsub.f32 %v2410, %v2513
  %v2515 = vand.u32 %v2514, 4294901760
  %v2516 = vsub.f32 %v2514, %v2515
  %v2517 = vand.u32 %v2516, 4294901760
  %2518 = vmatmul.mubr.f32.gmra.mrb[0].mxu0 %v2517
  %v2519 = vpop.f32.mrb[0].mxu0
  %v2520 = vadd.f32 %v828, %v2519
  %v2521 = vpop.f32.mrb[0].mxu0
  %2522 = vmatprep.mubr.f32.mxu0 0.0
  %v2523 = vand.u32 %v2413, 4294901760
  %v2524 = vsub.f32 %v2413, %v2523
  %v2525 = vand.u32 %v2524, 4294901760
  %v2526 = vsub.f32 %v2524, %v2525
  %v2527 = vand.u32 %v2526, 4294901760
  %2528 = vmatmul.mubr.f32.gmra.mrb[0].mxu0 %v2527
  %v2529 = vpop.f32.mrb[0].mxu0
  %v2530 = vadd.f32 %v834, %v2529
  %v2531 = vpop.f32.mrb[0].mxu0
  %2532 = vmatprep.mubr.f32.mxu0 0.0
  %v2533 = vand.u32 %v2416, 4294901760
  %v2534 = vsub.f32 %v2416, %v2533
  %v2535 = vand.u32 %v2534, 4294901760
  %v2536 = vsub.f32 %v2534, %v2535
  %v2537 = vand.u32 %v2536, 4294901760
  %2538 = vmatmul.mubr.f32.gmra.mrb[0].mxu0 %v2537
  %v2539 = vpop.f32.mrb[0].mxu0
  %v2540 = vadd.f32 %v840, %v2539
  %v2541 = vpop.f32.mrb[0].mxu0
  %2542 = vmatprep.mubr.f32.mxu0 0.0
  %v2543 = vand.u32 %v2419, 4294901760
  %v2544 = vsub.f32 %v2419, %v2543
  %v2545 = vand.u32 %v2544, 4294901760
  %v2546 = vsub.f32 %v2544, %v2545
  %v2547 = vand.u32 %v2546, 4294901760
  %2548 = vmatmul.mubr.f32.gmra.mrb[0].mxu0 %v2547
  %v2549 = vpop.f32.mrb[0].mxu0
  %v2550 = vadd.f32 %v846, %v2549
  %v2551 = vpop.f32.mrb[0].mxu0
  %2552 = vmatprep.mubr.f32.mxu0 0.0
  %v2553 = vand.u32 %v2422, 4294901760
  %v2554 = vsub.f32 %v2422, %v2553
  %v2555 = vand.u32 %v2554, 4294901760
  %v2556 = vsub.f32 %v2554, %v2555
  %v2557 = vand.u32 %v2556, 4294901760
  %2558 = vmatmul.mubr.f32.gmra.mrb[0].mxu0 %v2557
  %v2559 = vpop.f32.mrb[0].mxu0
  %v2560 = vadd.f32 %v852, %v2559
  %v2561 = vpop.f32.mrb[0].mxu0
  %2562 = vmatprep.mubr.f32.mxu0 0.0
  %v2563 = vand.u32 %v2425, 4294901760
  %v2564 = vsub.f32 %v2425, %v2563
  %v2565 = vand.u32 %v2564, 4294901760
  %v2566 = vsub.f32 %v2564, %v2565
  %v2567 = vand.u32 %v2566, 4294901760
  %2568 = vmatmul.mubr.f32.gmra.mrb[0].mxu0 %v2567
  %v2569 = vpop.f32.mrb[0].mxu0
  %v2570 = vadd.f32 %v858, %v2569
  %v2571 = vpop.f32.mrb[0].mxu0
  %2572 = vdwg.mxu0
  %2573 = vmatprep.subr.mxu0 0.0
  %v2574 = vand.u32 %v87, 4294901760
  %v2575 = vsub.f32 %v87, %v2574
  %v2576 = vand.u32 %v2575, 4294901760
  %v2577 = vsub.f32 %v2575, %v2576
  %v2578 = vand.u32 %v2577, 4294901760
  %2579 = vmatpush1.msra.mxu0 %v2578
  %2580 = vmatprep.subr.mxu0 0.0
  %2581 = vmatpush1.msra.mxu0 0.0
  %2582 = vmatprep.subr.mxu0 0.0
  %2583 = vmatpush1.msra.mxu0 0.0
  %2584 = vmatprep.subr.mxu0 0.0
  %2585 = vmatpush1.msra.mxu0 0.0
  %2586 = vmatprep.subr.mxu0 0.0
  %2587 = vmatpush1.msra.mxu0 0.0
  %2588 = vmatprep.subr.mxu0 0.0
  %2589 = vmatpush1.msra.mxu0 0.0
  %2590 = vmatprep.subr.mxu0 0.0
  %2591 = vmatpush1.msra.mxu0 0.0
  %2592 = vmatprep.subr.mxu0 0.0
  %2593 = vmatpush1.msra.mxu0 0.0
  %2594 = vmatprep.subr.mxu0 0.0
  %2595 = vmatpush1.msra.mxu0 0.0
  %2596 = vmatprep.subr.mxu0 0.0
  %2597 = vmatpush1.msra.mxu0 0.0
  %2598 = vmatprep.subr.mxu0 0.0
  %2599 = vmatpush1.msra.mxu0 0.0
  %2600 = vmatprep.subr.mxu0 0.0
  %2601 = vmatpush1.msra.mxu0 0.0
  %2602 = vmatprep.subr.mxu0 0.0
  %2603 = vmatpush1.msra.mxu0 0.0
  %2604 = vmatprep.subr.mxu0 0.0
  %2605 = vmatpush1.msra.mxu0 0.0
  %2606 = vmatprep.subr.mxu0 0.0
  %2607 = vmatpush1.msra.mxu0 0.0
  %2608 = vmatprep.subr.mxu0 0.0
  %2609 = vmatpush1.msra.mxu0 0.0
  %2610 = vmatprep.subr.mxu0 0.0
  %2611 = vmatpush1.msra.mxu0 0.0
  %2612 = vmatprep.subr.mxu0 0.0
  %2613 = vmatpush1.msra.mxu0 0.0
  %2614 = vmatprep.subr.mxu0 0.0
  %2615 = vmatpush1.msra.mxu0 0.0
  %2616 = vmatprep.subr.mxu0 0.0
  %2617 = vmatpush1.msra.mxu0 0.0
  %2618 = vmatprep.subr.mxu0 0.0
  %2619 = vmatpush1.msra.mxu0 0.0
  %2620 = vmatprep.subr.mxu0 0.0
  %2621 = vmatpush1.msra.mxu0 0.0
  %2622 = vmatprep.subr.mxu0 0.0
  %2623 = vmatpush1.msra.mxu0 0.0
  %2624 = vmatprep.subr.mxu0 0.0
  %2625 = vmatpush1.msra.mxu0 0.0
  %2626 = vmatprep.subr.mxu0 0.0
  %2627 = vmatpush1.msra.mxu0 0.0
  %2628 = vmatprep.subr.mxu0 0.0
  %2629 = vmatpush1.msra.mxu0 0.0
  %2630 = vmatprep.subr.mxu0 0.0
  %2631 = vmatpush1.msra.mxu0 0.0
  %2632 = vmatprep.subr.mxu0 0.0
  %2633 = vmatpush1.msra.mxu0 0.0
  %2634 = vmatprep.subr.mxu0 0.0
  %2635 = vmatpush1.msra.mxu0 0.0
  %2636 = vmatprep.subr.mxu0 0.0
  %2637 = vmatpush1.msra.mxu0 0.0
  %2638 = vmatprep.subr.mxu0 0.0
  %2639 = vmatpush1.msra.mxu0 0.0
  %2640 = vmatprep.subr.mxu0 0.0
  %2641 = vmatpush1.msra.mxu0 0.0
  %2642 = vmatprep.mubr.f32.mxu0 0.0
  %v2643 = vand.u32 %v2404, 4294901760
  %2644 = vmatmul.mubr.f32.gmra.mrb[0].mxu0 %v2643
  %v2645 = vpop.f32.mrb[0].mxu0
  %v2646 = vadd.f32 %v2500, %v2645
  %v2647 = vpop.f32.mrb[0].mxu0
  %2648 = vmatprep.mubr.f32.mxu0 0.0
  %v2649 = vand.u32 %v2407, 4294901760
  %2650 = vmatmul.mubr.f32.gmra.mrb[0].mxu0 %v2649
  %v2651 = vpop.f32.mrb[0].mxu0
  %v2652 = vadd.f32 %v2510, %v2651
  %v2653 = vpop.f32.mrb[0].mxu0
  %2654 = vmatprep.mubr.f32.mxu0 0.0
  %v2655 = vand.u32 %v2410, 4294901760
  %2656 = vmatmul.mubr.f32.gmra.mrb[0].mxu0 %v2655
  %v2657 = vpop.f32.mrb[0].mxu0
  %v2658 = vadd.f32 %v2520, %v2657
  %v2659 = vpop.f32.mrb[0].mxu0
  %2660 = vmatprep.mubr.f32.mxu0 0.0
  %v2661 = vand.u32 %v2413, 4294901760
  %2662 = vmatmul.mubr.f32.gmra.mrb[0].mxu0 %v2661
  %v2663 = vpop.f32.mrb[0].mxu0
  %v2664 = vadd.f32 %v2530, %v2663
  %v2665 = vpop.f32.mrb[0].mxu0
  %2666 = vmatprep.mubr.f32.mxu0 0.0
  %v2667 = vand.u32 %v2416, 4294901760
  %2668 = vmatmul.mubr.f32.gmra.mrb[0].mxu0 %v2667
  %v2669 = vpop.f32.mrb[0].mxu0
  %v2670 = vadd.f32 %v2540, %v2669
  %v2671 = vpop.f32.mrb[0].mxu0
  %2672 = vmatprep.mubr.f32.mxu0 0.0
  %v2673 = vand.u32 %v2419, 4294901760
  %2674 = vmatmul.mubr.f32.gmra.mrb[0].mxu0 %v2673
  %v2675 = vpop.f32.mrb[0].mxu0
  %v2676 = vadd.f32 %v2550, %v2675
  %v2677 = vpop.f32.mrb[0].mxu0
  %2678 = vmatprep.mubr.f32.mxu0 0.0
  %v2679 = vand.u32 %v2422, 4294901760
  %2680 = vmatmul.mubr.f32.gmra.mrb[0].mxu0 %v2679
  %v2681 = vpop.f32.mrb[0].mxu0
  %v2682 = vadd.f32 %v2560, %v2681
  %v2683 = vpop.f32.mrb[0].mxu0
  %2684 = vmatprep.mubr.f32.mxu0 0.0
  %v2685 = vand.u32 %v2425, 4294901760
  %2686 = vmatmul.mubr.f32.gmra.mrb[0].mxu0 %v2685
  %v2687 = vpop.f32.mrb[0].mxu0
  %v2688 = vadd.f32 %v2570, %v2687
  %v2689 = vpop.f32.mrb[0].mxu0
  %2690 = vdwg.mxu0
  %2691 = vmatprep.subr.mxu0 0.0
  %v2692 = vand.u32 %v87, 4294901760
  %v2693 = vsub.f32 %v87, %v2692
  %2694 = vmatpush1.msra.mxu0 %v2693
  %2695 = vmatprep.subr.mxu0 0.0
  %2696 = vmatpush1.msra.mxu0 0.0
  %2697 = vmatprep.subr.mxu0 0.0
  %2698 = vmatpush1.msra.mxu0 0.0
  %2699 = vmatprep.subr.mxu0 0.0
  %2700 = vmatpush1.msra.mxu0 0.0
  %2701 = vmatprep.subr.mxu0 0.0
  %2702 = vmatpush1.msra.mxu0 0.0
  %2703 = vmatprep.subr.mxu0 0.0
  %2704 = vmatpush1.msra.mxu0 0.0
  %2705 = vmatprep.subr.mxu0 0.0
  %2706 = vmatpush1.msra.mxu0 0.0
  %2707 = vmatprep.subr.mxu0 0.0
  %2708 = vmatpush1.msra.mxu0 0.0
  %2709 = vmatprep.subr.mxu0 0.0
  %2710 = vmatpush1.msra.mxu0 0.0
  %2711 = vmatprep.subr.mxu0 0.0
  %2712 = vmatpush1.msra.mxu0 0.0
  %2713 = vmatprep.subr.mxu0 0.0
  %2714 = vmatpush1.msra.mxu0 0.0
  %2715 = vmatprep.subr.mxu0 0.0
  %2716 = vmatpush1.msra.mxu0 0.0
  %2717 = vmatprep.subr.mxu0 0.0
  %2718 = vmatpush1.msra.mxu0 0.0
  %2719 = vmatprep.subr.mxu0 0.0
  %2720 = vmatpush1.msra.mxu0 0.0
  %2721 = vmatprep.subr.mxu0 0.0
  %2722 = vmatpush1.msra.mxu0 0.0
  %2723 = vmatprep.subr.mxu0 0.0
  %2724 = vmatpush1.msra.mxu0 0.0
  %2725 = vmatprep.subr.mxu0 0.0
  %2726 = vmatpush1.msra.mxu0 0.0
  %2727 = vmatprep.subr.mxu0 0.0
  %2728 = vmatpush1.msra.mxu0 0.0
  %2729 = vmatprep.subr.mxu0 0.0
  %2730 = vmatpush1.msra.mxu0 0.0
  %2731 = vmatprep.subr.mxu0 0.0
  %2732 = vmatpush1.msra.mxu0 0.0
  %2733 = vmatprep.subr.mxu0 0.0
  %2734 = vmatpush1.msra.mxu0 0.0
  %2735 = vmatprep.subr.mxu0 0.0
  %2736 = vmatpush1.msra.mxu0 0.0
  %2737 = vmatprep.subr.mxu0 0.0
  %2738 = vmatpush1.msra.mxu0 0.0
  %2739 = vmatprep.subr.mxu0 0.0
  %2740 = vmatpush1.msra.mxu0 0.0
  %2741 = vmatprep.subr.mxu0 0.0
  %2742 = vmatpush1.msra.mxu0 0.0
  %2743 = vmatprep.subr.mxu0 0.0
  %2744 = vmatpush1.msra.mxu0 0.0
  %2745 = vmatprep.subr.mxu0 0.0
  %2746 = vmatpush1.msra.mxu0 0.0
  %2747 = vmatprep.subr.mxu0 0.0
  %2748 = vmatpush1.msra.mxu0 0.0
  %2749 = vmatprep.subr.mxu0 0.0
  %2750 = vmatpush1.msra.mxu0 0.0
  %2751 = vmatprep.subr.mxu0 0.0
  %2752 = vmatpush1.msra.mxu0 0.0
  %2753 = vmatprep.subr.mxu0 0.0
  %2754 = vmatpush1.msra.mxu0 0.0
  %2755 = vmatprep.subr.mxu0 0.0
  %2756 = vmatpush1.msra.mxu0 0.0
  %2757 = vmatprep.mubr.f32.mxu0 0.0
  %v2758 = vand.u32 %v2404, 4294901760
  %v2759 = vsub.f32 %v2404, %v2758
  %2760 = vmatmul.mubr.f32.gmra.mrb[0].mxu0 %v2759
  %v2761 = vpop.f32.mrb[0].mxu0
  %v2762 = vadd.f32 %v2646, %v2761
  %v2763 = vpop.f32.mrb[0].mxu0
  %2764 = vmatprep.mubr.f32.mxu0 0.0
  %v2765 = vand.u32 %v2407, 4294901760
  %v2766 = vsub.f32 %v2407, %v2765
  %2767 = vmatmul.mubr.f32.gmra.mrb[0].mxu0 %v2766
  %v2768 = vpop.f32.mrb[0].mxu0
  %v2769 = vadd.f32 %v2652, %v2768
  %v2770 = vpop.f32.mrb[0].mxu0
  %2771 = vmatprep.mubr.f32.mxu0 0.0
  %v2772 = vand.u32 %v2410, 4294901760
  %v2773 = vsub.f32 %v2410, %v2772
  %2774 = vmatmul.mubr.f32.gmra.mrb[0].mxu0 %v2773
  %v2775 = vpop.f32.mrb[0].mxu0
  %v2776 = vadd.f32 %v2658, %v2775
  %v2777 = vpop.f32.mrb[0].mxu0
  %2778 = vmatprep.mubr.f32.mxu0 0.0
  %v2779 = vand.u32 %v2413, 4294901760
  %v2780 = vsub.f32 %v2413, %v2779
  %2781 = vmatmul.mubr.f32.gmra.mrb[0].mxu0 %v2780
  %v2782 = vpop.f32.mrb[0].mxu0
  %v2783 = vadd.f32 %v2664, %v2782
  %v2784 = vpop.f32.mrb[0].mxu0
  %2785 = vmatprep.mubr.f32.mxu0 0.0
  %v2786 = vand.u32 %v2416, 4294901760
  %v2787 = vsub.f32 %v2416, %v2786
  %2788 = vmatmul.mubr.f32.gmra.mrb[0].mxu0 %v2787
  %v2789 = vpop.f32.mrb[0].mxu0
  %v2790 = vadd.f32 %v2670, %v2789
  %v2791 = vpop.f32.mrb[0].mxu0
  %2792 = vmatprep.mubr.f32.mxu0 0.0
  %v2793 = vand.u32 %v2419, 4294901760
  %v2794 = vsub.f32 %v2419, %v2793
  %2795 = vmatmul.mubr.f32.gmra.mrb[0].mxu0 %v2794
  %v2796 = vpop.f32.mrb[0].mxu0
  %v2797 = vadd.f32 %v2676, %v2796
  %v2798 = vpop.f32.mrb[0].mxu0
  %2799 = vmatprep.mubr.f32.mxu0 0.0
  %v2800 = vand.u32 %v2422, 4294901760
  %v2801 = vsub.f32 %v2422, %v2800
  %2802 = vmatmul.mubr.f32.gmra.mrb[0].mxu0 %v2801
  %v2803 = vpop.f32.mrb[0].mxu0
  %v2804 = vadd.f32 %v2682, %v2803
  %v2805 = vpop.f32.mrb[0].mxu0
  %2806 = vmatprep.mubr.f32.mxu0 0.0
  %v2807 = vand.u32 %v2425, 4294901760
  %v2808 = vsub.f32 %v2425, %v2807
  %2809 = vmatmul.mubr.f32.gmra.mrb[0].mxu0 %v2808
  %v2810 = vpop.f32.mrb[0].mxu0
  %v2811 = vadd.f32 %v2688, %v2810
  %v2812 = vpop.f32.mrb[0].mxu0
  %2813 = vdwg.mxu0
  %2814 = vmatprep.subr.mxu0 0.0
  %v2815 = vand.u32 %v87, 4294901760
  %2816 = vmatpush1.msra.mxu0 %v2815
  %2817 = vmatprep.subr.mxu0 0.0
  %2818 = vmatpush1.msra.mxu0 0.0
  %2819 = vmatprep.subr.mxu0 0.0
  %2820 = vmatpush1.msra.mxu0 0.0
  %2821 = vmatprep.subr.mxu0 0.0
  %2822 = vmatpush1.msra.mxu0 0.0
  %2823 = vmatprep.subr.mxu0 0.0
  %2824 = vmatpush1.msra.mxu0 0.0
  %2825 = vmatprep.subr.mxu0 0.0
  %2826 = vmatpush1.msra.mxu0 0.0
  %2827 = vmatprep.subr.mxu0 0.0
  %2828 = vmatpush1.msra.mxu0 0.0
  %2829 = vmatprep.subr.mxu0 0.0
  %2830 = vmatpush1.msra.mxu0 0.0
  %2831 = vmatprep.subr.mxu0 0.0
  %2832 = vmatpush1.msra.mxu0 0.0
  %2833 = vmatprep.subr.mxu0 0.0
  %2834 = vmatpush1.msra.mxu0 0.0
  %2835 = vmatprep.subr.mxu0 0.0
  %2836 = vmatpush1.msra.mxu0 0.0
  %2837 = vmatprep.subr.mxu0 0.0
  %2838 = vmatpush1.msra.mxu0 0.0
  %2839 = vmatprep.subr.mxu0 0.0
  %2840 = vmatpush1.msra.mxu0 0.0
  %2841 = vmatprep.subr.mxu0 0.0
  %2842 = vmatpush1.msra.mxu0 0.0
  %2843 = vmatprep.subr.mxu0 0.0
  %2844 = vmatpush1.msra.mxu0 0.0
  %2845 = vmatprep.subr.mxu0 0.0
  %2846 = vmatpush1.msra.mxu0 0.0
  %2847 = vmatprep.subr.mxu0 0.0
  %2848 = vmatpush1.msra.mxu0 0.0
  %2849 = vmatprep.subr.mxu0 0.0
  %2850 = vmatpush1.msra.mxu0 0.0
  %2851 = vmatprep.subr.mxu0 0.0
  %2852 = vmatpush1.msra.mxu0 0.0
  %2853 = vmatprep.subr.mxu0 0.0
  %2854 = vmatpush1.msra.mxu0 0.0
  %2855 = vmatprep.subr.mxu0 0.0
  %2856 = vmatpush1.msra.mxu0 0.0
  %2857 = vmatprep.subr.mxu0 0.0
  %2858 = vmatpush1.msra.mxu0 0.0
  %2859 = vmatprep.subr.mxu0 0.0
  %2860 = vmatpush1.msra.mxu0 0.0
  %2861 = vmatprep.subr.mxu0 0.0
  %2862 = vmatpush1.msra.mxu0 0.0
  %2863 = vmatprep.subr.mxu0 0.0
  %2864 = vmatpush1.msra.mxu0 0.0
  %2865 = vmatprep.subr.mxu0 0.0
  %2866 = vmatpush1.msra.mxu0 0.0
  %2867 = vmatprep.subr.mxu0 0.0
  %2868 = vmatpush1.msra.mxu0 0.0
  %2869 = vmatprep.subr.mxu0 0.0
  %2870 = vmatpush1.msra.mxu0 0.0
  %2871 = vmatprep.subr.mxu0 0.0
  %2872 = vmatpush1.msra.mxu0 0.0
  %2873 = vmatprep.subr.mxu0 0.0
  %2874 = vmatpush1.msra.mxu0 0.0
  %2875 = vmatprep.subr.mxu0 0.0
  %2876 = vmatpush1.msra.mxu0 0.0
  %2877 = vmatprep.subr.mxu0 0.0
  %2878 = vmatpush1.msra.mxu0 0.0
  %2879 = vmatprep.mubr.f32.mxu0 0.0
  %v2880 = vand.u32 %v2404, 4294901760
  %v2881 = vsub.f32 %v2404, %v2880
  %v2882 = vand.u32 %v2881, 4294901760
  %2883 = vmatmul.mubr.f32.gmra.mrb[0].mxu0 %v2882
  %v2884 = vpop.f32.mrb[0].mxu0
  %v2885 = vadd.f32 %v2762, %v2884
  %v2886 = vpop.f32.mrb[0].mxu0
  %2887 = vmatprep.mubr.f32.mxu0 0.0
  %v2888 = vand.u32 %v2407, 4294901760
  %v2889 = vsub.f32 %v2407, %v2888
  %v2890 = vand.u32 %v2889, 4294901760
  %2891 = vmatmul.mubr.f32.gmra.mrb[0].mxu0 %v2890
  %v2892 = vpop.f32.mrb[0].mxu0
  %v2893 = vadd.f32 %v2769, %v2892
  %v2894 = vpop.f32.mrb[0].mxu0
  %2895 = vmatprep.mubr.f32.mxu0 0.0
  %v2896 = vand.u32 %v2410, 4294901760
  %v2897 = vsub.f32 %v2410, %v2896
  %v2898 = vand.u32 %v2897, 4294901760
  %2899 = vmatmul.mubr.f32.gmra.mrb[0].mxu0 %v2898
  %v2900 = vpop.f32.mrb[0].mxu0
  %v2901 = vadd.f32 %v2776, %v2900
  %v2902 = vpop.f32.mrb[0].mxu0
  %2903 = vmatprep.mubr.f32.mxu0 0.0
  %v2904 = vand.u32 %v2413, 4294901760
  %v2905 = vsub.f32 %v2413, %v2904
  %v2906 = vand.u32 %v2905, 4294901760
  %2907 = vmatmul.mubr.f32.gmra.mrb[0].mxu0 %v2906
  %v2908 = vpop.f32.mrb[0].mxu0
  %v2909 = vadd.f32 %v2783, %v2908
  %v2910 = vpop.f32.mrb[0].mxu0
  %2911 = vmatprep.mubr.f32.mxu0 0.0
  %v2912 = vand.u32 %v2416, 4294901760
  %v2913 = vsub.f32 %v2416, %v2912
  %v2914 = vand.u32 %v2913, 4294901760
  %2915 = vmatmul.mubr.f32.gmra.mrb[0].mxu0 %v2914
  %v2916 = vpop.f32.mrb[0].mxu0
  %v2917 = vadd.f32 %v2790, %v2916
  %v2918 = vpop.f32.mrb[0].mxu0
  %2919 = vmatprep.mubr.f32.mxu0 0.0
  %v2920 = vand.u32 %v2419, 4294901760
  %v2921 = vsub.f32 %v2419, %v2920
  %v2922 = vand.u32 %v2921, 4294901760
  %2923 = vmatmul.mubr.f32.gmra.mrb[0].mxu0 %v2922
  %v2924 = vpop.f32.mrb[0].mxu0
  %v2925 = vadd.f32 %v2797, %v2924
  %v2926 = vpop.f32.mrb[0].mxu0
  %2927 = vmatprep.mubr.f32.mxu0 0.0
  %v2928 = vand.u32 %v2422, 4294901760
  %v2929 = vsub.f32 %v2422, %v2928
  %v2930 = vand.u32 %v2929, 4294901760
  %2931 = vmatmul.mubr.f32.gmra.mrb[0].mxu0 %v2930
  %v2932 = vpop.f32.mrb[0].mxu0
  %v2933 = vadd.f32 %v2804, %v2932
  %v2934 = vpop.f32.mrb[0].mxu0
  %2935 = vmatprep.mubr.f32.mxu0 0.0
  %v2936 = vand.u32 %v2425, 4294901760
  %v2937 = vsub.f32 %v2425, %v2936
  %v2938 = vand.u32 %v2937, 4294901760
  %2939 = vmatmul.mubr.f32.gmra.mrb[0].mxu0 %v2938
  %v2940 = vpop.f32.mrb[0].mxu0
  %v2941 = vadd.f32 %v2811, %v2940
  %v2942 = vpop.f32.mrb[0].mxu0
  %2943 = vdwg.mxu0
  %2944 = vmatprep.subr.mxu0 0.0
  %v2945 = vand.u32 %v87, 4294901760
  %v2946 = vsub.f32 %v87, %v2945
  %v2947 = vand.u32 %v2946, 4294901760
  %2948 = vmatpush1.msra.mxu0 %v2947
  %2949 = vmatprep.subr.mxu0 0.0
  %2950 = vmatpush1.msra.mxu0 0.0
  %2951 = vmatprep.subr.mxu0 0.0
  %2952 = vmatpush1.msra.mxu0 0.0
  %2953 = vmatprep.subr.mxu0 0.0
  %2954 = vmatpush1.msra.mxu0 0.0
  %2955 = vmatprep.subr.mxu0 0.0
  %2956 = vmatpush1.msra.mxu0 0.0
  %2957 = vmatprep.subr.mxu0 0.0
  %2958 = vmatpush1.msra.mxu0 0.0
  %2959 = vmatprep.subr.mxu0 0.0
  %2960 = vmatpush1.msra.mxu0 0.0
  %2961 = vmatprep.subr.mxu0 0.0
  %2962 = vmatpush1.msra.mxu0 0.0
  %2963 = vmatprep.subr.mxu0 0.0
  %2964 = vmatpush1.msra.mxu0 0.0
  %2965 = vmatprep.subr.mxu0 0.0
  %2966 = vmatpush1.msra.mxu0 0.0
  %2967 = vmatprep.subr.mxu0 0.0
  %2968 = vmatpush1.msra.mxu0 0.0
  %2969 = vmatprep.subr.mxu0 0.0
  %2970 = vmatpush1.msra.mxu0 0.0
  %2971 = vmatprep.subr.mxu0 0.0
  %2972 = vmatpush1.msra.mxu0 0.0
  %2973 = vmatprep.subr.mxu0 0.0
  %2974 = vmatpush1.msra.mxu0 0.0
  %2975 = vmatprep.subr.mxu0 0.0
  %2976 = vmatpush1.msra.mxu0 0.0
  %2977 = vmatprep.subr.mxu0 0.0
  %2978 = vmatpush1.msra.mxu0 0.0
  %2979 = vmatprep.subr.mxu0 0.0
  %2980 = vmatpush1.msra.mxu0 0.0
  %2981 = vmatprep.subr.mxu0 0.0
  %2982 = vmatpush1.msra.mxu0 0.0
  %2983 = vmatprep.subr.mxu0 0.0
  %2984 = vmatpush1.msra.mxu0 0.0
  %2985 = vmatprep.subr.mxu0 0.0
  %2986 = vmatpush1.msra.mxu0 0.0
  %2987 = vmatprep.subr.mxu0 0.0
  %2988 = vmatpush1.msra.mxu0 0.0
  %2989 = vmatprep.subr.mxu0 0.0
  %2990 = vmatpush1.msra.mxu0 0.0
  %2991 = vmatprep.subr.mxu0 0.0
  %2992 = vmatpush1.msra.mxu0 0.0
  %2993 = vmatprep.subr.mxu0 0.0
  %2994 = vmatpush1.msra.mxu0 0.0
  %2995 = vmatprep.subr.mxu0 0.0
  %2996 = vmatpush1.msra.mxu0 0.0
  %2997 = vmatprep.subr.mxu0 0.0
  %2998 = vmatpush1.msra.mxu0 0.0
  %2999 = vmatprep.subr.mxu0 0.0
  %3000 = vmatpush1.msra.mxu0 0.0
  %3001 = vmatprep.subr.mxu0 0.0
  %3002 = vmatpush1.msra.mxu0 0.0
  %3003 = vmatprep.subr.mxu0 0.0
  %3004 = vmatpush1.msra.mxu0 0.0
  %3005 = vmatprep.subr.mxu0 0.0
  %3006 = vmatpush1.msra.mxu0 0.0
  %3007 = vmatprep.subr.mxu0 0.0
  %3008 = vmatpush1.msra.mxu0 0.0
  %3009 = vmatprep.subr.mxu0 0.0
  %3010 = vmatpush1.msra.mxu0 0.0
  %3011 = vmatprep.mubr.f32.mxu0 0.0
  %v3012 = vand.u32 %v2404, 4294901760
  %3013 = vmatmul.mubr.f32.gmra.mrb[0].mxu0 %v3012
  %v3014 = vpop.f32.mrb[0].mxu0
  %v3015 = vadd.f32 %v2885, %v3014
  %v3016 = vpop.f32.mrb[0].mxu0
  %3017 = vmatprep.mubr.f32.mxu0 0.0
  %v3018 = vand.u32 %v2407, 4294901760
  %3019 = vmatmul.mubr.f32.gmra.mrb[0].mxu0 %v3018
  %v3020 = vpop.f32.mrb[0].mxu0
  %v3021 = vadd.f32 %v2893, %v3020
  %v3022 = vpop.f32.mrb[0].mxu0
  %3023 = vmatprep.mubr.f32.mxu0 0.0
  %v3024 = vand.u32 %v2410, 4294901760
  %3025 = vmatmul.mubr.f32.gmra.mrb[0].mxu0 %v3024
  %v3026 = vpop.f32.mrb[0].mxu0
  %v3027 = vadd.f32 %v2901, %v3026
  %v3028 = vpop.f32.mrb[0].mxu0
  %3029 = vmatprep.mubr.f32.mxu0 0.0
  %v3030 = vand.u32 %v2413, 4294901760
  %3031 = vmatmul.mubr.f32.gmra.mrb[0].mxu0 %v3030
  %v3032 = vpop.f32.mrb[0].mxu0
  %v3033 = vadd.f32 %v2909, %v3032
  %v3034 = vpop.f32.mrb[0].mxu0
  %3035 = vmatprep.mubr.f32.mxu0 0.0
  %v3036 = vand.u32 %v2416, 4294901760
  %3037 = vmatmul.mubr.f32.gmra.mrb[0].mxu0 %v3036
  %v3038 = vpop.f32.mrb[0].mxu0
  %v3039 = vadd.f32 %v2917, %v3038
  %v3040 = vpop.f32.mrb[0].mxu0
  %3041 = vmatprep.mubr.f32.mxu0 0.0
  %v3042 = vand.u32 %v2419, 4294901760
  %3043 = vmatmul.mubr.f32.gmra.mrb[0].mxu0 %v3042
  %v3044 = vpop.f32.mrb[0].mxu0
  %v3045 = vadd.f32 %v2925, %v3044
  %v3046 = vpop.f32.mrb[0].mxu0
  %3047 = vmatprep.mubr.f32.mxu0 0.0
  %v3048 = vand.u32 %v2422, 4294901760
  %3049 = vmatmul.mubr.f32.gmra.mrb[0].mxu0 %v3048
  %v3050 = vpop.f32.mrb[0].mxu0
  %v3051 = vadd.f32 %v2933, %v3050
  %v3052 = vpop.f32.mrb[0].mxu0
  %3053 = vmatprep.mubr.f32.mxu0 0.0
  %v3054 = vand.u32 %v2425, 4294901760
  %3055 = vmatmul.mubr.f32.gmra.mrb[0].mxu0 %v3054
  %v3056 = vpop.f32.mrb[0].mxu0
  %v3057 = vadd.f32 %v2941, %v3056
  %v3058 = vpop.f32.mrb[0].mxu0
  %3059 = vdwg.mxu0
  %3060 = vmatprep.subr.mxu0 0.0
  %v3061 = vand.u32 %v87, 4294901760
  %3062 = vmatpush1.msra.mxu0 %v3061
  %3063 = vmatprep.subr.mxu0 0.0
  %3064 = vmatpush1.msra.mxu0 0.0
  %3065 = vmatprep.subr.mxu0 0.0
  %3066 = vmatpush1.msra.mxu0 0.0
  %3067 = vmatprep.subr.mxu0 0.0
  %3068 = vmatpush1.msra.mxu0 0.0
  %3069 = vmatprep.subr.mxu0 0.0
  %3070 = vmatpush1.msra.mxu0 0.0
  %3071 = vmatprep.subr.mxu0 0.0
  %3072 = vmatpush1.msra.mxu0 0.0
  %3073 = vmatprep.subr.mxu0 0.0
  %3074 = vmatpush1.msra.mxu0 0.0
  %3075 = vmatprep.subr.mxu0 0.0
  %3076 = vmatpush1.msra.mxu0 0.0
  %3077 = vmatprep.subr.mxu0 0.0
  %3078 = vmatpush1.msra.mxu0 0.0
  %3079 = vmatprep.subr.mxu0 0.0
  %3080 = vmatpush1.msra.mxu0 0.0
  %3081 = vmatprep.subr.mxu0 0.0
  %3082 = vmatpush1.msra.mxu0 0.0
  %3083 = vmatprep.subr.mxu0 0.0
  %3084 = vmatpush1.msra.mxu0 0.0
  %3085 = vmatprep.subr.mxu0 0.0
  %3086 = vmatpush1.msra.mxu0 0.0
  %3087 = vmatprep.subr.mxu0 0.0
  %3088 = vmatpush1.msra.mxu0 0.0
  %3089 = vmatprep.subr.mxu0 0.0
  %3090 = vmatpush1.msra.mxu0 0.0
  %3091 = vmatprep.subr.mxu0 0.0
  %3092 = vmatpush1.msra.mxu0 0.0
  %3093 = vmatprep.subr.mxu0 0.0
  %3094 = vmatpush1.msra.mxu0 0.0
  %3095 = vmatprep.subr.mxu0 0.0
  %3096 = vmatpush1.msra.mxu0 0.0
  %3097 = vmatprep.subr.mxu0 0.0
  %3098 = vmatpush1.msra.mxu0 0.0
  %3099 = vmatprep.subr.mxu0 0.0
  %3100 = vmatpush1.msra.mxu0 0.0
  %3101 = vmatprep.subr.mxu0 0.0
  %3102 = vmatpush1.msra.mxu0 0.0
  %3103 = vmatprep.subr.mxu0 0.0
  %3104 = vmatpush1.msra.mxu0 0.0
  %3105 = vmatprep.subr.mxu0 0.0
  %3106 = vmatpush1.msra.mxu0 0.0
  %3107 = vmatprep.subr.mxu0 0.0
  %3108 = vmatpush1.msra.mxu0 0.0
  %3109 = vmatprep.subr.mxu0 0.0
  %3110 = vmatpush1.msra.mxu0 0.0
  %3111 = vmatprep.subr.mxu0 0.0
  %3112 = vmatpush1.msra.mxu0 0.0
  %3113 = vmatprep.subr.mxu0 0.0
  %3114 = vmatpush1.msra.mxu0 0.0
  %3115 = vmatprep.subr.mxu0 0.0
  %3116 = vmatpush1.msra.mxu0 0.0
  %3117 = vmatprep.subr.mxu0 0.0
  %3118 = vmatpush1.msra.mxu0 0.0
  %3119 = vmatprep.subr.mxu0 0.0
  %3120 = vmatpush1.msra.mxu0 0.0
  %3121 = vmatprep.subr.mxu0 0.0
  %3122 = vmatpush1.msra.mxu0 0.0
  %3123 = vmatprep.subr.mxu0 0.0
  %3124 = vmatpush1.msra.mxu0 0.0
  %3125 = vmatprep.mubr.f32.mxu0 0.0
  %v3126 = vand.u32 %v2404, 4294901760
  %3127 = vmatmul.mubr.f32.gmra.mrb[0].mxu0 %v3126
  %v3128 = vpop.f32.mrb[0].mxu0
  %v3129 = vadd.f32 %v3015, %v3128
  %v3130 = vpop.f32.mrb[0].mxu0
  %3131 = vmatprep.mubr.f32.mxu0 0.0
  %v3132 = vand.u32 %v2407, 4294901760
  %3133 = vmatmul.mubr.f32.gmra.mrb[0].mxu0 %v3132
  %v3134 = vpop.f32.mrb[0].mxu0
  %v3135 = vadd.f32 %v3021, %v3134
  %v3136 = vpop.f32.mrb[0].mxu0
  %3137 = vmatprep.mubr.f32.mxu0 0.0
  %v3138 = vand.u32 %v2410, 4294901760
  %3139 = vmatmul.mubr.f32.gmra.mrb[0].mxu0 %v3138
  %v3140 = vpop.f32.mrb[0].mxu0
  %v3141 = vadd.f32 %v3027, %v3140
  %v3142 = vpop.f32.mrb[0].mxu0
  %3143 = vmatprep.mubr.f32.mxu0 0.0
  %v3144 = vand.u32 %v2413, 4294901760
  %3145 = vmatmul.mubr.f32.gmra.mrb[0].mxu0 %v3144
  %v3146 = vpop.f32.mrb[0].mxu0
  %v3147 = vadd.f32 %v3033, %v3146
  %v3148 = vpop.f32.mrb[0].mxu0
  %3149 = vmatprep.mubr.f32.mxu0 0.0
  %v3150 = vand.u32 %v2416, 4294901760
  %3151 = vmatmul.mubr.f32.gmra.mrb[0].mxu0 %v3150
  %v3152 = vpop.f32.mrb[0].mxu0
  %v3153 = vadd.f32 %v3039, %v3152
  %v3154 = vpop.f32.mrb[0].mxu0
  %3155 = vmatprep.mubr.f32.mxu0 0.0
  %v3156 = vand.u32 %v2419, 4294901760
  %3157 = vmatmul.mubr.f32.gmra.mrb[0].mxu0 %v3156
  %v3158 = vpop.f32.mrb[0].mxu0
  %v3159 = vadd.f32 %v3045, %v3158
  %v3160 = vpop.f32.mrb[0].mxu0
  %3161 = vmatprep.mubr.f32.mxu0 0.0
  %v3162 = vand.u32 %v2422, 4294901760
  %3163 = vmatmul.mubr.f32.gmra.mrb[0].mxu0 %v3162
  %v3164 = vpop.f32.mrb[0].mxu0
  %v3165 = vadd.f32 %v3051, %v3164
  %v3166 = vpop.f32.mrb[0].mxu0
  %3167 = vmatprep.mubr.f32.mxu0 0.0
  %v3168 = vand.u32 %v2425, 4294901760
  %3169 = vmatmul.mubr.f32.gmra.mrb[0].mxu0 %v3168
  %v3170 = vpop.f32.mrb[0].mxu0
  %v3171 = vadd.f32 %v3057, %v3170
  %v3172 = vpop.f32.mrb[0].mxu0
  %3173 = vdwg.mxu0
  %vm3174 = vcmask 130048
  %3175 = vst.msk [vmem:[%s6] sm:$0xff] %vm3174, %v3129
  %3176 = vst.msk [vmem:[%s6 + $0x8] sm:$0xff] %vm3174, %v3135
  %3177 = vst.msk [vmem:[%s6 + $0x10] sm:$0xff] %vm3174, %v3141
  %3178 = vst.msk [vmem:[%s6 + $0x18] sm:$0xff] %vm3174, %v3147
  %3179 = vst.msk [vmem:[%s6 + $0x20] sm:$0xff] %vm3174, %v3153
  %3180 = vst.msk [vmem:[%s6 + $0x28] sm:$0xff] %vm3174, %v3159
  %3181 = vst.msk [vmem:[%s6 + $0x30] sm:$0xff] %vm3174, %v3165
  %3182 = vst.msk [vmem:[%s6 + $0x38] sm:$0xff] %vm3174, %v3171
  %v3183 = vsub.f32 %v1587, %v2358
  %v3184 = vsub.f32 %v1593, %v2364
  %v3185 = vsub.f32 %v1599, %v2370
  %v3186 = vsub.f32 %v1605, %v2376
  %v3187 = vsub.f32 %v1611, %v2382
  %v3188 = vsub.f32 %v1617, %v2388
  %v3189 = vsub.f32 %v1623, %v2394
  %v3190 = vsub.f32 %v1629, %v2400
  %3199 = vrot.lane.b32.xlu0 %v3183, 16
  %v3200 = vpop.permute.xlu0 %3199
  %3201 = vrot.lane.b32.xlu0 %v3184, 16
  %v3202 = vpop.permute.xlu0 %3201
  %3203 = vrot.lane.b32.xlu0 %v3185, 16
  %v3204 = vpop.permute.xlu0 %3203
  %3205 = vrot.lane.b32.xlu0 %v3186, 16
  %v3206 = vpop.permute.xlu0 %3205
  %3207 = vrot.lane.b32.xlu0 %v3187, 16
  %v3208 = vpop.permute.xlu0 %3207
  %3209 = vrot.lane.b32.xlu0 %v3188, 16
  %v3210 = vpop.permute.xlu0 %3209
  %3211 = vrot.lane.b32.xlu0 %v3189, 16
  %v3212 = vpop.permute.xlu0 %3211
  %3213 = vrot.lane.b32.xlu0 %v3190, 16
  %v3214 = vpop.permute.xlu0 %3213
  %vm3223 = vcmask 261248
  %3224 = vst.msk [vmem:[%s6] sm:$0xff] %vm3223, %v3200
  %3225 = vst.msk [vmem:[%s6 + $0x8] sm:$0xff] %vm3223, %v3202
  %3226 = vst.msk [vmem:[%s6 + $0x10] sm:$0xff] %vm3223, %v3204
  %3227 = vst.msk [vmem:[%s6 + $0x18] sm:$0xff] %vm3223, %v3206
  %3228 = vst.msk [vmem:[%s6 + $0x20] sm:$0xff] %vm3223, %v3208
  %3229 = vst.msk [vmem:[%s6 + $0x28] sm:$0xff] %vm3223, %v3210
  %3230 = vst.msk [vmem:[%s6 + $0x30] sm:$0xff] %vm3223, %v3212
  %3231 = vst.msk [vmem:[%s6 + $0x38] sm:$0xff] %vm3223, %v3214
  // Predicated region
  $region26: #{tpu_custom_call.1} parent=0 // pred_check
    _
  $region27: #{tpu_custom_call.1} parent=0 // pred_check_branch
    %3233 = sbr.rel (0) target = $region29
  $region28: #{tpu_custom_call.1} parent=0 // pred_region
    _
  $region29: #{tpu_custom_call.1} parent=0 // pred_fallthru
    _
  // Predicated region
  $region30: #{tpu_custom_call.1} parent=0 // pred_check
    _
  $region31: #{tpu_custom_call.1} parent=0 // pred_check_branch
    %3235 = sbr.rel (0) target = $region33
  $region32: #{tpu_custom_call.1} parent=0 // pred_region
    _
  $region33: #{tpu_custom_call.1} parent=0 // pred_fallthru
    _

</llo_original>
